<compile_context>
chip_gen: v6e
topology: v6e:2x2x1
jax: 0.10.0
libtpu: 0.0.40
codegen_flags: <defaults>
</compile_context>

<pallas_src>
import numpy as np
import jax
import jax.numpy as jnp
from jax import lax
from jax.experimental import pallas as pl
from jax.experimental.pallas import tpu as pltpu


# ----------------------------------------------------------------------------
# Helpers
# ----------------------------------------------------------------------------
def _round_up(x, m):
    return ((x + m - 1) // m) * m


def _choose_group_block(G, L):
    """Pick groups-per-block Gb (multiple of 8, MXU-filling) and padded G."""
    target_rows = 512                                  # fill the MXU M dimension
    gb = _round_up(max(8, min(64, -(-target_rows // max(L, 1)))), 8)
    # Keep at least 2 grid steps when the group count allows (v7x megacore).
    while gb > 8 and _round_up(G, gb) // gb < 2:
        gb -= 8
    return gb, _round_up(G, gb)


# ----------------------------------------------------------------------------
# Fused Pallas kernel: one full PointNet layer per grid step (Gb groups).
# ----------------------------------------------------------------------------
def _make_pointnet_kernel(Gb, L, C, F_pad, real_L):
    need_mask = real_L < L
    neg_inf = float("-inf")

    def kernel(x_ref, w1_ref, b1_ref, wt1_ref, bt1_ref, wt2_ref, bt2_ref,
               w2_ref, b2_ref, w3_ref, b3_ref, feat_ref, m_ref):
        # ---- shared MLP stage 1 over all Gb*L points at once (MXU) --------
        x = x_ref[...].reshape(Gb * L, C)                              # bf16
        h1 = jnp.maximum(
            jnp.dot(x, w1_ref[...], preferred_element_type=jnp.float32)
            + b1_ref[...], 0.0)                                        # (Gb*L, 64) f32

        # ---- T-Net: per-group max-pooled 128-vec -> 64x64 transform -------
        t = jnp.maximum(
            jnp.dot(h1.astype(jnp.bfloat16), wt1_ref[...],
                    preferred_element_type=jnp.float32)
            + bt1_ref[...], 0.0).reshape(Gb, L, 128)
        if need_mask:
            rows = lax.broadcasted_iota(jnp.int32, (Gb, L, 1), 1)
            t = jnp.where(rows < real_L, t, neg_inf)
        tg = jnp.max(t, axis=1)                                        # (Gb, 128)
        mflat = (jnp.dot(tg.astype(jnp.bfloat16), wt2_ref[...],
                         preferred_element_type=jnp.float32)
                 + bt2_ref[...])                                       # (Gb, 4096)
        m3 = mflat.reshape(Gb, 64, 64)                                 # in-VMEM reshape
        di = lax.broadcasted_iota(jnp.int32, (64, 64), 0)
        dj = lax.broadcasted_iota(jnp.int32, (64, 64), 1)
        m3 = m3 + (di == dj).astype(jnp.float32)[None]                 # + I_64
        m_ref[...] = m3

        # ---- apply per-group feature transform (batched MXU matmul) -------
        h1t = jnp.einsum(
            "gld,gde->gle",
            h1.reshape(Gb, L, 64).astype(jnp.bfloat16),
            m3.astype(jnp.bfloat16),
            preferred_element_type=jnp.float32).reshape(Gb * L, 64)

        # ---- shared MLP stage 2 + per-group max-pool -----------------------
        h2 = jnp.maximum(
            jnp.dot(h1t.astype(jnp.bfloat16), w2_ref[...],
                    preferred_element_type=jnp.float32)
            + b2_ref[...], 0.0)                                        # (Gb*L, 128)
        h3 = jnp.maximum(
            jnp.dot(h2.astype(jnp.bfloat16), w3_ref[...],
                    preferred_element_type=jnp.float32)
            + b3_ref[...], 0.0).reshape(Gb, L, F_pad)
        if need_mask:
            rows = lax.broadcasted_iota(jnp.int32, (Gb, L, 1), 1)
            h3 = jnp.where(rows < real_L, h3, neg_inf)
        feat_ref[...] = jnp.max(h3, axis=1)                            # (Gb, F_pad)

    return kernel


def pointnet_forward_pallas(grouped, p, real_L):
    """grouped: (G, L, C) np.float32 (L padded to mult. of 16).
    Returns feat (G, F) f32 and transform (G, 64, 64) f32."""
    G, L, C = grouped.shape
    F = int(p["w3"].shape[1])
    F_pad = _round_up(F, 128)                     # lane-dense feature output
    Gb, Gpad = _choose_group_block(G, L)

    # Pad group count to a multiple of Gb; cast input to bf16 (halves DMA).
    x_np = np.zeros((Gpad, L, C), dtype=np.float32)
    x_np[:G] = grouped
    x = jnp.asarray(x_np, dtype=jnp.bfloat16)

    bf = jnp.bfloat16
    w1, wt1, wt2, w2 = (p["w1"].astype(bf), p["wt1"].astype(bf),
                        p["wt2"].astype(bf), p["w2"].astype(bf))
    w3 = jnp.pad(p["w3"], ((0, 0), (0, F_pad - F))).astype(bf)
    b3 = jnp.pad(p["b3"], ((0, 0), (0, F_pad - F)))
    b1, bt1, bt2, b2 = p["b1"], p["bt1"], p["bt2"], p["b2"]

    rows = Gpad * L
    flops = 2 * (rows * C * 64 + rows * 64 * 128 + Gpad * 128 * 4096
                 + rows * 64 * 64 + rows * 64 * 128 + rows * 128 * F_pad)
    bytes_accessed = (int(x.size) * 2
                      + sum(int(w.size) * 2 for w in (w1, wt1, wt2, w2, w3))
                      + sum(int(b.size) * 4 for b in (b1, bt1, bt2, b2, b3))
                      + Gpad * F_pad * 4 + Gpad * 64 * 64 * 4)

    kernel = _make_pointnet_kernel(Gb, L, C, F_pad, real_L)
    const2 = lambda g: (0, 0)

    feat, m = pl.pallas_call(
        kernel,
        out_shape=(jax.ShapeDtypeStruct((Gpad, F_pad), jnp.float32),
                   jax.ShapeDtypeStruct((Gpad, 64, 64), jnp.float32)),
        grid=(Gpad // Gb,),
        in_specs=[
            pl.BlockSpec((Gb, L, C), lambda g: (g, 0, 0)),
            pl.BlockSpec((C, 64), const2),
            pl.BlockSpec((1, 64), const2),
            pl.BlockSpec((64, 128), const2),
            pl.BlockSpec((1, 128), const2),
            pl.BlockSpec((128, 4096), const2),
            pl.BlockSpec((1, 4096), const2),
            pl.BlockSpec((64, 128), const2),
            pl.BlockSpec((1, 128), const2),
            pl.BlockSpec((128, F_pad), const2),
            pl.BlockSpec((1, F_pad), const2),
        ],
        out_specs=(pl.BlockSpec((Gb, F_pad), lambda g: (g, 0)),
                   pl.BlockSpec((Gb, 64, 64), lambda g: (g, 0, 0))),
        compiler_params=pltpu.CompilerParams(
            dimension_semantics=("parallel",),
            vmem_limit_bytes=32 * 1024 * 1024),
        cost_estimate=pl.CostEstimate(
            flops=int(flops), transcendentals=0,
            bytes_accessed=int(bytes_accessed)),
    )(x, w1, b1, wt1, bt1, wt2, bt2, w2, b2, w3, b3)

    return feat[:G, :F], m[:G]


# ----------------------------------------------------------------------------
# Host-side glue: farthest point sampling / grouping (mirrors torch reference).
# ----------------------------------------------------------------------------
def farthest_point_sampling_np(points, k, start_idx=0):
    selected = np.zeros((k, 1, points.shape[1]), dtype=points.dtype)
    selected_idx = np.zeros(k, dtype=np.int64)
    selected[0] = points[start_idx]
    remaining = np.concatenate([points[:start_idx], points[start_idx + 1:]], axis=0)
    selected_idx[0] = start_idx
    n_sel = 1
    while n_sel < k:
        d = np.linalg.norm(selected[:n_sel] - remaining, axis=2)   # (n_sel, N_rem)
        d_min = d.min(axis=0)
        new_idx = int(np.argmax(d_min))
        selected[n_sel] = remaining[new_idx]
        remaining = np.concatenate([remaining[:new_idx], remaining[new_idx + 1:]], axis=0)
        n_sel += 1
    return selected, selected_idx


def grouping_np(points, selected):
    d = np.linalg.norm(points[None, :, :] - selected, axis=2)      # (k, N)
    return np.argmin(d, axis=0)                                    # (N,)


def sample_group_np(x, num_centroids, spatial_dim):
    B, N, D = x.shape
    centroids = np.zeros((B, num_centroids, spatial_dim), dtype=x.dtype)
    groups = np.zeros((B, N), dtype=np.int64)
    for b in range(B):
        cen, _ = farthest_point_sampling_np(x[b, :, :spatial_dim], num_centroids)
        centroids[b] = cen.squeeze(1)
        groups[b] = grouping_np(x[b, :, :spatial_dim], cen)
    max_group_length = int(np.unique(groups, return_counts=True)[1].max())
    L_pad = _round_up(max_group_length, 16)        # bf16-friendly sublane padding
    grouped = np.zeros((B, num_centroids, L_pad, D), dtype=x.dtype)
    for b in range(B):
        for c in range(num_centroids):
            mask = groups[b] == c
            gl = int(mask.sum())
            grouped[b, c, :gl] = x[b][mask]
            # TODO(synk): mirrors the reference exactly, which subtracts the
            # centroid from the PADDING rows (grouped_data[..., group_length:,
            # :spatial_dim] -= centroid) — likely a bug in the reference but
            # preserved for semantic fidelity.  Extra rows beyond
            # max_group_length are masked out of the max-pools in the kernel.
            grouped[b, c, gl:, :spatial_dim] -= centroids[b, c]
    return (grouped.reshape(B * num_centroids, L_pad, D), centroids,
            max_group_length)


# ----------------------------------------------------------------------------
# Parameters & encoder forward.
# ----------------------------------------------------------------------------
def init_pointnet_params(key, in_dim, out_dim):
    ks = jax.random.split(key, 5)
    s = 0.1
    return {
        "w1": (jax.random.normal(ks[0], (in_dim, 64), jnp.float32) * s),
        "b1": jnp.zeros((1, 64), jnp.float32),
        "wt1": (jax.random.normal(ks[1], (64, 128), jnp.float32) * s),
        "bt1": jnp.zeros((1, 128), jnp.float32),
        "wt2": (jax.random.normal(ks[2], (128, 64 * 64), jnp.float32) * (s * 0.1)),
        "bt2": jnp.zeros((1, 64 * 64), jnp.float32),
        "w2": (jax.random.normal(ks[3], (64, 128), jnp.float32) * s),
        "b2": jnp.zeros((1, 128), jnp.float32),
        "w3": (jax.random.normal(ks[4], (128, out_dim), jnp.float32) * s),
        "b3": jnp.zeros((1, out_dim), jnp.float32),
    }


def init_encoder_params(key, input_size, num_pt_features, spatial_dim):
    params = []
    for i in range(len(num_pt_features)):
        in_dim = num_pt_features[i - 1] + spatial_dim if i != 0 else input_size
        params.append(init_pointnet_params(jax.random.fold_in(key, i),
                                           in_dim, num_pt_features[i]))
    return params


def pointnetpp_encoder_forward(x, params, num_pt_features, spatial_dim):
    """x: (B, N, input_size) jnp.float32 -> encoded (B, N//2**L, feat+spatial)."""
    B, N, _ = x.shape
    out_np = np.asarray(x, dtype=np.float32)
    transform_matrices = []
    for i, p in enumerate(params):
        num_centroids = N // (2 ** (i + 1))
        grouped, centroids, real_L = sample_group_np(out_np, num_centroids, spatial_dim)
        feat, m = pointnet_forward_pallas(grouped, p, real_L)
        feat_np = np.asarray(feat).reshape(B, num_centroids, -1)
        out_np = np.concatenate([feat_np, centroids], axis=2)
        transform_matrices.append(m)
    return jnp.asarray(out_np), transform_matrices


# ----------------------------------------------------------------------------
if __name__ == "__main__":
    key = jax.random.PRNGKey(0)

    # Small shapes consistent with the module: batch=2, num_points=16,
    # input_size=4 (first spatial_dim=3 channels are xyz), two SA levels.
    batch, num_points, input_size, spatial_dim = 2, 16, 4, 3
    num_pt_features = [32, 64]

    k_x, k_p = jax.random.split(key)
    x = jax.random.normal(k_x, (batch, num_points, input_size), jnp.float32)
    params = init_encoder_params(k_p, input_size, num_pt_features, spatial_dim)

    out, mats = pointnetpp_encoder_forward(x, params, num_pt_features, spatial_dim)
    jax.block_until_ready(out)
    for m in mats:
        jax.block_until_ready(m)

    # Shape sanity: (B, N // 2**num_layers, num_pt_features[-1] + spatial_dim)
    assert out.shape == (batch, num_points // 2 ** len(num_pt_features),
                         num_pt_features[-1] + spatial_dim)
    assert mats[0].shape == (batch * (num_points // 2), 64, 64)
    assert mats[1].shape == (batch * (num_points // 4), 64, 64)
    assert np.all(np.isfinite(np.asarray(out)))
    print("KERNEL_OK")
</pallas_src>

<mosaic_0001>
module attributes {stable_mosaic.version = 11 : i64} {
  func.func @kernel(%arg0: i32, %arg1: memref<8x16x4xbf16, #tpu.memory_space<vmem>>, %arg2: memref<4x64xbf16, #tpu.memory_space<vmem>>, %arg3: memref<1x64xf32, #tpu.memory_space<vmem>>, %arg4: memref<64x128xbf16, #tpu.memory_space<vmem>>, %arg5: memref<1x128xf32, #tpu.memory_space<vmem>>, %arg6: memref<128x4096xbf16, #tpu.memory_space<vmem>>, %arg7: memref<1x4096xf32, #tpu.memory_space<vmem>>, %arg8: memref<64x128xbf16, #tpu.memory_space<vmem>>, %arg9: memref<1x128xf32, #tpu.memory_space<vmem>>, %arg10: memref<128x128xbf16, #tpu.memory_space<vmem>>, %arg11: memref<1x128xf32, #tpu.memory_space<vmem>>, %arg12: memref<8x128xf32, #tpu.memory_space<vmem>>, %arg13: memref<8x64x64xf32, #tpu.memory_space<vmem>>) attributes {dimension_semantics = [#tpu.dimension_semantics<parallel>], iteration_bounds = array<i64: 2>, scalar_prefetch = 0 : i64, scratch_operands = 0 : i64, tpu.core_type = #tpu.core_type<tc>, window_params = [{transform_indices = @transform_0, window_bounds = array<i64: 8, 16, 4>}, {pipeline_mode = #tpu.pipeline_mode<synchronous>, transform_indices = @transform_1, window_bounds = array<i64: 4, 64>}, {pipeline_mode = #tpu.pipeline_mode<synchronous>, transform_indices = @transform_2, window_bounds = array<i64: 1, 64>}, {pipeline_mode = #tpu.pipeline_mode<synchronous>, transform_indices = @transform_3, window_bounds = array<i64: 64, 128>}, {pipeline_mode = #tpu.pipeline_mode<synchronous>, transform_indices = @transform_4, window_bounds = array<i64: 1, 128>}, {pipeline_mode = #tpu.pipeline_mode<synchronous>, transform_indices = @transform_5, window_bounds = array<i64: 128, 4096>}, {pipeline_mode = #tpu.pipeline_mode<synchronous>, transform_indices = @transform_6, window_bounds = array<i64: 1, 4096>}, {pipeline_mode = #tpu.pipeline_mode<synchronous>, transform_indices = @transform_7, window_bounds = array<i64: 64, 128>}, {pipeline_mode = #tpu.pipeline_mode<synchronous>, transform_indices = @transform_8, window_bounds = array<i64: 1, 128>}, {pipeline_mode = #tpu.pipeline_mode<synchronous>, transform_indices = @transform_9, window_bounds = array<i64: 128, 128>}, {pipeline_mode = #tpu.pipeline_mode<synchronous>, transform_indices = @transform_10, window_bounds = array<i64: 1, 128>}, {transform_indices = @transform_11, window_bounds = array<i64: 8, 128>}, {transform_indices = @transform_12, window_bounds = array<i64: 8, 64, 64>}]} {
    %c0 = arith.constant 0 : index
    %c0_0 = arith.constant 0 : index
    %c0_1 = arith.constant 0 : index
    %0 = vector.load %arg1[%c0, %c0_0, %c0_1] : memref<8x16x4xbf16, #tpu.memory_space<vmem>>, vector<8x16x4xbf16>
    %1 = vector.shape_cast %0 : vector<8x16x4xbf16> to vector<128x4xbf16>
    %c0_2 = arith.constant 0 : index
    %c0_3 = arith.constant 0 : index
    %2 = vector.load %arg2[%c0_2, %c0_3] : memref<4x64xbf16, #tpu.memory_space<vmem>>, vector<4x64xbf16>
    %cst = arith.constant dense<0.000000e+00> : vector<128x64xf32>
    %3 = tpu.matmul %1, %2, %cst {dimension_numbers = #tpu.dot_dimension_numbers<[1], [0], [0], [1], [0, 0, 1, 1], [], []>} : vector<128x4xbf16>, vector<4x64xbf16>, vector<128x64xf32> -> vector<128x64xf32>
    %c0_4 = arith.constant 0 : index
    %c0_5 = arith.constant 0 : index
    %4 = vector.load %arg3[%c0_4, %c0_5] : memref<1x64xf32, #tpu.memory_space<vmem>>, vector<1x64xf32>
    %5 = vector.broadcast %4 : vector<1x64xf32> to vector<128x64xf32>
    %6 = arith.addf %3, %5 : vector<128x64xf32>
    %cst_6 = arith.constant 0.000000e+00 : f32
    %7 = vector.broadcast %cst_6 : f32 to vector<128x64xf32>
    %8 = arith.maximumf %6, %7 : vector<128x64xf32>
    %9 = arith.truncf %8 : vector<128x64xf32> to vector<128x64xbf16>
    %c0_7 = arith.constant 0 : index
    %c0_8 = arith.constant 0 : index
    %10 = vector.load %arg4[%c0_7, %c0_8] : memref<64x128xbf16, #tpu.memory_space<vmem>>, vector<64x128xbf16>
    %cst_9 = arith.constant dense<0.000000e+00> : vector<128x128xf32>
    %11 = tpu.matmul %9, %10, %cst_9 {dimension_numbers = #tpu.dot_dimension_numbers<[1], [0], [0], [1], [0, 0, 1, 1], [], []>} : vector<128x64xbf16>, vector<64x128xbf16>, vector<128x128xf32> -> vector<128x128xf32>
    %c0_10 = arith.constant 0 : index
    %c0_11 = arith.constant 0 : index
    %12 = vector.load %arg5[%c0_10, %c0_11] : memref<1x128xf32, #tpu.memory_space<vmem>>, vector<1x128xf32>
    %13 = vector.broadcast %12 : vector<1x128xf32> to vector<128x128xf32>
    %14 = arith.addf %11, %13 : vector<128x128xf32>
    %cst_12 = arith.constant 0.000000e+00 : f32
    %15 = vector.broadcast %cst_12 : f32 to vector<128x128xf32>
    %16 = arith.maximumf %14, %15 : vector<128x128xf32>
    %17 = vector.shape_cast %16 : vector<128x128xf32> to vector<8x16x128xf32>
    %18 = tpu.iota {dimensions = array<i32: 1>} : vector<8x16x1xi32>
    %c6_i32 = arith.constant 6 : i32
    %19 = vector.broadcast %c6_i32 : i32 to vector<8x16x1xi32>
    %20 = arith.cmpi slt, %18, %19 : vector<8x16x1xi32>
    %cst_13 = arith.constant 0xFF800000 : f32
    %21 = vector.shape_cast %20 : vector<8x16x1xi1> to vector<8x16x1xi1>
    %22 = vector.broadcast %21 : vector<8x16x1xi1> to vector<8x16x128xi1>
    %23 = vector.broadcast %cst_13 : f32 to vector<8x16x128xf32>
    %24 = arith.select %22, %17, %23 : vector<8x16x128xi1>, vector<8x16x128xf32>
    %cst_14 = arith.constant dense<0xFF800000> : vector<8x128xf32>
    %25 = vector.multi_reduction <maximumf>, %24, %cst_14 [1] : vector<8x16x128xf32> to vector<8x128xf32>
    %26 = arith.truncf %25 : vector<8x128xf32> to vector<8x128xbf16>
    %c0_15 = arith.constant 0 : index
    %c0_16 = arith.constant 0 : index
    %27 = vector.load %arg6[%c0_15, %c0_16] : memref<128x4096xbf16, #tpu.memory_space<vmem>>, vector<128x4096xbf16>
    %cst_17 = arith.constant dense<0.000000e+00> : vector<8x4096xf32>
    %28 = tpu.matmul %26, %27, %cst_17 {dimension_numbers = #tpu.dot_dimension_numbers<[1], [0], [0], [1], [0, 0, 1, 1], [], []>} : vector<8x128xbf16>, vector<128x4096xbf16>, vector<8x4096xf32> -> vector<8x4096xf32>
    %c0_18 = arith.constant 0 : index
    %c0_19 = arith.constant 0 : index
    %29 = vector.load %arg7[%c0_18, %c0_19] : memref<1x4096xf32, #tpu.memory_space<vmem>>, vector<1x4096xf32>
    %30 = vector.broadcast %29 : vector<1x4096xf32> to vector<8x4096xf32>
    %31 = arith.addf %28, %30 : vector<8x4096xf32>
    %32 = vector.shape_cast %31 : vector<8x4096xf32> to vector<8x64x64xf32>
    %33 = tpu.iota {dimensions = array<i32: 0>} : vector<64x64xi32>
    %34 = tpu.iota {dimensions = array<i32: 1>} : vector<64x64xi32>
    %35 = arith.cmpi eq, %33, %34 : vector<64x64xi32>
    %36 = arith.extui %35 : vector<64x64xi1> to vector<64x64xi32>
    %37 = arith.sitofp %36 : vector<64x64xi32> to vector<64x64xf32>
    %38 = vector.shape_cast %37 : vector<64x64xf32> to vector<1x64x64xf32>
    %39 = vector.broadcast %38 : vector<1x64x64xf32> to vector<8x64x64xf32>
    %40 = arith.addf %32, %39 : vector<8x64x64xf32>
    %c0_20 = arith.constant 0 : index
    %c0_21 = arith.constant 0 : index
    %c0_22 = arith.constant 0 : index
    %41 = vector.load %arg13[%c0_20, %c0_21, %c0_22] : memref<8x64x64xf32, #tpu.memory_space<vmem>>, vector<8x64x64xf32>
    tpu.vector_store %arg13[%c0_20, %c0_21, %c0_22], %40 {strides = array<i32>} : memref<8x64x64xf32, #tpu.memory_space<vmem>>, vector<8x64x64xf32>,
    %42 = vector.shape_cast %8 : vector<128x64xf32> to vector<8x16x64xf32>
    %43 = arith.truncf %42 : vector<8x16x64xf32> to vector<8x16x64xbf16>
    %44 = arith.truncf %40 : vector<8x64x64xf32> to vector<8x64x64xbf16>
    "tpu.trace_start"() <{level = 10 : i32, message = "gld,gde->gle"}> : () -> ()
    %cst_23 = arith.constant dense<0.000000e+00> : vector<8x16x64xf32>
    %45 = tpu.matmul %43, %44, %cst_23 {dimension_numbers = #tpu.dot_dimension_numbers<[2], [1], [1], [2], [0, 0, 0, 1, 1, 2], [0], [0]>} : vector<8x16x64xbf16>, vector<8x64x64xbf16>, vector<8x16x64xf32> -> vector<8x16x64xf32>
    "tpu.trace_stop"() : () -> ()
    %46 = vector.shape_cast %45 : vector<8x16x64xf32> to vector<128x64xf32>
    %47 = arith.truncf %46 : vector<128x64xf32> to vector<128x64xbf16>
    %c0_24 = arith.constant 0 : index
    %c0_25 = arith.constant 0 : index
    %48 = vector.load %arg8[%c0_24, %c0_25] : memref<64x128xbf16, #tpu.memory_space<vmem>>, vector<64x128xbf16>
    %cst_26 = arith.constant dense<0.000000e+00> : vector<128x128xf32>
    %49 = tpu.matmul %47, %48, %cst_26 {dimension_numbers = #tpu.dot_dimension_numbers<[1], [0], [0], [1], [0, 0, 1, 1], [], []>} : vector<128x64xbf16>, vector<64x128xbf16>, vector<128x128xf32> -> vector<128x128xf32>
    %c0_27 = arith.constant 0 : index
    %c0_28 = arith.constant 0 : index
    %50 = vector.load %arg9[%c0_27, %c0_28] : memref<1x128xf32, #tpu.memory_space<vmem>>, vector<1x128xf32>
    %51 = vector.broadcast %50 : vector<1x128xf32> to vector<128x128xf32>
    %52 = arith.addf %49, %51 : vector<128x128xf32>
    %cst_29 = arith.constant 0.000000e+00 : f32
    %53 = vector.broadcast %cst_29 : f32 to vector<128x128xf32>
    %54 = arith.maximumf %52, %53 : vector<128x128xf32>
    %55 = arith.truncf %54 : vector<128x128xf32> to vector<128x128xbf16>
    %c0_30 = arith.constant 0 : index
    %c0_31 = arith.constant 0 : index
    %56 = vector.load %arg10[%c0_30, %c0_31] : memref<128x128xbf16, #tpu.memory_space<vmem>>, vector<128x128xbf16>
    %cst_32 = arith.constant dense<0.000000e+00> : vector<128x128xf32>
    %57 = tpu.matmul %55, %56, %cst_32 {dimension_numbers = #tpu.dot_dimension_numbers<[1], [0], [0], [1], [0, 0, 1, 1], [], []>} : vector<128x128xbf16>, vector<128x128xbf16>, vector<128x128xf32> -> vector<128x128xf32>
    %c0_33 = arith.constant 0 : index
    %c0_34 = arith.constant 0 : index
    %58 = vector.load %arg11[%c0_33, %c0_34] : memref<1x128xf32, #tpu.memory_space<vmem>>, vector<1x128xf32>
    %59 = vector.broadcast %58 : vector<1x128xf32> to vector<128x128xf32>
    %60 = arith.addf %57, %59 : vector<128x128xf32>
    %cst_35 = arith.constant 0.000000e+00 : f32
    %61 = vector.broadcast %cst_35 : f32 to vector<128x128xf32>
    %62 = arith.maximumf %60, %61 : vector<128x128xf32>
    %63 = vector.shape_cast %62 : vector<128x128xf32> to vector<8x16x128xf32>
    %64 = tpu.iota {dimensions = array<i32: 1>} : vector<8x16x1xi32>
    %c6_i32_36 = arith.constant 6 : i32
    %65 = vector.broadcast %c6_i32_36 : i32 to vector<8x16x1xi32>
    %66 = arith.cmpi slt, %64, %65 : vector<8x16x1xi32>
    %cst_37 = arith.constant 0xFF800000 : f32
    %67 = vector.shape_cast %66 : vector<8x16x1xi1> to vector<8x16x1xi1>
    %68 = vector.broadcast %67 : vector<8x16x1xi1> to vector<8x16x128xi1>
    %69 = vector.broadcast %cst_37 : f32 to vector<8x16x128xf32>
    %70 = arith.select %68, %63, %69 : vector<8x16x128xi1>, vector<8x16x128xf32>
    %cst_38 = arith.constant dense<0xFF800000> : vector<8x128xf32>
    %71 = vector.multi_reduction <maximumf>, %70, %cst_38 [1] : vector<8x16x128xf32> to vector<8x128xf32>
    %c0_39 = arith.constant 0 : index
    %c0_40 = arith.constant 0 : index
    %72 = vector.load %arg12[%c0_39, %c0_40] : memref<8x128xf32, #tpu.memory_space<vmem>>, vector<8x128xf32>
    tpu.vector_store %arg12[%c0_39, %c0_40], %71 {strides = array<i32>} : memref<8x128xf32, #tpu.memory_space<vmem>>, vector<8x128xf32>,
    return
  }
  func.func @transform_0(%arg0: i32) -> (i32, i32, i32) {
    %c0_i32 = arith.constant 0 : i32
    %c0_i32_0 = arith.constant 0 : i32
    %c0_i32_1 = arith.constant 0 : i32
    return %arg0, %c0_i32, %c0_i32_0 : i32, i32, i32
  }
  func.func @transform_1(%arg0: i32) -> (i32, i32) {
    %c0_i32 = arith.constant 0 : i32
    %c0_i32_0 = arith.constant 0 : i32
    %c0_i32_1 = arith.constant 0 : i32
    return %c0_i32, %c0_i32_0 : i32, i32
  }
  func.func @transform_2(%arg0: i32) -> (i32, i32) {
    %c0_i32 = arith.constant 0 : i32
    %c0_i32_0 = arith.constant 0 : i32
    %c0_i32_1 = arith.constant 0 : i32
    return %c0_i32, %c0_i32_0 : i32, i32
  }
  func.func @transform_3(%arg0: i32) -> (i32, i32) {
    %c0_i32 = arith.constant 0 : i32
    %c0_i32_0 = arith.constant 0 : i32
    %c0_i32_1 = arith.constant 0 : i32
    return %c0_i32, %c0_i32_0 : i32, i32
  }
  func.func @transform_4(%arg0: i32) -> (i32, i32) {
    %c0_i32 = arith.constant 0 : i32
    %c0_i32_0 = arith.constant 0 : i32
    %c0_i32_1 = arith.constant 0 : i32
    return %c0_i32, %c0_i32_0 : i32, i32
  }
  func.func @transform_5(%arg0: i32) -> (i32, i32) {
    %c0_i32 = arith.constant 0 : i32
    %c0_i32_0 = arith.constant 0 : i32
    %c0_i32_1 = arith.constant 0 : i32
    return %c0_i32, %c0_i32_0 : i32, i32
  }
  func.func @transform_6(%arg0: i32) -> (i32, i32) {
    %c0_i32 = arith.constant 0 : i32
    %c0_i32_0 = arith.constant 0 : i32
    %c0_i32_1 = arith.constant 0 : i32
    return %c0_i32, %c0_i32_0 : i32, i32
  }
  func.func @transform_7(%arg0: i32) -> (i32, i32) {
    %c0_i32 = arith.constant 0 : i32
    %c0_i32_0 = arith.constant 0 : i32
    %c0_i32_1 = arith.constant 0 : i32
    return %c0_i32, %c0_i32_0 : i32, i32
  }
  func.func @transform_8(%arg0: i32) -> (i32, i32) {
    %c0_i32 = arith.constant 0 : i32
    %c0_i32_0 = arith.constant 0 : i32
    %c0_i32_1 = arith.constant 0 : i32
    return %c0_i32, %c0_i32_0 : i32, i32
  }
  func.func @transform_9(%arg0: i32) -> (i32, i32) {
    %c0_i32 = arith.constant 0 : i32
    %c0_i32_0 = arith.constant 0 : i32
    %c0_i32_1 = arith.constant 0 : i32
    return %c0_i32, %c0_i32_0 : i32, i32
  }
  func.func @transform_10(%arg0: i32) -> (i32, i32) {
    %c0_i32 = arith.constant 0 : i32
    %c0_i32_0 = arith.constant 0 : i32
    %c0_i32_1 = arith.constant 0 : i32
    return %c0_i32, %c0_i32_0 : i32, i32
  }
  func.func @transform_11(%arg0: i32) -> (i32, i32) {
    %c0_i32 = arith.constant 0 : i32
    %c0_i32_0 = arith.constant 0 : i32
    return %arg0, %c0_i32 : i32, i32
  }
  func.func @transform_12(%arg0: i32) -> (i32, i32, i32) {
    %c0_i32 = arith.constant 0 : i32
    %c0_i32_0 = arith.constant 0 : i32
    %c0_i32_1 = arith.constant 0 : i32
    return %arg0, %c0_i32, %c0_i32_0 : i32, i32, i32
  }
}

</mosaic_0001>

<llo_original>
// kernel: tpu_custom_call.1
$region0: #{tpu_custom_call.1}
  #allocation0 [shape = 'u32[]', space=smem, size = 0x4, offset = 0x4, fixed_abs, tag = 'smem constant byte address 0x4 - core index']
  #allocation1 [shape = 'u32[144,128]{1,0:T(1,128)}', space=vmem, size = 0x12000, scoped, tag = 'internal scratch']
  %s0 = inlined_call_operand.vmem [shape: bf16[16,16,4], index: 0, kind: input, shape index: {}]
  %s1 = inlined_call_operand.hbm [shape: bf16[4,64], index: 1, kind: input, shape index: {}]
  %s2 = inlined_call_operand.vmem [shape: f32[1,64], index: 2, kind: input, shape index: {}]
  %s3 = inlined_call_operand.vmem [shape: bf16[64,128], index: 3, kind: input, shape index: {}]
  %s4 = inlined_call_operand.vmem [shape: f32[1,128], index: 4, kind: input, shape index: {}]
  %s5 = inlined_call_operand.hbm [shape: bf16[128,4096], index: 5, kind: input, shape index: {}]
  %s6 = inlined_call_operand.vmem [shape: f32[1,4096], index: 6, kind: input, shape index: {}]
  %s7 = inlined_call_operand.vmem [shape: bf16[64,128], index: 7, kind: input, shape index: {}]
  %s8 = inlined_call_operand.vmem [shape: f32[1,128], index: 8, kind: input, shape index: {}]
  %s9 = inlined_call_operand.vmem [shape: bf16[128,128], index: 9, kind: input, shape index: {}]
  %s10 = inlined_call_operand.vmem [shape: f32[1,128], index: 10, kind: input, shape index: {}]
  %s11 = inlined_call_operand.hbm [shape: f32[16,128], index: 11, kind: output, shape index: {0}]
  %s12 = inlined_call_operand.hbm [shape: f32[16,64,64], index: 12, kind: output, shape index: {1}]
  %13 = xla_tuple %s11, %s12
  %s14 = sld [smem:[#allocation0]]
  $region93: #{tpu_custom_call.1} parent=0
    _
  %s16 = ssub.s32 1, %s14
  %s17 = scalar_select 0, %s16, %s14
  $region1: #{tpu_custom_call.1} parent=0
    #allocation2 [shape = 'u8[1024]{0}', space=vmem, size = 0x400, scoped, tag = 'input window, operand 1, single buffered']
    #allocation3 [shape = 's32[2]{0}', space=sflag, size = 0x8, scoped, tag = 'scoped memory for tpu_custom_call.1']
    #allocation4 [shape = 's32[2]{0}', space=sflag, size = 0x8, scoped, tag = 'scoped memory for tpu_custom_call.1']
    #allocation5 [shape = 'u8[1048576]{0}', space=vmem, size = 0x100000, scoped, tag = 'input window, operand 5, single buffered']
    #allocation6 [shape = 's32[1]{0}', space=sflag, size = 0x4, scoped, tag = 'scoped memory for tpu_custom_call.1']
    #allocation7 [shape = 'u8[8192]{0}', space=vmem, size = 0x2000, scoped, tag = 'output window, operand 0']
    #allocation8 [shape = 'u8[524288]{0}', space=vmem, size = 0x80000, scoped, tag = 'output window, operand 1']
    #allocation9 [shape = 's32[2]{0}', space=sflag, size = 0x8, scoped, tag = 'scoped memory for tpu_custom_call.1']
    %18 = vsyncpa [#allocation3], 0
    %19 = vsyncpa [#allocation6], 0
    %20 = vsyncpa [#allocation4], 0
    %s21 = scalar_lea.sflag [#allocation4], 1
    %22 = vsyncpa %s21, 0
    %23 = vsyncpa [#allocation9], 0
    %s24 = scalar_lea.sflag [#allocation9], 1
    %25 = vsyncpa %s24, 0
    loop: start=0, step=1, limit=4
    $region2: #{tpu_custom_call.1} parent=1 // loop_pre_header
      _
    $region3: #{tpu_custom_call.1} parent=1 // loop_header
      %s27 = sphi 0, %s31
      %p28 = scmp.ge.s32.totalorder %s27, 4
      %s37 = sphi 0, %s39
      %s40 = sphi 0, %s37
      %s41 = sphi 0, %s40
      %s57 = sphi 0, %s41
      %s61 = sphi 0, %s61
      %s63 = sphi 0, %s61
      %s64 = sphi 0, %s63
      %s78 = sphi 0, %s64
      %s82 = sphi 0, %s82
      %s84 = sphi 0, %s82
      %s85 = sphi 0, %s84
      %s99 = sphi 0, %s85
      %s103 = sphi 0, %s103
      %s105 = sphi 0, %s103
      %s106 = sphi 0, %s105
      %s120 = sphi 0, %s106
      %s124 = sphi 0, %s124
      %s126 = sphi 0, %s124
      %s127 = sphi 0, %s126
      %s141 = sphi 0, %s127
      %s145 = sphi 0, %s145
      %s147 = sphi 0, %s145
      %s148 = sphi 0, %s147
      %s162 = sphi 0, %s148
      %s166 = sphi 0, %s166
      %s168 = sphi 0, %s166
      %s169 = sphi 0, %s168
      %s183 = sphi 0, %s169
      %s187 = sphi 0, %s187
      %s189 = sphi 0, %s187
      %s190 = sphi 0, %s189
      %s204 = sphi 0, %s190
      %s208 = sphi 0, %s208
      %s210 = sphi 0, %s208
      %s211 = sphi 0, %s210
      %s225 = sphi 0, %s211
      %s229 = sphi 0, %s229
      %s231 = sphi 0, %s229
      %s232 = sphi 0, %s231
      %s246 = sphi 0, %s232
      %s250 = sphi 0, %s250
      %s252 = sphi 0, %s250
      %s253 = sphi 0, %s252
      %s267 = sphi 0, %s253
      %s273 = sphi 0, %s275
      %s276 = sphi 0, %s273
      %s277 = sphi 0, %s276
      %s293 = sphi 0, %s277
      %s299 = sphi 0, %s301
      %s302 = sphi 0, %s299
      %s303 = sphi 0, %s302
      %s319 = sphi 0, %s303
    $region4: #{tpu_custom_call.1} parent=1 // loop_header_branch
      %30 = sbr.rel (%p28) target = $region8
    $region5: #{tpu_custom_call.1} parent=1 // loop_body
      %s32 = ssub.s32 %s27, 1
      %s33 = ssub.s32 %s27, 2
      %s34 = sadd.s32 %s27, 1
      %s35 = ssub.s32 %s27, %s34
      %p36 = scmp.eq.s32.totalorder %s35, 0
      %s38 = sadd.s32 %s37, 1
      %s39 = scalar_select %p36, %s37, %s38
      %p42 = pneg %p36
      %p43 = scmp.eq.s32.totalorder %s27, 1
      %p44 = por %p42, %p43
      %p45 = scmp.ne.s32.totalorder %s37, %s40
      %p46 = scmp.eq.s32.totalorder %s27, 0
      %p47 = por %p45, %p46
      %p48 = scmp.ne.s32.totalorder %s37, %s40
      %p49 = scmp.eq.s32.totalorder %s32, 1
      %p50 = por %p48, %p49
      %p51 = scmp.ne.s32.totalorder %s40, %s41
      %p52 = scmp.eq.s32.totalorder %s32, 0
      %p53 = por %p51, %p52
      %p54 = scmp.ne.s32.totalorder %s40, %s41
      %p55 = scmp.eq.s32.totalorder %s33, 1
      %p56 = por %p54, %p55
      %p58 = scmp.ne.s32.totalorder %s41, %s57
      %p59 = scmp.eq.s32.totalorder %s33, 0
      %p60 = por %p58, %p59
      %s62 = sadd.s32 %s61, 1
      %p65 = scmp.eq.s32.totalorder %s27, 1
      %p66 = scmp.ne.s32.totalorder %s61, %s63
      %p67 = scmp.eq.s32.totalorder %s27, 0
      %p68 = por %p66, %p67
      %p69 = scmp.ne.s32.totalorder %s61, %s63
      %p70 = scmp.eq.s32.totalorder %s32, 1
      %p71 = por %p69, %p70
      %p72 = scmp.ne.s32.totalorder %s63, %s64
      %p73 = scmp.eq.s32.totalorder %s32, 0
      %p74 = por %p72, %p73
      %p75 = scmp.ne.s32.totalorder %s63, %s64
      %p76 = scmp.eq.s32.totalorder %s33, 1
      %p77 = por %p75, %p76
      %p79 = scmp.ne.s32.totalorder %s64, %s78
      %p80 = scmp.eq.s32.totalorder %s33, 0
      %p81 = por %p79, %p80
      %s83 = sadd.s32 %s82, 1
      %p86 = scmp.eq.s32.totalorder %s27, 1
      %p87 = scmp.ne.s32.totalorder %s82, %s84
      %p88 = scmp.eq.s32.totalorder %s27, 0
      %p89 = por %p87, %p88
      %p90 = scmp.ne.s32.totalorder %s82, %s84
      %p91 = scmp.eq.s32.totalorder %s32, 1
      %p92 = por %p90, %p91
      %p93 = scmp.ne.s32.totalorder %s84, %s85
      %p94 = scmp.eq.s32.totalorder %s32, 0
      %p95 = por %p93, %p94
      %p96 = scmp.ne.s32.totalorder %s84, %s85
      %p97 = scmp.eq.s32.totalorder %s33, 1
      %p98 = por %p96, %p97
      %p100 = scmp.ne.s32.totalorder %s85, %s99
      %p101 = scmp.eq.s32.totalorder %s33, 0
      %p102 = por %p100, %p101
      %s104 = sadd.s32 %s103, 1
      %p107 = scmp.eq.s32.totalorder %s27, 1
      %p108 = scmp.ne.s32.totalorder %s103, %s105
      %p109 = scmp.eq.s32.totalorder %s27, 0
      %p110 = por %p108, %p109
      %p111 = scmp.ne.s32.totalorder %s103, %s105
      %p112 = scmp.eq.s32.totalorder %s32, 1
      %p113 = por %p111, %p112
      %p114 = scmp.ne.s32.totalorder %s105, %s106
      %p115 = scmp.eq.s32.totalorder %s32, 0
      %p116 = por %p114, %p115
      %p117 = scmp.ne.s32.totalorder %s105, %s106
      %p118 = scmp.eq.s32.totalorder %s33, 1
      %p119 = por %p117, %p118
      %p121 = scmp.ne.s32.totalorder %s106, %s120
      %p122 = scmp.eq.s32.totalorder %s33, 0
      %p123 = por %p121, %p122
      %s125 = sadd.s32 %s124, 1
      %p128 = scmp.eq.s32.totalorder %s27, 1
      %p129 = scmp.ne.s32.totalorder %s124, %s126
      %p130 = scmp.eq.s32.totalorder %s27, 0
      %p131 = por %p129, %p130
      %p132 = scmp.ne.s32.totalorder %s124, %s126
      %p133 = scmp.eq.s32.totalorder %s32, 1
      %p134 = por %p132, %p133
      %p135 = scmp.ne.s32.totalorder %s126, %s127
      %p136 = scmp.eq.s32.totalorder %s32, 0
      %p137 = por %p135, %p136
      %p138 = scmp.ne.s32.totalorder %s126, %s127
      %p139 = scmp.eq.s32.totalorder %s33, 1
      %p140 = por %p138, %p139
      %p142 = scmp.ne.s32.totalorder %s127, %s141
      %p143 = scmp.eq.s32.totalorder %s33, 0
      %p144 = por %p142, %p143
      %s146 = sadd.s32 %s145, 1
      %p149 = scmp.eq.s32.totalorder %s27, 1
      %p150 = scmp.ne.s32.totalorder %s145, %s147
      %p151 = scmp.eq.s32.totalorder %s27, 0
      %p152 = por %p150, %p151
      %p153 = scmp.ne.s32.totalorder %s145, %s147
      %p154 = scmp.eq.s32.totalorder %s32, 1
      %p155 = por %p153, %p154
      %p156 = scmp.ne.s32.totalorder %s147, %s148
      %p157 = scmp.eq.s32.totalorder %s32, 0
      %p158 = por %p156, %p157
      %p159 = scmp.ne.s32.totalorder %s147, %s148
      %p160 = scmp.eq.s32.totalorder %s33, 1
      %p161 = por %p159, %p160
      %p163 = scmp.ne.s32.totalorder %s148, %s162
      %p164 = scmp.eq.s32.totalorder %s33, 0
      %p165 = por %p163, %p164
      %s167 = sadd.s32 %s166, 1
      %p170 = scmp.eq.s32.totalorder %s27, 1
      %p171 = scmp.ne.s32.totalorder %s166, %s168
      %p172 = scmp.eq.s32.totalorder %s27, 0
      %p173 = por %p171, %p172
      %p174 = scmp.ne.s32.totalorder %s166, %s168
      %p175 = scmp.eq.s32.totalorder %s32, 1
      %p176 = por %p174, %p175
      %p177 = scmp.ne.s32.totalorder %s168, %s169
      %p178 = scmp.eq.s32.totalorder %s32, 0
      %p179 = por %p177, %p178
      %p180 = scmp.ne.s32.totalorder %s168, %s169
      %p181 = scmp.eq.s32.totalorder %s33, 1
      %p182 = por %p180, %p181
      %p184 = scmp.ne.s32.totalorder %s169, %s183
      %p185 = scmp.eq.s32.totalorder %s33, 0
      %p186 = por %p184, %p185
      %s188 = sadd.s32 %s187, 1
      %p191 = scmp.eq.s32.totalorder %s27, 1
      %p192 = scmp.ne.s32.totalorder %s187, %s189
      %p193 = scmp.eq.s32.totalorder %s27, 0
      %p194 = por %p192, %p193
      %p195 = scmp.ne.s32.totalorder %s187, %s189
      %p196 = scmp.eq.s32.totalorder %s32, 1
      %p197 = por %p195, %p196
      %p198 = scmp.ne.s32.totalorder %s189, %s190
      %p199 = scmp.eq.s32.totalorder %s32, 0
      %p200 = por %p198, %p199
      %p201 = scmp.ne.s32.totalorder %s189, %s190
      %p202 = scmp.eq.s32.totalorder %s33, 1
      %p203 = por %p201, %p202
      %p205 = scmp.ne.s32.totalorder %s190, %s204
      %p206 = scmp.eq.s32.totalorder %s33, 0
      %p207 = por %p205, %p206
      %s209 = sadd.s32 %s208, 1
      %p212 = scmp.eq.s32.totalorder %s27, 1
      %p213 = scmp.ne.s32.totalorder %s208, %s210
      %p214 = scmp.eq.s32.totalorder %s27, 0
      %p215 = por %p213, %p214
      %p216 = scmp.ne.s32.totalorder %s208, %s210
      %p217 = scmp.eq.s32.totalorder %s32, 1
      %p218 = por %p216, %p217
      %p219 = scmp.ne.s32.totalorder %s210, %s211
      %p220 = scmp.eq.s32.totalorder %s32, 0
      %p221 = por %p219, %p220
      %p222 = scmp.ne.s32.totalorder %s210, %s211
      %p223 = scmp.eq.s32.totalorder %s33, 1
      %p224 = por %p222, %p223
      %p226 = scmp.ne.s32.totalorder %s211, %s225
      %p227 = scmp.eq.s32.totalorder %s33, 0
      %p228 = por %p226, %p227
      %s230 = sadd.s32 %s229, 1
      %p233 = scmp.eq.s32.totalorder %s27, 1
      %p234 = scmp.ne.s32.totalorder %s229, %s231
      %p235 = scmp.eq.s32.totalorder %s27, 0
      %p236 = por %p234, %p235
      %p237 = scmp.ne.s32.totalorder %s229, %s231
      %p238 = scmp.eq.s32.totalorder %s32, 1
      %p239 = por %p237, %p238
      %p240 = scmp.ne.s32.totalorder %s231, %s232
      %p241 = scmp.eq.s32.totalorder %s32, 0
      %p242 = por %p240, %p241
      %p243 = scmp.ne.s32.totalorder %s231, %s232
      %p244 = scmp.eq.s32.totalorder %s33, 1
      %p245 = por %p243, %p244
      %p247 = scmp.ne.s32.totalorder %s232, %s246
      %p248 = scmp.eq.s32.totalorder %s33, 0
      %p249 = por %p247, %p248
      %s251 = sadd.s32 %s250, 1
      %p254 = scmp.eq.s32.totalorder %s27, 1
      %p255 = scmp.ne.s32.totalorder %s250, %s252
      %p256 = scmp.eq.s32.totalorder %s27, 0
      %p257 = por %p255, %p256
      %p258 = scmp.ne.s32.totalorder %s250, %s252
      %p259 = scmp.eq.s32.totalorder %s32, 1
      %p260 = por %p258, %p259
      %p261 = scmp.ne.s32.totalorder %s252, %s253
      %p262 = scmp.eq.s32.totalorder %s32, 0
      %p263 = por %p261, %p262
      %p264 = scmp.ne.s32.totalorder %s252, %s253
      %p265 = scmp.eq.s32.totalorder %s33, 1
      %p266 = por %p264, %p265
      %p268 = scmp.ne.s32.totalorder %s253, %s267
      %p269 = scmp.eq.s32.totalorder %s33, 0
      %p270 = por %p268, %p269
      %s271 = ssub.s32 %s27, %s34
      %p272 = scmp.eq.s32.totalorder %s271, 0
      %s274 = sadd.s32 %s273, 1
      %s275 = scalar_select %p272, %s273, %s274
      %p278 = pneg %p272
      %p279 = scmp.eq.s32.totalorder %s27, 1
      %p280 = por %p278, %p279
      %p281 = scmp.ne.s32.totalorder %s273, %s276
      %p282 = scmp.eq.s32.totalorder %s27, 0
      %p283 = por %p281, %p282
      %p284 = scmp.ne.s32.totalorder %s273, %s276
      %p285 = scmp.eq.s32.totalorder %s32, 1
      %p286 = por %p284, %p285
      %p287 = scmp.ne.s32.totalorder %s276, %s277
      %p288 = scmp.eq.s32.totalorder %s32, 0
      %p289 = por %p287, %p288
      %p290 = scmp.ne.s32.totalorder %s276, %s277
      %p291 = scmp.eq.s32.totalorder %s33, 1
      %p292 = por %p290, %p291
      %p294 = scmp.ne.s32.totalorder %s277, %s293
      %p295 = scmp.eq.s32.totalorder %s33, 0
      %p296 = por %p294, %p295
      %s297 = ssub.s32 %s27, %s34
      %p298 = scmp.eq.s32.totalorder %s297, 0
      %s300 = sadd.s32 %s299, 1
      %s301 = scalar_select %p298, %s299, %s300
      %p304 = pneg %p298
      %p305 = scmp.eq.s32.totalorder %s27, 1
      %p306 = por %p304, %p305
      %p307 = scmp.ne.s32.totalorder %s299, %s302
      %p308 = scmp.eq.s32.totalorder %s27, 0
      %p309 = por %p307, %p308
      %p310 = scmp.ne.s32.totalorder %s299, %s302
      %p311 = scmp.eq.s32.totalorder %s32, 1
      %p312 = por %p310, %p311
      %p313 = scmp.ne.s32.totalorder %s302, %s303
      %p314 = scmp.eq.s32.totalorder %s32, 0
      %p315 = por %p313, %p314
      %p316 = scmp.ne.s32.totalorder %s302, %s303
      %p317 = scmp.eq.s32.totalorder %s33, 1
      %p318 = por %p316, %p317
      %p320 = scmp.ne.s32.totalorder %s303, %s319
      %p321 = scmp.eq.s32.totalorder %s33, 0
      %p322 = por %p320, %p321
      %p323 = scmp.le.s32.totalorder 1, %s27
      %p324 = scmp.lt.s32.totalorder %s27, 3
      %p325 = pnand %p323, %p324
      %p326 = pneg %p325
      // Predicated region
      $region9: #{tpu_custom_call.1} parent=5 // pred_check
        _
      $region10: #{tpu_custom_call.1} parent=5 // pred_check_branch
        %328 = sbr.rel (%p325) target = $region12
      $region11: #{tpu_custom_call.1} parent=5 // pred_region
        %s329 = ssub.s32 %s27, 1
        // Predicated region
        $region13: #{tpu_custom_call.1} parent=11 // pred_check
          %p330 = pneg %p74
        $region14: #{tpu_custom_call.1} parent=11 // pred_check_branch
          %332 = sbr.rel (%p330) target = $region16
        $region15: #{tpu_custom_call.1} parent=11 // pred_region
          %s334 = ssub.s32 32, 32
          %335 = vsyncadd [#allocation3], %s334
          %s337 = sshll.u32 [#allocation2], 4
          %s338 = int_to_ptr.vmem [resolvable:$true] %s337
          %340 = dma.hbm_to_vmem [thread:$0]  %s1, 32, %s338, [#allocation3]
        $region16: #{tpu_custom_call.1} parent=11 // pred_fallthru
          _
        // Predicated region
        $region17: #{tpu_custom_call.1} parent=11 // pred_check
          %p341 = pneg %p95
        $region18: #{tpu_custom_call.1} parent=11 // pred_check_branch
          %343 = sbr.rel (%p341) target = $region20
        $region19: #{tpu_custom_call.1} parent=11 // pred_region
          _
        $region20: #{tpu_custom_call.1} parent=11 // pred_fallthru
          _
        // Predicated region
        $region21: #{tpu_custom_call.1} parent=11 // pred_check
          %p344 = pneg %p116
        $region22: #{tpu_custom_call.1} parent=11 // pred_check_branch
          %346 = sbr.rel (%p344) target = $region24
        $region23: #{tpu_custom_call.1} parent=11 // pred_region
          _
        $region24: #{tpu_custom_call.1} parent=11 // pred_fallthru
          _
        // Predicated region
        $region25: #{tpu_custom_call.1} parent=11 // pred_check
          %p347 = pneg %p137
        $region26: #{tpu_custom_call.1} parent=11 // pred_check_branch
          %349 = sbr.rel (%p347) target = $region28
        $region27: #{tpu_custom_call.1} parent=11 // pred_region
          _
        $region28: #{tpu_custom_call.1} parent=11 // pred_fallthru
          _
        // Predicated region
        $region29: #{tpu_custom_call.1} parent=11 // pred_check
          %p350 = pneg %p158
        $region30: #{tpu_custom_call.1} parent=11 // pred_check_branch
          %352 = sbr.rel (%p350) target = $region32
        $region31: #{tpu_custom_call.1} parent=11 // pred_region
          %s354 = ssub.s32 32768, 32768
          %355 = vsyncadd [#allocation6], %s354
          %s356 = sshll.u32 [#allocation5], 4
          %s357 = int_to_ptr.vmem [resolvable:$true] %s356
          %362 = dma.hbm_to_vmem [thread:$0]  %s5, 32768, %s357, [#allocation6], 2048, 2048, 128
        $region32: #{tpu_custom_call.1} parent=11 // pred_fallthru
          _
        // Predicated region
        $region33: #{tpu_custom_call.1} parent=11 // pred_check
          %p363 = pneg %p179
        $region34: #{tpu_custom_call.1} parent=11 // pred_check_branch
          %365 = sbr.rel (%p363) target = $region36
        $region35: #{tpu_custom_call.1} parent=11 // pred_region
          _
        $region36: #{tpu_custom_call.1} parent=11 // pred_fallthru
          _
        // Predicated region
        $region37: #{tpu_custom_call.1} parent=11 // pred_check
          %p366 = pneg %p200
        $region38: #{tpu_custom_call.1} parent=11 // pred_check_branch
          %368 = sbr.rel (%p366) target = $region40
        $region39: #{tpu_custom_call.1} parent=11 // pred_region
          _
        $region40: #{tpu_custom_call.1} parent=11 // pred_fallthru
          _
        // Predicated region
        $region41: #{tpu_custom_call.1} parent=11 // pred_check
          %p369 = pneg %p221
        $region42: #{tpu_custom_call.1} parent=11 // pred_check_branch
          %371 = sbr.rel (%p369) target = $region44
        $region43: #{tpu_custom_call.1} parent=11 // pred_region
          _
        $region44: #{tpu_custom_call.1} parent=11 // pred_fallthru
          _
        // Predicated region
        $region45: #{tpu_custom_call.1} parent=11 // pred_check
          %p372 = pneg %p242
        $region46: #{tpu_custom_call.1} parent=11 // pred_check_branch
          %374 = sbr.rel (%p372) target = $region48
        $region47: #{tpu_custom_call.1} parent=11 // pred_region
          _
        $region48: #{tpu_custom_call.1} parent=11 // pred_fallthru
          _
        // Predicated region
        $region49: #{tpu_custom_call.1} parent=11 // pred_check
          %p375 = pneg %p263
        $region50: #{tpu_custom_call.1} parent=11 // pred_check_branch
          %377 = sbr.rel (%p375) target = $region52
        $region51: #{tpu_custom_call.1} parent=11 // pred_region
          _
        $region52: #{tpu_custom_call.1} parent=11 // pred_fallthru
          _
      $region12: #{tpu_custom_call.1} parent=5 // pred_fallthru
        _
      %p378 = scmp.lt.s32.totalorder %s27, 2
      // Predicated region
      $region53: #{tpu_custom_call.1} parent=5 // pred_check
        %p379 = pneg %p378
      $region54: #{tpu_custom_call.1} parent=5 // pred_check_branch
        %381 = sbr.rel (%p379) target = $region56
      $region55: #{tpu_custom_call.1} parent=5 // pred_region
        // Predicated region
        $region57: #{tpu_custom_call.1} parent=55 // pred_check
          %p382 = pneg %p47
        $region58: #{tpu_custom_call.1} parent=55 // pred_check_branch
          %384 = sbr.rel (%p382) target = $region60
        $region59: #{tpu_custom_call.1} parent=55 // pred_region
          %s385 = smul.u32 8, %s27
          %p386 = scmp.lt.s32.totalorder %s385, 15
          %s387 = scalar_select %p386, %s385, 15
          %s388 = smul.addr %s387, 2
          %s389 = smul.addr %s388, 4
          %s390 = scalar_lea.vmem %s0, %s389
          %s391 = smul.u32 8, %s27
        $region60: #{tpu_custom_call.1} parent=55 // pred_fallthru
          _
      $region56: #{tpu_custom_call.1} parent=5 // pred_fallthru
        _
      %p392 = scmp.le.s32.totalorder 1, %s27
      %p393 = scmp.lt.s32.totalorder %s27, 3
      %p394 = pnand %p392, %p393
      %p395 = pneg %p394
      // Predicated region
      $region61: #{tpu_custom_call.1} parent=5 // pred_check
        _
      $region62: #{tpu_custom_call.1} parent=5 // pred_check_branch
        %397 = sbr.rel (%p394) target = $region64
      $region63: #{tpu_custom_call.1} parent=5 // pred_region
        %s398 = ssub.s32 %s27, 1
        // Predicated region
        $region65: #{tpu_custom_call.1} parent=63 // pred_check
          %p399 = pneg %p74
        $region66: #{tpu_custom_call.1} parent=63 // pred_check_branch
          %401 = sbr.rel (%p399) target = $region68
        $region67: #{tpu_custom_call.1} parent=63 // pred_region
          %402 = dma.done [#allocation3], 32
        $region68: #{tpu_custom_call.1} parent=63 // pred_fallthru
          _
        // Predicated region
        $region69: #{tpu_custom_call.1} parent=63 // pred_check
          %p403 = pneg %p158
        $region70: #{tpu_custom_call.1} parent=63 // pred_check_branch
          %405 = sbr.rel (%p403) target = $region72
        $region71: #{tpu_custom_call.1} parent=63 // pred_region
          %406 = dma.done [#allocation6], 32768
        $region72: #{tpu_custom_call.1} parent=63 // pred_fallthru
          _
        %s407 = smul.u32 8, %s32
        %p408 = scmp.lt.s32.totalorder %s407, 15
        %s409 = scalar_select %p408, %s407, 15
        %s410 = smul.addr %s409, 2
        %s411 = smul.addr %s410, 4
        %s412 = scalar_lea.vmem %s0, %s411
        %p413 = pneg %p53
        %p414 = pneg %p50
        %p415 = pneg %p74
        %p416 = pneg %p71
        %p417 = pneg %p95
        %p418 = pneg %p92
        %p419 = pneg %p116
        %p420 = pneg %p113
        %p421 = pneg %p137
        %p422 = pneg %p134
        %p423 = pneg %p158
        %p424 = pneg %p155
        %p425 = pneg %p179
        %p426 = pneg %p176
        %p427 = pneg %p200
        %p428 = pneg %p197
        %p429 = pneg %p221
        %p430 = pneg %p218
        %p431 = pneg %p242
        %p432 = pneg %p239
        %p433 = pneg %p263
        %p434 = pneg %p260
        %p435 = pneg %p289
        %p436 = pneg %p286
        %s437 = sand.u32 %s276, 1
        %s438 = scalar_lea.sflag [#allocation4], %s437
        %s439 = sand.u32 %s276, 1
        %s440 = smul.addr %s439, 8
        %s441 = scalar_lea.vmem [#allocation7], %s440
        %p442 = pneg %p315
        %p443 = pneg %p312
        %s444 = sand.u32 %s302, 1
        %s445 = scalar_lea.sflag [#allocation9], %s444
        %s446 = sand.u32 %s302, 1
        %s447 = smul.addr %s446, 512
        %s448 = scalar_lea.vmem [#allocation8], %s447
        %s449 = smul.u32 8, %s32
        %p450 = scmp.lt.s32.totalorder %s449, 15
        %s451 = scalar_select %p450, %s449, 15
        %s452 = smul.addr %s451, 2
        %s453 = smul.addr %s452, 4
        %s454 = scalar_lea.vmem %s0, %s453
        %s455 = smul.u32 8, %s32
        %s456 = smul.u32 8, %s32
        %v458 = vld [vmem:[%s454] sm:$0xf]
        %v459 = vld [vmem:[%s454 + $0x4] sm:$0xf]
        %v460 = vld [vmem:[%s454 + $0x8] sm:$0xf]
        %v461 = vld [vmem:[%s454 + $0xc] sm:$0xf]
        %v462 = vld [vmem:[%s454 + $0x10] sm:$0xf]
        %v463 = vld [vmem:[%s454 + $0x14] sm:$0xf]
        %v464 = vld [vmem:[%s454 + $0x18] sm:$0xf]
        %v465 = vld [vmem:[%s454 + $0x1c] sm:$0xf]
        %v466 = vld [vmem:[%s454 + $0x20] sm:$0xf]
        %v467 = vld [vmem:[%s454 + $0x24] sm:$0xf]
        %v468 = vld [vmem:[%s454 + $0x28] sm:$0xf]
        %v469 = vld [vmem:[%s454 + $0x2c] sm:$0xf]
        %v470 = vld [vmem:[%s454 + $0x30] sm:$0xf]
        %v471 = vld [vmem:[%s454 + $0x34] sm:$0xf]
        %v472 = vld [vmem:[%s454 + $0x38] sm:$0xf]
        %v473 = vld [vmem:[%s454 + $0x3c] sm:$0xf]
        %v474 = vld [vmem:[#allocation2] sm:$0x3]
        %v475 = vld [vmem:[%s2] sm:$0x1]
        %v477 = vlaneseq
        %v478 = vshrl.u32 %v477, 7
        %v479 = vsub.s32 0, %v478
        %v480 = vrot.slane %v475, %v479
        %v498 = vunpack.c.l.b16 %v458
        %v499 = vunpack.c.l.b16 %v459
        %v500 = vunpack.c.l.b16 %v460
        %v501 = vunpack.c.l.b16 %v461
        %v502 = vunpack.c.l.b16 %v462
        %v503 = vunpack.c.l.b16 %v463
        %v504 = vunpack.c.l.b16 %v464
        %v505 = vunpack.c.l.b16 %v465
        %v506 = vunpack.c.l.b16 %v466
        %v507 = vunpack.c.l.b16 %v467
        %v508 = vunpack.c.l.b16 %v468
        %v509 = vunpack.c.l.b16 %v469
        %v510 = vunpack.c.l.b16 %v470
        %v511 = vunpack.c.l.b16 %v471
        %v512 = vunpack.c.l.b16 %v472
        %v513 = vunpack.c.l.b16 %v473
        %v514 = vpack.c.b16 %v499, %v498
        %v515 = vpack.c.b16 %v501, %v500
        %v516 = vpack.c.b16 %v503, %v502
        %v517 = vpack.c.b16 %v505, %v504
        %v518 = vpack.c.b16 %v507, %v506
        %v519 = vpack.c.b16 %v509, %v508
        %v520 = vpack.c.b16 %v511, %v510
        %v521 = vpack.c.b16 %v513, %v512
        %vm522 = vcmask 31744
        %v524 = vsel %vm522, %v514, 0
        %v527 = vsel %vm522, %v515, 0
        %v530 = vsel %vm522, %v516, 0
        %v533 = vsel %vm522, %v517, 0
        %v536 = vsel %vm522, %v518, 0
        %v539 = vsel %vm522, %v519, 0
        %v542 = vsel %vm522, %v520, 0
        %v545 = vsel %vm522, %v521, 0
        %vm547 = vcmask 1041408
        %v549 = vsel %vm547, %v474, 0
        %551 = vmatprep.subr.bf16.mxu0 0
        %552 = vmatpush1.bf16.msra.mxu0 0
        %553 = vmatprep.subr.bf16.mxu0 0
        %554 = vmatpush1.bf16.msra.mxu0 0
        %555 = vmatprep.subr.bf16.mxu0 0
        %556 = vmatpush1.bf16.msra.mxu0 0
        %557 = vmatprep.subr.bf16.mxu0 0
        %558 = vmatpush1.bf16.msra.mxu0 0
        %559 = vmatprep.subr.bf16.mxu0 0
        %560 = vmatpush1.bf16.msra.mxu0 0
        %561 = vmatprep.subr.bf16.mxu0 0
        %562 = vmatpush1.bf16.msra.mxu0 0
        %563 = vmatprep.subr.bf16.mxu0 0
        %564 = vmatpush1.bf16.msra.mxu0 0
        %565 = vmatprep.subr.bf16.mxu0 0
        %566 = vmatpush1.bf16.msra.mxu0 %v549
        %567 = vmatprep.subr.bf16.mxu0 0
        %568 = vmatpush2.bf16.msra.mxu0 0
        %569 = vmatprep.subr.bf16.mxu0 0
        %570 = vmatpush2.bf16.msra.mxu0 0
        %571 = vmatprep.subr.bf16.mxu0 0
        %572 = vmatpush2.bf16.msra.mxu0 0
        %573 = vmatprep.subr.bf16.mxu0 0
        %574 = vmatpush2.bf16.msra.mxu0 0
        %575 = vmatprep.subr.bf16.mxu0 0
        %576 = vmatpush2.bf16.msra.mxu0 0
        %577 = vmatprep.subr.bf16.mxu0 0
        %578 = vmatpush2.bf16.msra.mxu0 0
        %579 = vmatprep.subr.bf16.mxu0 0
        %580 = vmatpush2.bf16.msra.mxu0 0
        %581 = vmatprep.subr.bf16.mxu0 0
        %582 = vmatpush2.bf16.msra.mxu0 0
        %583 = vmatprep.mubr.bf16.mxu0 0
        %584 = vmatmul.mubr.bf16.gmra.mxu0 %v524
        %v585 = vpop.f32.mrf.mxu0
        %v586 = vadd.f32 %v480, %v585
        %v587 = vpop.f32.mrf.mxu0
        %v588 = vpop.f32.mrf.mxu0
        %v589 = vadd.f32 %v480, %v588
        %v590 = vpop.f32.mrf.mxu0
        %591 = vmatprep.mubr.bf16.mxu0 0
        %592 = vmatmul.mubr.bf16.gmra.mxu0 %v527
        %v593 = vpop.f32.mrf.mxu0
        %v594 = vadd.f32 %v480, %v593
        %v595 = vpop.f32.mrf.mxu0
        %v596 = vpop.f32.mrf.mxu0
        %v597 = vadd.f32 %v480, %v596
        %v598 = vpop.f32.mrf.mxu0
        %599 = vmatprep.mubr.bf16.mxu0 0
        %600 = vmatmul.mubr.bf16.gmra.mxu0 %v530
        %v601 = vpop.f32.mrf.mxu0
        %v602 = vadd.f32 %v480, %v601
        %v603 = vpop.f32.mrf.mxu0
        %v604 = vpop.f32.mrf.mxu0
        %v605 = vadd.f32 %v480, %v604
        %v606 = vpop.f32.mrf.mxu0
        %607 = vmatprep.mubr.bf16.mxu0 0
        %608 = vmatmul.mubr.bf16.gmra.mxu0 %v533
        %v609 = vpop.f32.mrf.mxu0
        %v610 = vadd.f32 %v480, %v609
        %v611 = vpop.f32.mrf.mxu0
        %v612 = vpop.f32.mrf.mxu0
        %v613 = vadd.f32 %v480, %v612
        %v614 = vpop.f32.mrf.mxu0
        %615 = vmatprep.mubr.bf16.mxu0 0
        %616 = vmatmul.mubr.bf16.gmra.mxu0 %v536
        %v617 = vpop.f32.mrf.mxu0
        %v618 = vadd.f32 %v480, %v617
        %v619 = vpop.f32.mrf.mxu0
        %v620 = vpop.f32.mrf.mxu0
        %v621 = vadd.f32 %v480, %v620
        %v622 = vpop.f32.mrf.mxu0
        %623 = vmatprep.mubr.bf16.mxu0 0
        %624 = vmatmul.mubr.bf16.gmra.mxu0 %v539
        %v625 = vpop.f32.mrf.mxu0
        %v626 = vadd.f32 %v480, %v625
        %v627 = vpop.f32.mrf.mxu0
        %v628 = vpop.f32.mrf.mxu0
        %v629 = vadd.f32 %v480, %v628
        %v630 = vpop.f32.mrf.mxu0
        %631 = vmatprep.mubr.bf16.mxu0 0
        %632 = vmatmul.mubr.bf16.gmra.mxu0 %v542
        %v633 = vpop.f32.mrf.mxu0
        %v634 = vadd.f32 %v480, %v633
        %v635 = vpop.f32.mrf.mxu0
        %v636 = vpop.f32.mrf.mxu0
        %v637 = vadd.f32 %v480, %v636
        %v638 = vpop.f32.mrf.mxu0
        %639 = vmatprep.mubr.bf16.mxu0 0
        %640 = vmatmul.mubr.bf16.gmra.mxu0 %v545
        %v641 = vpop.f32.mrf.mxu0
        %v642 = vadd.f32 %v480, %v641
        %v643 = vpop.f32.mrf.mxu0
        %v644 = vpop.f32.mrf.mxu0
        %v645 = vadd.f32 %v480, %v644
        %v646 = vpop.f32.mrf.mxu0
        %647 = vdwg.mxu0
        %v648 = vmax.f32 %v586, 0.0
        %v649 = vmax.f32 %v589, 0.0
        %v650 = vmax.f32 %v594, 0.0
        %v651 = vmax.f32 %v597, 0.0
        %v652 = vmax.f32 %v602, 0.0
        %v653 = vmax.f32 %v605, 0.0
        %v654 = vmax.f32 %v610, 0.0
        %v655 = vmax.f32 %v613, 0.0
        %v656 = vmax.f32 %v618, 0.0
        %v657 = vmax.f32 %v621, 0.0
        %v658 = vmax.f32 %v626, 0.0
        %v659 = vmax.f32 %v629, 0.0
        %v660 = vmax.f32 %v634, 0.0
        %v661 = vmax.f32 %v637, 0.0
        %v662 = vmax.f32 %v642, 0.0
        %v663 = vmax.f32 %v645, 0.0
        %v664 = vpack.c.bf16 %v649, %v648
        %v665 = vpack.c.bf16 %v651, %v650
        %v666 = vpack.c.bf16 %v653, %v652
        %v667 = vpack.c.bf16 %v655, %v654
        %v668 = vpack.c.bf16 %v657, %v656
        %v669 = vpack.c.bf16 %v659, %v658
        %v670 = vpack.c.bf16 %v661, %v660
        %v671 = vpack.c.bf16 %v663, %v662
        %v672 = vld [vmem:[%s3] sm:$0xf]
        %v673 = vld [vmem:[%s3 + $0x4] sm:$0xf]
        %v674 = vld [vmem:[%s3 + $0x8] sm:$0xf]
        %v675 = vld [vmem:[%s3 + $0xc] sm:$0xf]
        %v676 = vld [vmem:[%s3 + $0x10] sm:$0xf]
        %v677 = vld [vmem:[%s3 + $0x14] sm:$0xf]
        %v678 = vld [vmem:[%s3 + $0x18] sm:$0xf]
        %v679 = vld [vmem:[%s3 + $0x1c] sm:$0xf]
        %v680 = vld [vmem:[%s4] sm:$0x1]
        %v682 = vlaneseq
        %v683 = vshrl.u32 %v682, 7
        %v684 = vsub.s32 0, %v683
        %v685 = vrot.slane %v680, %v684
        %v695 = vunpack.c.l.b16 %v672
        %v696 = vunpack.c.l.b16 %v673
        %v697 = vunpack.c.l.b16 %v674
        %v698 = vunpack.c.l.b16 %v675
        %v699 = vunpack.c.l.b16 %v676
        %v700 = vunpack.c.l.b16 %v677
        %v701 = vunpack.c.l.b16 %v678
        %v702 = vunpack.c.l.b16 %v679
        %v703 = vpack.c.b16 %v696, %v695
        %v704 = vpack.c.b16 %v698, %v697
        %v705 = vpack.c.b16 %v700, %v699
        %v706 = vpack.c.b16 %v702, %v701
        %vm711 = vcmask 523264
        %v713 = vsel %vm711, %v664, 0
        %v716 = vsel %vm711, %v665, 0
        %v719 = vsel %vm711, %v666, 0
        %v722 = vsel %vm711, %v667, 0
        %v725 = vsel %vm711, %v668, 0
        %v728 = vsel %vm711, %v669, 0
        %v731 = vsel %vm711, %v670, 0
        %v734 = vsel %vm711, %v671, 0
        %736 = vmatprep.subr.bf16.mxu0 0
        %737 = vmatpush1.bf16.msra.mxu0 0
        %738 = vmatprep.subr.bf16.mxu0 0
        %739 = vmatpush1.bf16.msra.mxu0 0
        %740 = vmatprep.subr.bf16.mxu0 0
        %741 = vmatpush1.bf16.msra.mxu0 0
        %742 = vmatprep.subr.bf16.mxu0 0
        %743 = vmatpush1.bf16.msra.mxu0 0
        %744 = vmatprep.subr.bf16.mxu0 0
        %745 = vmatpush1.bf16.msra.mxu0 %v706
        %746 = vmatprep.subr.bf16.mxu0 0
        %747 = vmatpush1.bf16.msra.mxu0 %v705
        %748 = vmatprep.subr.bf16.mxu0 0
        %749 = vmatpush1.bf16.msra.mxu0 %v704
        %750 = vmatprep.subr.bf16.mxu0 0
        %751 = vmatpush1.bf16.msra.mxu0 %v703
        %752 = vmatprep.subr.bf16.mxu0 0
        %753 = vmatpush2.bf16.msra.mxu0 0
        %754 = vmatprep.subr.bf16.mxu0 0
        %755 = vmatpush2.bf16.msra.mxu0 0
        %756 = vmatprep.subr.bf16.mxu0 0
        %757 = vmatpush2.bf16.msra.mxu0 0
        %758 = vmatprep.subr.bf16.mxu0 0
        %759 = vmatpush2.bf16.msra.mxu0 0
        %760 = vmatprep.subr.bf16.mxu0 0
        %761 = vmatpush2.bf16.msra.mxu0 0
        %762 = vmatprep.subr.bf16.mxu0 0
        %763 = vmatpush2.bf16.msra.mxu0 0
        %764 = vmatprep.subr.bf16.mxu0 0
        %765 = vmatpush2.bf16.msra.mxu0 0
        %766 = vmatprep.subr.bf16.mxu0 0
        %767 = vmatpush2.bf16.msra.mxu0 0
        %768 = vmatprep.mubr.bf16.mxu0 0
        %769 = vmatmul.mubr.bf16.gmra.mxu0 %v713
        %v770 = vpop.f32.mrf.mxu0
        %v771 = vadd.f32 %v685, %v770
        %v772 = vpop.f32.mrf.mxu0
        %v773 = vpop.f32.mrf.mxu0
        %v774 = vadd.f32 %v685, %v773
        %v775 = vpop.f32.mrf.mxu0
        %776 = vmatprep.mubr.bf16.mxu0 0
        %777 = vmatmul.mubr.bf16.gmra.mxu0 %v716
        %v778 = vpop.f32.mrf.mxu0
        %v779 = vadd.f32 %v685, %v778
        %v780 = vpop.f32.mrf.mxu0
        %v781 = vpop.f32.mrf.mxu0
        %v782 = vadd.f32 %v685, %v781
        %v783 = vpop.f32.mrf.mxu0
        %784 = vmatprep.mubr.bf16.mxu0 0
        %785 = vmatmul.mubr.bf16.gmra.mxu0 %v719
        %v786 = vpop.f32.mrf.mxu0
        %v787 = vadd.f32 %v685, %v786
        %v788 = vpop.f32.mrf.mxu0
        %v789 = vpop.f32.mrf.mxu0
        %v790 = vadd.f32 %v685, %v789
        %v791 = vpop.f32.mrf.mxu0
        %792 = vmatprep.mubr.bf16.mxu0 0
        %793 = vmatmul.mubr.bf16.gmra.mxu0 %v722
        %v794 = vpop.f32.mrf.mxu0
        %v795 = vadd.f32 %v685, %v794
        %v796 = vpop.f32.mrf.mxu0
        %v797 = vpop.f32.mrf.mxu0
        %v798 = vadd.f32 %v685, %v797
        %v799 = vpop.f32.mrf.mxu0
        %800 = vmatprep.mubr.bf16.mxu0 0
        %801 = vmatmul.mubr.bf16.gmra.mxu0 %v725
        %v802 = vpop.f32.mrf.mxu0
        %v803 = vadd.f32 %v685, %v802
        %v804 = vpop.f32.mrf.mxu0
        %v805 = vpop.f32.mrf.mxu0
        %v806 = vadd.f32 %v685, %v805
        %v807 = vpop.f32.mrf.mxu0
        %808 = vmatprep.mubr.bf16.mxu0 0
        %809 = vmatmul.mubr.bf16.gmra.mxu0 %v728
        %v810 = vpop.f32.mrf.mxu0
        %v811 = vadd.f32 %v685, %v810
        %v812 = vpop.f32.mrf.mxu0
        %v813 = vpop.f32.mrf.mxu0
        %v814 = vadd.f32 %v685, %v813
        %v815 = vpop.f32.mrf.mxu0
        %816 = vmatprep.mubr.bf16.mxu0 0
        %817 = vmatmul.mubr.bf16.gmra.mxu0 %v731
        %v818 = vpop.f32.mrf.mxu0
        %v819 = vadd.f32 %v685, %v818
        %v820 = vpop.f32.mrf.mxu0
        %v821 = vpop.f32.mrf.mxu0
        %v822 = vadd.f32 %v685, %v821
        %v823 = vpop.f32.mrf.mxu0
        %824 = vmatprep.mubr.bf16.mxu0 0
        %825 = vmatmul.mubr.bf16.gmra.mxu0 %v734
        %v826 = vpop.f32.mrf.mxu0
        %v827 = vadd.f32 %v685, %v826
        %v828 = vpop.f32.mrf.mxu0
        %v829 = vpop.f32.mrf.mxu0
        %v830 = vadd.f32 %v685, %v829
        %v831 = vpop.f32.mrf.mxu0
        %832 = vdwg.mxu0
        %v833 = vmax.f32 %v771, 0.0
        %v834 = vmax.f32 %v774, 0.0
        %v835 = vmax.f32 %v779, 0.0
        %v836 = vmax.f32 %v782, 0.0
        %v837 = vmax.f32 %v787, 0.0
        %v838 = vmax.f32 %v790, 0.0
        %v839 = vmax.f32 %v795, 0.0
        %v840 = vmax.f32 %v798, 0.0
        %v841 = vmax.f32 %v803, 0.0
        %v842 = vmax.f32 %v806, 0.0
        %v843 = vmax.f32 %v811, 0.0
        %v844 = vmax.f32 %v814, 0.0
        %v845 = vmax.f32 %v819, 0.0
        %v846 = vmax.f32 %v822, 0.0
        %v847 = vmax.f32 %v827, 0.0
        %v848 = vmax.f32 %v830, 0.0
        %v849 = vlaneseq
        %v850 = vshrl.u32 %v849, 7
        %v851 = vadd.s32 %v850, 8
        %vm852 = vcmp.lt.s32.totalorder %v850, 6
        %vm853 = vcmp.lt.s32.totalorder %v851, 6
        %v854 = vsel %vm852, 1, 0
        %v855 = vsel %vm853, 1, 0
        %vm856 = vcmp.eq.s32.totalorder %v854, 1
        %vm857 = vcmp.eq.s32.totalorder %v855, 1
        %v858 = vsel %vm856, %v833, -inf
        %v859 = vsel %vm857, %v834, -inf
        %v860 = vsel %vm856, %v835, -inf
        %v861 = vsel %vm857, %v836, -inf
        %v862 = vsel %vm856, %v837, -inf
        %v863 = vsel %vm857, %v838, -inf
        %v864 = vsel %vm856, %v839, -inf
        %v865 = vsel %vm857, %v840, -inf
        %v866 = vsel %vm856, %v841, -inf
        %v867 = vsel %vm857, %v842, -inf
        %v868 = vsel %vm856, %v843, -inf
        %v869 = vsel %vm857, %v844, -inf
        %v870 = vsel %vm856, %v845, -inf
        %v871 = vsel %vm857, %v846, -inf
        %v872 = vsel %vm856, %v847, -inf
        %v873 = vsel %vm857, %v848, -inf
        %v874 = vmax.f32 %v858, %v859
        %v875 = vrot.slane %v874, 4
        %v876 = vmax.f32 %v874, %v875
        %v877 = vrot.slane %v876, 2
        %v878 = vmax.f32 %v876, %v877
        %v879 = vrot.slane %v878, 1
        %v880 = vmax.f32 %v878, %v879
        %v881 = vmax.f32 %v860, %v861
        %v882 = vrot.slane %v881, 4
        %v883 = vmax.f32 %v881, %v882
        %v884 = vrot.slane %v883, 2
        %v885 = vmax.f32 %v883, %v884
        %v886 = vrot.slane %v885, 1
        %v887 = vmax.f32 %v885, %v886
        %v888 = vmax.f32 %v862, %v863
        %v889 = vrot.slane %v888, 4
        %v890 = vmax.f32 %v888, %v889
        %v891 = vrot.slane %v890, 2
        %v892 = vmax.f32 %v890, %v891
        %v893 = vrot.slane %v892, 1
        %v894 = vmax.f32 %v892, %v893
        %v895 = vmax.f32 %v864, %v865
        %v896 = vrot.slane %v895, 4
        %v897 = vmax.f32 %v895, %v896
        %v898 = vrot.slane %v897, 2
        %v899 = vmax.f32 %v897, %v898
        %v900 = vrot.slane %v899, 1
        %v901 = vmax.f32 %v899, %v900
        %v902 = vmax.f32 %v866, %v867
        %v903 = vrot.slane %v902, 4
        %v904 = vmax.f32 %v902, %v903
        %v905 = vrot.slane %v904, 2
        %v906 = vmax.f32 %v904, %v905
        %v907 = vrot.slane %v906, 1
        %v908 = vmax.f32 %v906, %v907
        %v909 = vmax.f32 %v868, %v869
        %v910 = vrot.slane %v909, 4
        %v911 = vmax.f32 %v909, %v910
        %v912 = vrot.slane %v911, 2
        %v913 = vmax.f32 %v911, %v912
        %v914 = vrot.slane %v913, 1
        %v915 = vmax.f32 %v913, %v914
        %v916 = vmax.f32 %v870, %v871
        %v917 = vrot.slane %v916, 4
        %v918 = vmax.f32 %v916, %v917
        %v919 = vrot.slane %v918, 2
        %v920 = vmax.f32 %v918, %v919
        %v921 = vrot.slane %v920, 1
        %v922 = vmax.f32 %v920, %v921
        %v923 = vmax.f32 %v872, %v873
        %v924 = vrot.slane %v923, 4
        %v925 = vmax.f32 %v923, %v924
        %v926 = vrot.slane %v925, 2
        %v927 = vmax.f32 %v925, %v926
        %v928 = vrot.slane %v927, 1
        %v929 = vmax.f32 %v927, %v928
        %v930 = vpack.c.bf16 %v880, %v880
        %v931 = vpack.c.bf16 %v887, %v887
        %v932 = vpack.c.bf16 %v894, %v894
        %v933 = vpack.c.bf16 %v901, %v901
        %v934 = vpack.c.bf16 %v908, %v908
        %v935 = vpack.c.bf16 %v915, %v915
        %v936 = vpack.c.bf16 %v922, %v922
        %v937 = vpack.c.bf16 %v929, %v929
        %v938 = vld [vmem:[#allocation5] sm:$0xff]
        %v939 = vld [vmem:[#allocation5 + $0x8] sm:$0xff]
        %v940 = vld [vmem:[#allocation5 + $0x10] sm:$0xff]
        %v941 = vld [vmem:[#allocation5 + $0x18] sm:$0xff]
        %v942 = vld [vmem:[#allocation5 + $0x20] sm:$0xff]
        %v943 = vld [vmem:[#allocation5 + $0x28] sm:$0xff]
        %v944 = vld [vmem:[#allocation5 + $0x30] sm:$0xff]
        %v945 = vld [vmem:[#allocation5 + $0x38] sm:$0xff]
        %v946 = vld [vmem:[#allocation5 + $0x40] sm:$0xff]
        %v947 = vld [vmem:[#allocation5 + $0x48] sm:$0xff]
        %v948 = vld [vmem:[#allocation5 + $0x50] sm:$0xff]
        %v949 = vld [vmem:[#allocation5 + $0x58] sm:$0xff]
        %v950 = vld [vmem:[#allocation5 + $0x60] sm:$0xff]
        %v951 = vld [vmem:[#allocation5 + $0x68] sm:$0xff]
        %v952 = vld [vmem:[#allocation5 + $0x70] sm:$0xff]
        %v953 = vld [vmem:[#allocation5 + $0x78] sm:$0xff]
        %v954 = vld [vmem:[#allocation5 + $0x80] sm:$0xff]
        %v955 = vld [vmem:[#allocation5 + $0x88] sm:$0xff]
        %v956 = vld [vmem:[#allocation5 + $0x90] sm:$0xff]
        %v957 = vld [vmem:[#allocation5 + $0x98] sm:$0xff]
        %v958 = vld [vmem:[#allocation5 + $0xa0] sm:$0xff]
        %v959 = vld [vmem:[#allocation5 + $0xa8] sm:$0xff]
        %v960 = vld [vmem:[#allocation5 + $0xb0] sm:$0xff]
        %v961 = vld [vmem:[#allocation5 + $0xb8] sm:$0xff]
        %v962 = vld [vmem:[#allocation5 + $0xc0] sm:$0xff]
        %v963 = vld [vmem:[#allocation5 + $0xc8] sm:$0xff]
        %v964 = vld [vmem:[#allocation5 + $0xd0] sm:$0xff]
        %v965 = vld [vmem:[#allocation5 + $0xd8] sm:$0xff]
        %v966 = vld [vmem:[#allocation5 + $0xe0] sm:$0xff]
        %v967 = vld [vmem:[#allocation5 + $0xe8] sm:$0xff]
        %v968 = vld [vmem:[#allocation5 + $0xf0] sm:$0xff]
        %v969 = vld [vmem:[#allocation5 + $0xf8] sm:$0xff]
        %v970 = vld [vmem:[#allocation5 + $0x100] sm:$0xff]
        %v971 = vld [vmem:[#allocation5 + $0x108] sm:$0xff]
        %v972 = vld [vmem:[#allocation5 + $0x110] sm:$0xff]
        %v973 = vld [vmem:[#allocation5 + $0x118] sm:$0xff]
        %v974 = vld [vmem:[#allocation5 + $0x120] sm:$0xff]
        %v975 = vld [vmem:[#allocation5 + $0x128] sm:$0xff]
        %v976 = vld [vmem:[#allocation5 + $0x130] sm:$0xff]
        %v977 = vld [vmem:[#allocation5 + $0x138] sm:$0xff]
        %v978 = vld [vmem:[#allocation5 + $0x140] sm:$0xff]
        %v979 = vld [vmem:[#allocation5 + $0x148] sm:$0xff]
        %v980 = vld [vmem:[#allocation5 + $0x150] sm:$0xff]
        %v981 = vld [vmem:[#allocation5 + $0x158] sm:$0xff]
        %v982 = vld [vmem:[#allocation5 + $0x160] sm:$0xff]
        %v983 = vld [vmem:[#allocation5 + $0x168] sm:$0xff]
        %v984 = vld [vmem:[#allocation5 + $0x170] sm:$0xff]
        %v985 = vld [vmem:[#allocation5 + $0x178] sm:$0xff]
        %v986 = vld [vmem:[#allocation5 + $0x180] sm:$0xff]
        %v987 = vld [vmem:[#allocation5 + $0x188] sm:$0xff]
        %v988 = vld [vmem:[#allocation5 + $0x190] sm:$0xff]
        %v989 = vld [vmem:[#allocation5 + $0x198] sm:$0xff]
        %v990 = vld [vmem:[#allocation5 + $0x1a0] sm:$0xff]
        %v991 = vld [vmem:[#allocation5 + $0x1a8] sm:$0xff]
        %v992 = vld [vmem:[#allocation5 + $0x1b0] sm:$0xff]
        %v993 = vld [vmem:[#allocation5 + $0x1b8] sm:$0xff]
        %v994 = vld [vmem:[#allocation5 + $0x1c0] sm:$0xff]
        %v995 = vld [vmem:[#allocation5 + $0x1c8] sm:$0xff]
        %v996 = vld [vmem:[#allocation5 + $0x1d0] sm:$0xff]
        %v997 = vld [vmem:[#allocation5 + $0x1d8] sm:$0xff]
        %v998 = vld [vmem:[#allocation5 + $0x1e0] sm:$0xff]
        %v999 = vld [vmem:[#allocation5 + $0x1e8] sm:$0xff]
        %v1000 = vld [vmem:[#allocation5 + $0x1f0] sm:$0xff]
        %v1001 = vld [vmem:[#allocation5 + $0x1f8] sm:$0xff]
        %v1002 = vld [vmem:[#allocation5 + $0x200] sm:$0xff]
        %v1003 = vld [vmem:[#allocation5 + $0x208] sm:$0xff]
        %v1004 = vld [vmem:[#allocation5 + $0x210] sm:$0xff]
        %v1005 = vld [vmem:[#allocation5 + $0x218] sm:$0xff]
        %v1006 = vld [vmem:[#allocation5 + $0x220] sm:$0xff]
        %v1007 = vld [vmem:[#allocation5 + $0x228] sm:$0xff]
        %v1008 = vld [vmem:[#allocation5 + $0x230] sm:$0xff]
        %v1009 = vld [vmem:[#allocation5 + $0x238] sm:$0xff]
        %v1010 = vld [vmem:[#allocation5 + $0x240] sm:$0xff]
        %v1011 = vld [vmem:[#allocation5 + $0x248] sm:$0xff]
        %v1012 = vld [vmem:[#allocation5 + $0x250] sm:$0xff]
        %v1013 = vld [vmem:[#allocation5 + $0x258] sm:$0xff]
        %v1014 = vld [vmem:[#allocation5 + $0x260] sm:$0xff]
        %v1015 = vld [vmem:[#allocation5 + $0x268] sm:$0xff]
        %v1016 = vld [vmem:[#allocation5 + $0x270] sm:$0xff]
        %v1017 = vld [vmem:[#allocation5 + $0x278] sm:$0xff]
        %v1018 = vld [vmem:[#allocation5 + $0x280] sm:$0xff]
        %v1019 = vld [vmem:[#allocation5 + $0x288] sm:$0xff]
        %v1020 = vld [vmem:[#allocation5 + $0x290] sm:$0xff]
        %v1021 = vld [vmem:[#allocation5 + $0x298] sm:$0xff]
        %v1022 = vld [vmem:[#allocation5 + $0x2a0] sm:$0xff]
        %v1023 = vld [vmem:[#allocation5 + $0x2a8] sm:$0xff]
        %v1024 = vld [vmem:[#allocation5 + $0x2b0] sm:$0xff]
        %v1025 = vld [vmem:[#allocation5 + $0x2b8] sm:$0xff]
        %v1026 = vld [vmem:[#allocation5 + $0x2c0] sm:$0xff]
        %v1027 = vld [vmem:[#allocation5 + $0x2c8] sm:$0xff]
        %v1028 = vld [vmem:[#allocation5 + $0x2d0] sm:$0xff]
        %v1029 = vld [vmem:[#allocation5 + $0x2d8] sm:$0xff]
        %v1030 = vld [vmem:[#allocation5 + $0x2e0] sm:$0xff]
        %v1031 = vld [vmem:[#allocation5 + $0x2e8] sm:$0xff]
        %v1032 = vld [vmem:[#allocation5 + $0x2f0] sm:$0xff]
        %v1033 = vld [vmem:[#allocation5 + $0x2f8] sm:$0xff]
        %v1034 = vld [vmem:[#allocation5 + $0x300] sm:$0xff]
        %v1035 = vld [vmem:[#allocation5 + $0x308] sm:$0xff]
        %v1036 = vld [vmem:[#allocation5 + $0x310] sm:$0xff]
        %v1037 = vld [vmem:[#allocation5 + $0x318] sm:$0xff]
        %v1038 = vld [vmem:[#allocation5 + $0x320] sm:$0xff]
        %v1039 = vld [vmem:[#allocation5 + $0x328] sm:$0xff]
        %v1040 = vld [vmem:[#allocation5 + $0x330] sm:$0xff]
        %v1041 = vld [vmem:[#allocation5 + $0x338] sm:$0xff]
        %v1042 = vld [vmem:[#allocation5 + $0x340] sm:$0xff]
        %v1043 = vld [vmem:[#allocation5 + $0x348] sm:$0xff]
        %v1044 = vld [vmem:[#allocation5 + $0x350] sm:$0xff]
        %v1045 = vld [vmem:[#allocation5 + $0x358] sm:$0xff]
        %v1046 = vld [vmem:[#allocation5 + $0x360] sm:$0xff]
        %v1047 = vld [vmem:[#allocation5 + $0x368] sm:$0xff]
        %v1048 = vld [vmem:[#allocation5 + $0x370] sm:$0xff]
        %v1049 = vld [vmem:[#allocation5 + $0x378] sm:$0xff]
        %v1050 = vld [vmem:[#allocation5 + $0x380] sm:$0xff]
        %v1051 = vld [vmem:[#allocation5 + $0x388] sm:$0xff]
        %v1052 = vld [vmem:[#allocation5 + $0x390] sm:$0xff]
        %v1053 = vld [vmem:[#allocation5 + $0x398] sm:$0xff]
        %v1054 = vld [vmem:[#allocation5 + $0x3a0] sm:$0xff]
        %v1055 = vld [vmem:[#allocation5 + $0x3a8] sm:$0xff]
        %v1056 = vld [vmem:[#allocation5 + $0x3b0] sm:$0xff]
        %v1057 = vld [vmem:[#allocation5 + $0x3b8] sm:$0xff]
        %v1058 = vld [vmem:[#allocation5 + $0x3c0] sm:$0xff]
        %v1059 = vld [vmem:[#allocation5 + $0x3c8] sm:$0xff]
        %v1060 = vld [vmem:[#allocation5 + $0x3d0] sm:$0xff]
        %v1061 = vld [vmem:[#allocation5 + $0x3d8] sm:$0xff]
        %v1062 = vld [vmem:[#allocation5 + $0x3e0] sm:$0xff]
        %v1063 = vld [vmem:[#allocation5 + $0x3e8] sm:$0xff]
        %v1064 = vld [vmem:[#allocation5 + $0x3f0] sm:$0xff]
        %v1065 = vld [vmem:[#allocation5 + $0x3f8] sm:$0xff]
        %v1066 = vld [vmem:[#allocation5 + $0x400] sm:$0xff]
        %v1067 = vld [vmem:[#allocation5 + $0x408] sm:$0xff]
        %v1068 = vld [vmem:[#allocation5 + $0x410] sm:$0xff]
        %v1069 = vld [vmem:[#allocation5 + $0x418] sm:$0xff]
        %v1070 = vld [vmem:[#allocation5 + $0x420] sm:$0xff]
        %v1071 = vld [vmem:[#allocation5 + $0x428] sm:$0xff]
        %v1072 = vld [vmem:[#allocation5 + $0x430] sm:$0xff]
        %v1073 = vld [vmem:[#allocation5 + $0x438] sm:$0xff]
        %v1074 = vld [vmem:[#allocation5 + $0x440] sm:$0xff]
        %v1075 = vld [vmem:[#allocation5 + $0x448] sm:$0xff]
        %v1076 = vld [vmem:[#allocation5 + $0x450] sm:$0xff]
        %v1077 = vld [vmem:[#allocation5 + $0x458] sm:$0xff]
        %v1078 = vld [vmem:[#allocation5 + $0x460] sm:$0xff]
        %v1079 = vld [vmem:[#allocation5 + $0x468] sm:$0xff]
        %v1080 = vld [vmem:[#allocation5 + $0x470] sm:$0xff]
        %v1081 = vld [vmem:[#allocation5 + $0x478] sm:$0xff]
        %v1082 = vld [vmem:[#allocation5 + $0x480] sm:$0xff]
        %v1083 = vld [vmem:[#allocation5 + $0x488] sm:$0xff]
        %v1084 = vld [vmem:[#allocation5 + $0x490] sm:$0xff]
        %v1085 = vld [vmem:[#allocation5 + $0x498] sm:$0xff]
        %v1086 = vld [vmem:[#allocation5 + $0x4a0] sm:$0xff]
        %v1087 = vld [vmem:[#allocation5 + $0x4a8] sm:$0xff]
        %v1088 = vld [vmem:[#allocation5 + $0x4b0] sm:$0xff]
        %v1089 = vld [vmem:[#allocation5 + $0x4b8] sm:$0xff]
        %v1090 = vld [vmem:[#allocation5 + $0x4c0] sm:$0xff]
        %v1091 = vld [vmem:[#allocation5 + $0x4c8] sm:$0xff]
        %v1092 = vld [vmem:[#allocation5 + $0x4d0] sm:$0xff]
        %v1093 = vld [vmem:[#allocation5 + $0x4d8] sm:$0xff]
        %v1094 = vld [vmem:[#allocation5 + $0x4e0] sm:$0xff]
        %v1095 = vld [vmem:[#allocation5 + $0x4e8] sm:$0xff]
        %v1096 = vld [vmem:[#allocation5 + $0x4f0] sm:$0xff]
        %v1097 = vld [vmem:[#allocation5 + $0x4f8] sm:$0xff]
        %v1098 = vld [vmem:[#allocation5 + $0x500] sm:$0xff]
        %v1099 = vld [vmem:[#allocation5 + $0x508] sm:$0xff]
        %v1100 = vld [vmem:[#allocation5 + $0x510] sm:$0xff]
        %v1101 = vld [vmem:[#allocation5 + $0x518] sm:$0xff]
        %v1102 = vld [vmem:[#allocation5 + $0x520] sm:$0xff]
        %v1103 = vld [vmem:[#allocation5 + $0x528] sm:$0xff]
        %v1104 = vld [vmem:[#allocation5 + $0x530] sm:$0xff]
        %v1105 = vld [vmem:[#allocation5 + $0x538] sm:$0xff]
        %v1106 = vld [vmem:[#allocation5 + $0x540] sm:$0xff]
        %v1107 = vld [vmem:[#allocation5 + $0x548] sm:$0xff]
        %v1108 = vld [vmem:[#allocation5 + $0x550] sm:$0xff]
        %v1109 = vld [vmem:[#allocation5 + $0x558] sm:$0xff]
        %v1110 = vld [vmem:[#allocation5 + $0x560] sm:$0xff]
        %v1111 = vld [vmem:[#allocation5 + $0x568] sm:$0xff]
        %v1112 = vld [vmem:[#allocation5 + $0x570] sm:$0xff]
        %v1113 = vld [vmem:[#allocation5 + $0x578] sm:$0xff]
        %v1114 = vld [vmem:[#allocation5 + $0x580] sm:$0xff]
        %v1115 = vld [vmem:[#allocation5 + $0x588] sm:$0xff]
        %v1116 = vld [vmem:[#allocation5 + $0x590] sm:$0xff]
        %v1117 = vld [vmem:[#allocation5 + $0x598] sm:$0xff]
        %v1118 = vld [vmem:[#allocation5 + $0x5a0] sm:$0xff]
        %v1119 = vld [vmem:[#allocation5 + $0x5a8] sm:$0xff]
        %v1120 = vld [vmem:[#allocation5 + $0x5b0] sm:$0xff]
        %v1121 = vld [vmem:[#allocation5 + $0x5b8] sm:$0xff]
        %v1122 = vld [vmem:[#allocation5 + $0x5c0] sm:$0xff]
        %v1123 = vld [vmem:[#allocation5 + $0x5c8] sm:$0xff]
        %v1124 = vld [vmem:[#allocation5 + $0x5d0] sm:$0xff]
        %v1125 = vld [vmem:[#allocation5 + $0x5d8] sm:$0xff]
        %v1126 = vld [vmem:[#allocation5 + $0x5e0] sm:$0xff]
        %v1127 = vld [vmem:[#allocation5 + $0x5e8] sm:$0xff]
        %v1128 = vld [vmem:[#allocation5 + $0x5f0] sm:$0xff]
        %v1129 = vld [vmem:[#allocation5 + $0x5f8] sm:$0xff]
        %v1130 = vld [vmem:[#allocation5 + $0x600] sm:$0xff]
        %v1131 = vld [vmem:[#allocation5 + $0x608] sm:$0xff]
        %v1132 = vld [vmem:[#allocation5 + $0x610] sm:$0xff]
        %v1133 = vld [vmem:[#allocation5 + $0x618] sm:$0xff]
        %v1134 = vld [vmem:[#allocation5 + $0x620] sm:$0xff]
        %v1135 = vld [vmem:[#allocation5 + $0x628] sm:$0xff]
        %v1136 = vld [vmem:[#allocation5 + $0x630] sm:$0xff]
        %v1137 = vld [vmem:[#allocation5 + $0x638] sm:$0xff]
        %v1138 = vld [vmem:[#allocation5 + $0x640] sm:$0xff]
        %v1139 = vld [vmem:[#allocation5 + $0x648] sm:$0xff]
        %v1140 = vld [vmem:[#allocation5 + $0x650] sm:$0xff]
        %v1141 = vld [vmem:[#allocation5 + $0x658] sm:$0xff]
        %v1142 = vld [vmem:[#allocation5 + $0x660] sm:$0xff]
        %v1143 = vld [vmem:[#allocation5 + $0x668] sm:$0xff]
        %v1144 = vld [vmem:[#allocation5 + $0x670] sm:$0xff]
        %v1145 = vld [vmem:[#allocation5 + $0x678] sm:$0xff]
        %v1146 = vld [vmem:[#allocation5 + $0x680] sm:$0xff]
        %v1147 = vld [vmem:[#allocation5 + $0x688] sm:$0xff]
        %v1148 = vld [vmem:[#allocation5 + $0x690] sm:$0xff]
        %v1149 = vld [vmem:[#allocation5 + $0x698] sm:$0xff]
        %v1150 = vld [vmem:[#allocation5 + $0x6a0] sm:$0xff]
        %v1151 = vld [vmem:[#allocation5 + $0x6a8] sm:$0xff]
        %v1152 = vld [vmem:[#allocation5 + $0x6b0] sm:$0xff]
        %v1153 = vld [vmem:[#allocation5 + $0x6b8] sm:$0xff]
        %v1154 = vld [vmem:[#allocation5 + $0x6c0] sm:$0xff]
        %v1155 = vld [vmem:[#allocation5 + $0x6c8] sm:$0xff]
        %v1156 = vld [vmem:[#allocation5 + $0x6d0] sm:$0xff]
        %v1157 = vld [vmem:[#allocation5 + $0x6d8] sm:$0xff]
        %v1158 = vld [vmem:[#allocation5 + $0x6e0] sm:$0xff]
        %v1159 = vld [vmem:[#allocation5 + $0x6e8] sm:$0xff]
        %v1160 = vld [vmem:[#allocation5 + $0x6f0] sm:$0xff]
        %v1161 = vld [vmem:[#allocation5 + $0x6f8] sm:$0xff]
        %v1162 = vld [vmem:[#allocation5 + $0x700] sm:$0xff]
        %v1163 = vld [vmem:[#allocation5 + $0x708] sm:$0xff]
        %v1164 = vld [vmem:[#allocation5 + $0x710] sm:$0xff]
        %v1165 = vld [vmem:[#allocation5 + $0x718] sm:$0xff]
        %v1166 = vld [vmem:[#allocation5 + $0x720] sm:$0xff]
        %v1167 = vld [vmem:[#allocation5 + $0x728] sm:$0xff]
        %v1168 = vld [vmem:[#allocation5 + $0x730] sm:$0xff]
        %v1169 = vld [vmem:[#allocation5 + $0x738] sm:$0xff]
        %v1170 = vld [vmem:[#allocation5 + $0x740] sm:$0xff]
        %v1171 = vld [vmem:[#allocation5 + $0x748] sm:$0xff]
        %v1172 = vld [vmem:[#allocation5 + $0x750] sm:$0xff]
        %v1173 = vld [vmem:[#allocation5 + $0x758] sm:$0xff]
        %v1174 = vld [vmem:[#allocation5 + $0x760] sm:$0xff]
        %v1175 = vld [vmem:[#allocation5 + $0x768] sm:$0xff]
        %v1176 = vld [vmem:[#allocation5 + $0x770] sm:$0xff]
        %v1177 = vld [vmem:[#allocation5 + $0x778] sm:$0xff]
        %v1178 = vld [vmem:[#allocation5 + $0x780] sm:$0xff]
        %v1179 = vld [vmem:[#allocation5 + $0x788] sm:$0xff]
        %v1180 = vld [vmem:[#allocation5 + $0x790] sm:$0xff]
        %v1181 = vld [vmem:[#allocation5 + $0x798] sm:$0xff]
        %v1182 = vld [vmem:[#allocation5 + $0x7a0] sm:$0xff]
        %v1183 = vld [vmem:[#allocation5 + $0x7a8] sm:$0xff]
        %v1184 = vld [vmem:[#allocation5 + $0x7b0] sm:$0xff]
        %v1185 = vld [vmem:[#allocation5 + $0x7b8] sm:$0xff]
        %v1186 = vld [vmem:[#allocation5 + $0x7c0] sm:$0xff]
        %v1187 = vld [vmem:[#allocation5 + $0x7c8] sm:$0xff]
        %v1188 = vld [vmem:[#allocation5 + $0x7d0] sm:$0xff]
        %v1189 = vld [vmem:[#allocation5 + $0x7d8] sm:$0xff]
        %v1190 = vld [vmem:[#allocation5 + $0x7e0] sm:$0xff]
        %v1191 = vld [vmem:[#allocation5 + $0x7e8] sm:$0xff]
        %v1192 = vld [vmem:[#allocation5 + $0x7f0] sm:$0xff]
        %v1193 = vld [vmem:[#allocation5 + $0x7f8] sm:$0xff]
        %v1194 = vld [vmem:[%s6] sm:$0xff]
        %v1195 = vld [vmem:[%s6 + $0x8] sm:$0xff]
        %v1196 = vld [vmem:[%s6 + $0x10] sm:$0xff]
        %v1197 = vld [vmem:[%s6 + $0x18] sm:$0xff]
        %v1202 = vlaneseq
        %v1203 = vshrl.u32 %v1202, 7
        %v1204 = vsub.s32 0, %v1203
        %v1205 = vrot.slane %v1194, %v1204
        %v1206 = vlaneseq
        %v1207 = vshrl.u32 %v1206, 7
        %v1208 = vsub.s32 1, %v1207
        %v1209 = vrot.slane %v1194, %v1208
        %v1210 = vlaneseq
        %v1211 = vshrl.u32 %v1210, 7
        %v1212 = vsub.s32 2, %v1211
        %v1213 = vrot.slane %v1194, %v1212
        %v1214 = vlaneseq
        %v1215 = vshrl.u32 %v1214, 7
        %v1216 = vsub.s32 3, %v1215
        %v1217 = vrot.slane %v1194, %v1216
        %v1218 = vlaneseq
        %v1219 = vshrl.u32 %v1218, 7
        %v1220 = vsub.s32 4, %v1219
        %v1221 = vrot.slane %v1194, %v1220
        %v1222 = vlaneseq
        %v1223 = vshrl.u32 %v1222, 7
        %v1224 = vsub.s32 5, %v1223
        %v1225 = vrot.slane %v1194, %v1224
        %v1226 = vlaneseq
        %v1227 = vshrl.u32 %v1226, 7
        %v1228 = vsub.s32 6, %v1227
        %v1229 = vrot.slane %v1194, %v1228
        %v1230 = vlaneseq
        %v1231 = vshrl.u32 %v1230, 7
        %v1232 = vsub.s32 7, %v1231
        %v1233 = vrot.slane %v1194, %v1232
        %v1234 = vlaneseq
        %v1235 = vshrl.u32 %v1234, 7
        %v1236 = vsub.s32 0, %v1235
        %v1237 = vrot.slane %v1195, %v1236
        %v1238 = vlaneseq
        %v1239 = vshrl.u32 %v1238, 7
        %v1240 = vsub.s32 1, %v1239
        %v1241 = vrot.slane %v1195, %v1240
        %v1242 = vlaneseq
        %v1243 = vshrl.u32 %v1242, 7
        %v1244 = vsub.s32 2, %v1243
        %v1245 = vrot.slane %v1195, %v1244
        %v1246 = vlaneseq
        %v1247 = vshrl.u32 %v1246, 7
        %v1248 = vsub.s32 3, %v1247
        %v1249 = vrot.slane %v1195, %v1248
        %v1250 = vlaneseq
        %v1251 = vshrl.u32 %v1250, 7
        %v1252 = vsub.s32 4, %v1251
        %v1253 = vrot.slane %v1195, %v1252
        %v1254 = vlaneseq
        %v1255 = vshrl.u32 %v1254, 7
        %v1256 = vsub.s32 5, %v1255
        %v1257 = vrot.slane %v1195, %v1256
        %v1258 = vlaneseq
        %v1259 = vshrl.u32 %v1258, 7
        %v1260 = vsub.s32 6, %v1259
        %v1261 = vrot.slane %v1195, %v1260
        %v1262 = vlaneseq
        %v1263 = vshrl.u32 %v1262, 7
        %v1264 = vsub.s32 7, %v1263
        %v1265 = vrot.slane %v1195, %v1264
        %v1266 = vlaneseq
        %v1267 = vshrl.u32 %v1266, 7
        %v1268 = vsub.s32 0, %v1267
        %v1269 = vrot.slane %v1196, %v1268
        %v1270 = vlaneseq
        %v1271 = vshrl.u32 %v1270, 7
        %v1272 = vsub.s32 1, %v1271
        %v1273 = vrot.slane %v1196, %v1272
        %v1274 = vlaneseq
        %v1275 = vshrl.u32 %v1274, 7
        %v1276 = vsub.s32 2, %v1275
        %v1277 = vrot.slane %v1196, %v1276
        %v1278 = vlaneseq
        %v1279 = vshrl.u32 %v1278, 7
        %v1280 = vsub.s32 3, %v1279
        %v1281 = vrot.slane %v1196, %v1280
        %v1282 = vlaneseq
        %v1283 = vshrl.u32 %v1282, 7
        %v1284 = vsub.s32 4, %v1283
        %v1285 = vrot.slane %v1196, %v1284
        %v1286 = vlaneseq
        %v1287 = vshrl.u32 %v1286, 7
        %v1288 = vsub.s32 5, %v1287
        %v1289 = vrot.slane %v1196, %v1288
        %v1290 = vlaneseq
        %v1291 = vshrl.u32 %v1290, 7
        %v1292 = vsub.s32 6, %v1291
        %v1293 = vrot.slane %v1196, %v1292
        %v1294 = vlaneseq
        %v1295 = vshrl.u32 %v1294, 7
        %v1296 = vsub.s32 7, %v1295
        %v1297 = vrot.slane %v1196, %v1296
        %v1298 = vlaneseq
        %v1299 = vshrl.u32 %v1298, 7
        %v1300 = vsub.s32 0, %v1299
        %v1301 = vrot.slane %v1197, %v1300
        %v1302 = vlaneseq
        %v1303 = vshrl.u32 %v1302, 7
        %v1304 = vsub.s32 1, %v1303
        %v1305 = vrot.slane %v1197, %v1304
        %v1306 = vlaneseq
        %v1307 = vshrl.u32 %v1306, 7
        %v1308 = vsub.s32 2, %v1307
        %v1309 = vrot.slane %v1197, %v1308
        %v1310 = vlaneseq
        %v1311 = vshrl.u32 %v1310, 7
        %v1312 = vsub.s32 3, %v1311
        %v1313 = vrot.slane %v1197, %v1312
        %v1314 = vlaneseq
        %v1315 = vshrl.u32 %v1314, 7
        %v1316 = vsub.s32 4, %v1315
        %v1317 = vrot.slane %v1197, %v1316
        %v1318 = vlaneseq
        %v1319 = vshrl.u32 %v1318, 7
        %v1320 = vsub.s32 5, %v1319
        %v1321 = vrot.slane %v1197, %v1320
        %v1322 = vlaneseq
        %v1323 = vshrl.u32 %v1322, 7
        %v1324 = vsub.s32 6, %v1323
        %v1325 = vrot.slane %v1197, %v1324
        %v1326 = vlaneseq
        %v1327 = vshrl.u32 %v1326, 7
        %v1328 = vsub.s32 7, %v1327
        %v1329 = vrot.slane %v1197, %v1328
        %v1370 = vunpack.c.l.b16 %v930
        %v1371 = vunpack.c.l.b16 %v931
        %v1372 = vunpack.c.l.b16 %v932
        %v1373 = vunpack.c.l.b16 %v933
        %v1374 = vunpack.c.l.b16 %v934
        %v1375 = vunpack.c.l.b16 %v935
        %v1376 = vunpack.c.l.b16 %v936
        %v1377 = vunpack.c.l.b16 %v937
        %vm1378 = vcmask 1041409
        %v1379 = vsel %vm1378, %v1371, %v1370
        %vm1380 = vcmask 1042434
        %v1381 = vsel %vm1380, %v1372, %v1379
        %vm1382 = vcmask 1043459
        %v1383 = vsel %vm1382, %v1373, %v1381
        %vm1384 = vcmask 1044484
        %v1385 = vsel %vm1384, %v1374, %v1383
        %vm1386 = vcmask 1045509
        %v1387 = vsel %vm1386, %v1375, %v1385
        %vm1388 = vcmask 1046534
        %v1389 = vsel %vm1388, %v1376, %v1387
        %vm1390 = vcmask 1047559
        %v1391 = vsel %vm1390, %v1377, %v1389
        %v1392 = vpack.c.b16 %v1391, %v1391
        %v1650 = vunpack.c.l.b16 %v938
        %v1651 = vunpack.c.h.b16 %v938
        %v1652 = vunpack.c.l.b16 %v939
        %v1653 = vunpack.c.h.b16 %v939
        %v1654 = vunpack.c.l.b16 %v940
        %v1655 = vunpack.c.h.b16 %v940
        %v1656 = vunpack.c.l.b16 %v941
        %v1657 = vunpack.c.h.b16 %v941
        %v1658 = vunpack.c.l.b16 %v942
        %v1659 = vunpack.c.h.b16 %v942
        %v1660 = vunpack.c.l.b16 %v943
        %v1661 = vunpack.c.h.b16 %v943
        %v1662 = vunpack.c.l.b16 %v944
        %v1663 = vunpack.c.h.b16 %v944
        %v1664 = vunpack.c.l.b16 %v945
        %v1665 = vunpack.c.h.b16 %v945
        %v1666 = vunpack.c.l.b16 %v946
        %v1667 = vunpack.c.h.b16 %v946
        %v1668 = vunpack.c.l.b16 %v947
        %v1669 = vunpack.c.h.b16 %v947
        %v1670 = vunpack.c.l.b16 %v948
        %v1671 = vunpack.c.h.b16 %v948
        %v1672 = vunpack.c.l.b16 %v949
        %v1673 = vunpack.c.h.b16 %v949
        %v1674 = vunpack.c.l.b16 %v950
        %v1675 = vunpack.c.h.b16 %v950
        %v1676 = vunpack.c.l.b16 %v951
        %v1677 = vunpack.c.h.b16 %v951
        %v1678 = vunpack.c.l.b16 %v952
        %v1679 = vunpack.c.h.b16 %v952
        %v1680 = vunpack.c.l.b16 %v953
        %v1681 = vunpack.c.h.b16 %v953
        %v1682 = vunpack.c.l.b16 %v954
        %v1683 = vunpack.c.h.b16 %v954
        %v1684 = vunpack.c.l.b16 %v955
        %v1685 = vunpack.c.h.b16 %v955
        %v1686 = vunpack.c.l.b16 %v956
        %v1687 = vunpack.c.h.b16 %v956
        %v1688 = vunpack.c.l.b16 %v957
        %v1689 = vunpack.c.h.b16 %v957
        %v1690 = vunpack.c.l.b16 %v958
        %v1691 = vunpack.c.h.b16 %v958
        %v1692 = vunpack.c.l.b16 %v959
        %v1693 = vunpack.c.h.b16 %v959
        %v1694 = vunpack.c.l.b16 %v960
        %v1695 = vunpack.c.h.b16 %v960
        %v1696 = vunpack.c.l.b16 %v961
        %v1697 = vunpack.c.h.b16 %v961
        %v1698 = vunpack.c.l.b16 %v962
        %v1699 = vunpack.c.h.b16 %v962
        %v1700 = vunpack.c.l.b16 %v963
        %v1701 = vunpack.c.h.b16 %v963
        %v1702 = vunpack.c.l.b16 %v964
        %v1703 = vunpack.c.h.b16 %v964
        %v1704 = vunpack.c.l.b16 %v965
        %v1705 = vunpack.c.h.b16 %v965
        %v1706 = vunpack.c.l.b16 %v966
        %v1707 = vunpack.c.h.b16 %v966
        %v1708 = vunpack.c.l.b16 %v967
        %v1709 = vunpack.c.h.b16 %v967
        %v1710 = vunpack.c.l.b16 %v968
        %v1711 = vunpack.c.h.b16 %v968
        %v1712 = vunpack.c.l.b16 %v969
        %v1713 = vunpack.c.h.b16 %v969
        %v1714 = vunpack.c.l.b16 %v970
        %v1715 = vunpack.c.h.b16 %v970
        %v1716 = vunpack.c.l.b16 %v971
        %v1717 = vunpack.c.h.b16 %v971
        %v1718 = vunpack.c.l.b16 %v972
        %v1719 = vunpack.c.h.b16 %v972
        %v1720 = vunpack.c.l.b16 %v973
        %v1721 = vunpack.c.h.b16 %v973
        %v1722 = vunpack.c.l.b16 %v974
        %v1723 = vunpack.c.h.b16 %v974
        %v1724 = vunpack.c.l.b16 %v975
        %v1725 = vunpack.c.h.b16 %v975
        %v1726 = vunpack.c.l.b16 %v976
        %v1727 = vunpack.c.h.b16 %v976
        %v1728 = vunpack.c.l.b16 %v977
        %v1729 = vunpack.c.h.b16 %v977
        %v1730 = vunpack.c.l.b16 %v978
        %v1731 = vunpack.c.h.b16 %v978
        %v1732 = vunpack.c.l.b16 %v979
        %v1733 = vunpack.c.h.b16 %v979
        %v1734 = vunpack.c.l.b16 %v980
        %v1735 = vunpack.c.h.b16 %v980
        %v1736 = vunpack.c.l.b16 %v981
        %v1737 = vunpack.c.h.b16 %v981
        %v1738 = vunpack.c.l.b16 %v982
        %v1739 = vunpack.c.h.b16 %v982
        %v1740 = vunpack.c.l.b16 %v983
        %v1741 = vunpack.c.h.b16 %v983
        %v1742 = vunpack.c.l.b16 %v984
        %v1743 = vunpack.c.h.b16 %v984
        %v1744 = vunpack.c.l.b16 %v985
        %v1745 = vunpack.c.h.b16 %v985
        %v1746 = vunpack.c.l.b16 %v986
        %v1747 = vunpack.c.h.b16 %v986
        %v1748 = vunpack.c.l.b16 %v987
        %v1749 = vunpack.c.h.b16 %v987
        %v1750 = vunpack.c.l.b16 %v988
        %v1751 = vunpack.c.h.b16 %v988
        %v1752 = vunpack.c.l.b16 %v989
        %v1753 = vunpack.c.h.b16 %v989
        %v1754 = vunpack.c.l.b16 %v990
        %v1755 = vunpack.c.h.b16 %v990
        %v1756 = vunpack.c.l.b16 %v991
        %v1757 = vunpack.c.h.b16 %v991
        %v1758 = vunpack.c.l.b16 %v992
        %v1759 = vunpack.c.h.b16 %v992
        %v1760 = vunpack.c.l.b16 %v993
        %v1761 = vunpack.c.h.b16 %v993
        %v1762 = vunpack.c.l.b16 %v994
        %v1763 = vunpack.c.h.b16 %v994
        %v1764 = vunpack.c.l.b16 %v995
        %v1765 = vunpack.c.h.b16 %v995
        %v1766 = vunpack.c.l.b16 %v996
        %v1767 = vunpack.c.h.b16 %v996
        %v1768 = vunpack.c.l.b16 %v997
        %v1769 = vunpack.c.h.b16 %v997
        %v1770 = vunpack.c.l.b16 %v998
        %v1771 = vunpack.c.h.b16 %v998
        %v1772 = vunpack.c.l.b16 %v999
        %v1773 = vunpack.c.h.b16 %v999
        %v1774 = vunpack.c.l.b16 %v1000
        %v1775 = vunpack.c.h.b16 %v1000
        %v1776 = vunpack.c.l.b16 %v1001
        %v1777 = vunpack.c.h.b16 %v1001
        %v1778 = vunpack.c.l.b16 %v1002
        %v1779 = vunpack.c.h.b16 %v1002
        %v1780 = vunpack.c.l.b16 %v1003
        %v1781 = vunpack.c.h.b16 %v1003
        %v1782 = vunpack.c.l.b16 %v1004
        %v1783 = vunpack.c.h.b16 %v1004
        %v1784 = vunpack.c.l.b16 %v1005
        %v1785 = vunpack.c.h.b16 %v1005
        %v1786 = vunpack.c.l.b16 %v1006
        %v1787 = vunpack.c.h.b16 %v1006
        %v1788 = vunpack.c.l.b16 %v1007
        %v1789 = vunpack.c.h.b16 %v1007
        %v1790 = vunpack.c.l.b16 %v1008
        %v1791 = vunpack.c.h.b16 %v1008
        %v1792 = vunpack.c.l.b16 %v1009
        %v1793 = vunpack.c.h.b16 %v1009
        %v1794 = vunpack.c.l.b16 %v1010
        %v1795 = vunpack.c.h.b16 %v1010
        %v1796 = vunpack.c.l.b16 %v1011
        %v1797 = vunpack.c.h.b16 %v1011
        %v1798 = vunpack.c.l.b16 %v1012
        %v1799 = vunpack.c.h.b16 %v1012
        %v1800 = vunpack.c.l.b16 %v1013
        %v1801 = vunpack.c.h.b16 %v1013
        %v1802 = vunpack.c.l.b16 %v1014
        %v1803 = vunpack.c.h.b16 %v1014
        %v1804 = vunpack.c.l.b16 %v1015
        %v1805 = vunpack.c.h.b16 %v1015
        %v1806 = vunpack.c.l.b16 %v1016
        %v1807 = vunpack.c.h.b16 %v1016
        %v1808 = vunpack.c.l.b16 %v1017
        %v1809 = vunpack.c.h.b16 %v1017
        %v1810 = vunpack.c.l.b16 %v1018
        %v1811 = vunpack.c.h.b16 %v1018
        %v1812 = vunpack.c.l.b16 %v1019
        %v1813 = vunpack.c.h.b16 %v1019
        %v1814 = vunpack.c.l.b16 %v1020
        %v1815 = vunpack.c.h.b16 %v1020
        %v1816 = vunpack.c.l.b16 %v1021
        %v1817 = vunpack.c.h.b16 %v1021
        %v1818 = vunpack.c.l.b16 %v1022
        %v1819 = vunpack.c.h.b16 %v1022
        %v1820 = vunpack.c.l.b16 %v1023
        %v1821 = vunpack.c.h.b16 %v1023
        %v1822 = vunpack.c.l.b16 %v1024
        %v1823 = vunpack.c.h.b16 %v1024
        %v1824 = vunpack.c.l.b16 %v1025
        %v1825 = vunpack.c.h.b16 %v1025
        %v1826 = vunpack.c.l.b16 %v1026
        %v1827 = vunpack.c.h.b16 %v1026
        %v1828 = vunpack.c.l.b16 %v1027
        %v1829 = vunpack.c.h.b16 %v1027
        %v1830 = vunpack.c.l.b16 %v1028
        %v1831 = vunpack.c.h.b16 %v1028
        %v1832 = vunpack.c.l.b16 %v1029
        %v1833 = vunpack.c.h.b16 %v1029
        %v1834 = vunpack.c.l.b16 %v1030
        %v1835 = vunpack.c.h.b16 %v1030
        %v1836 = vunpack.c.l.b16 %v1031
        %v1837 = vunpack.c.h.b16 %v1031
        %v1838 = vunpack.c.l.b16 %v1032
        %v1839 = vunpack.c.h.b16 %v1032
        %v1840 = vunpack.c.l.b16 %v1033
        %v1841 = vunpack.c.h.b16 %v1033
        %v1842 = vunpack.c.l.b16 %v1034
        %v1843 = vunpack.c.h.b16 %v1034
        %v1844 = vunpack.c.l.b16 %v1035
        %v1845 = vunpack.c.h.b16 %v1035
        %v1846 = vunpack.c.l.b16 %v1036
        %v1847 = vunpack.c.h.b16 %v1036
        %v1848 = vunpack.c.l.b16 %v1037
        %v1849 = vunpack.c.h.b16 %v1037
        %v1850 = vunpack.c.l.b16 %v1038
        %v1851 = vunpack.c.h.b16 %v1038
        %v1852 = vunpack.c.l.b16 %v1039
        %v1853 = vunpack.c.h.b16 %v1039
        %v1854 = vunpack.c.l.b16 %v1040
        %v1855 = vunpack.c.h.b16 %v1040
        %v1856 = vunpack.c.l.b16 %v1041
        %v1857 = vunpack.c.h.b16 %v1041
        %v1858 = vunpack.c.l.b16 %v1042
        %v1859 = vunpack.c.h.b16 %v1042
        %v1860 = vunpack.c.l.b16 %v1043
        %v1861 = vunpack.c.h.b16 %v1043
        %v1862 = vunpack.c.l.b16 %v1044
        %v1863 = vunpack.c.h.b16 %v1044
        %v1864 = vunpack.c.l.b16 %v1045
        %v1865 = vunpack.c.h.b16 %v1045
        %v1866 = vunpack.c.l.b16 %v1046
        %v1867 = vunpack.c.h.b16 %v1046
        %v1868 = vunpack.c.l.b16 %v1047
        %v1869 = vunpack.c.h.b16 %v1047
        %v1870 = vunpack.c.l.b16 %v1048
        %v1871 = vunpack.c.h.b16 %v1048
        %v1872 = vunpack.c.l.b16 %v1049
        %v1873 = vunpack.c.h.b16 %v1049
        %v1874 = vunpack.c.l.b16 %v1050
        %v1875 = vunpack.c.h.b16 %v1050
        %v1876 = vunpack.c.l.b16 %v1051
        %v1877 = vunpack.c.h.b16 %v1051
        %v1878 = vunpack.c.l.b16 %v1052
        %v1879 = vunpack.c.h.b16 %v1052
        %v1880 = vunpack.c.l.b16 %v1053
        %v1881 = vunpack.c.h.b16 %v1053
        %v1882 = vunpack.c.l.b16 %v1054
        %v1883 = vunpack.c.h.b16 %v1054
        %v1884 = vunpack.c.l.b16 %v1055
        %v1885 = vunpack.c.h.b16 %v1055
        %v1886 = vunpack.c.l.b16 %v1056
        %v1887 = vunpack.c.h.b16 %v1056
        %v1888 = vunpack.c.l.b16 %v1057
        %v1889 = vunpack.c.h.b16 %v1057
        %v1890 = vunpack.c.l.b16 %v1058
        %v1891 = vunpack.c.h.b16 %v1058
        %v1892 = vunpack.c.l.b16 %v1059
        %v1893 = vunpack.c.h.b16 %v1059
        %v1894 = vunpack.c.l.b16 %v1060
        %v1895 = vunpack.c.h.b16 %v1060
        %v1896 = vunpack.c.l.b16 %v1061
        %v1897 = vunpack.c.h.b16 %v1061
        %v1898 = vunpack.c.l.b16 %v1062
        %v1899 = vunpack.c.h.b16 %v1062
        %v1900 = vunpack.c.l.b16 %v1063
        %v1901 = vunpack.c.h.b16 %v1063
        %v1902 = vunpack.c.l.b16 %v1064
        %v1903 = vunpack.c.h.b16 %v1064
        %v1904 = vunpack.c.l.b16 %v1065
        %v1905 = vunpack.c.h.b16 %v1065
        %v1906 = vunpack.c.l.b16 %v1066
        %v1907 = vunpack.c.h.b16 %v1066
        %v1908 = vunpack.c.l.b16 %v1067
        %v1909 = vunpack.c.h.b16 %v1067
        %v1910 = vunpack.c.l.b16 %v1068
        %v1911 = vunpack.c.h.b16 %v1068
        %v1912 = vunpack.c.l.b16 %v1069
        %v1913 = vunpack.c.h.b16 %v1069
        %v1914 = vunpack.c.l.b16 %v1070
        %v1915 = vunpack.c.h.b16 %v1070
        %v1916 = vunpack.c.l.b16 %v1071
        %v1917 = vunpack.c.h.b16 %v1071
        %v1918 = vunpack.c.l.b16 %v1072
        %v1919 = vunpack.c.h.b16 %v1072
        %v1920 = vunpack.c.l.b16 %v1073
        %v1921 = vunpack.c.h.b16 %v1073
        %v1922 = vunpack.c.l.b16 %v1074
        %v1923 = vunpack.c.h.b16 %v1074
        %v1924 = vunpack.c.l.b16 %v1075
        %v1925 = vunpack.c.h.b16 %v1075
        %v1926 = vunpack.c.l.b16 %v1076
        %v1927 = vunpack.c.h.b16 %v1076
        %v1928 = vunpack.c.l.b16 %v1077
        %v1929 = vunpack.c.h.b16 %v1077
        %v1930 = vunpack.c.l.b16 %v1078
        %v1931 = vunpack.c.h.b16 %v1078
        %v1932 = vunpack.c.l.b16 %v1079
        %v1933 = vunpack.c.h.b16 %v1079
        %v1934 = vunpack.c.l.b16 %v1080
        %v1935 = vunpack.c.h.b16 %v1080
        %v1936 = vunpack.c.l.b16 %v1081
        %v1937 = vunpack.c.h.b16 %v1081
        %v1938 = vunpack.c.l.b16 %v1082
        %v1939 = vunpack.c.h.b16 %v1082
        %v1940 = vunpack.c.l.b16 %v1083
        %v1941 = vunpack.c.h.b16 %v1083
        %v1942 = vunpack.c.l.b16 %v1084
        %v1943 = vunpack.c.h.b16 %v1084
        %v1944 = vunpack.c.l.b16 %v1085
        %v1945 = vunpack.c.h.b16 %v1085
        %v1946 = vunpack.c.l.b16 %v1086
        %v1947 = vunpack.c.h.b16 %v1086
        %v1948 = vunpack.c.l.b16 %v1087
        %v1949 = vunpack.c.h.b16 %v1087
        %v1950 = vunpack.c.l.b16 %v1088
        %v1951 = vunpack.c.h.b16 %v1088
        %v1952 = vunpack.c.l.b16 %v1089
        %v1953 = vunpack.c.h.b16 %v1089
        %v1954 = vunpack.c.l.b16 %v1090
        %v1955 = vunpack.c.h.b16 %v1090
        %v1956 = vunpack.c.l.b16 %v1091
        %v1957 = vunpack.c.h.b16 %v1091
        %v1958 = vunpack.c.l.b16 %v1092
        %v1959 = vunpack.c.h.b16 %v1092
        %v1960 = vunpack.c.l.b16 %v1093
        %v1961 = vunpack.c.h.b16 %v1093
        %v1962 = vunpack.c.l.b16 %v1094
        %v1963 = vunpack.c.h.b16 %v1094
        %v1964 = vunpack.c.l.b16 %v1095
        %v1965 = vunpack.c.h.b16 %v1095
        %v1966 = vunpack.c.l.b16 %v1096
        %v1967 = vunpack.c.h.b16 %v1096
        %v1968 = vunpack.c.l.b16 %v1097
        %v1969 = vunpack.c.h.b16 %v1097
        %v1970 = vunpack.c.l.b16 %v1098
        %v1971 = vunpack.c.h.b16 %v1098
        %v1972 = vunpack.c.l.b16 %v1099
        %v1973 = vunpack.c.h.b16 %v1099
        %v1974 = vunpack.c.l.b16 %v1100
        %v1975 = vunpack.c.h.b16 %v1100
        %v1976 = vunpack.c.l.b16 %v1101
        %v1977 = vunpack.c.h.b16 %v1101
        %v1978 = vunpack.c.l.b16 %v1102
        %v1979 = vunpack.c.h.b16 %v1102
        %v1980 = vunpack.c.l.b16 %v1103
        %v1981 = vunpack.c.h.b16 %v1103
        %v1982 = vunpack.c.l.b16 %v1104
        %v1983 = vunpack.c.h.b16 %v1104
        %v1984 = vunpack.c.l.b16 %v1105
        %v1985 = vunpack.c.h.b16 %v1105
        %v1986 = vunpack.c.l.b16 %v1106
        %v1987 = vunpack.c.h.b16 %v1106
        %v1988 = vunpack.c.l.b16 %v1107
        %v1989 = vunpack.c.h.b16 %v1107
        %v1990 = vunpack.c.l.b16 %v1108
        %v1991 = vunpack.c.h.b16 %v1108
        %v1992 = vunpack.c.l.b16 %v1109
        %v1993 = vunpack.c.h.b16 %v1109
        %v1994 = vunpack.c.l.b16 %v1110
        %v1995 = vunpack.c.h.b16 %v1110
        %v1996 = vunpack.c.l.b16 %v1111
        %v1997 = vunpack.c.h.b16 %v1111
        %v1998 = vunpack.c.l.b16 %v1112
        %v1999 = vunpack.c.h.b16 %v1112
        %v2000 = vunpack.c.l.b16 %v1113
        %v2001 = vunpack.c.h.b16 %v1113
        %v2002 = vunpack.c.l.b16 %v1114
        %v2003 = vunpack.c.h.b16 %v1114
        %v2004 = vunpack.c.l.b16 %v1115
        %v2005 = vunpack.c.h.b16 %v1115
        %v2006 = vunpack.c.l.b16 %v1116
        %v2007 = vunpack.c.h.b16 %v1116
        %v2008 = vunpack.c.l.b16 %v1117
        %v2009 = vunpack.c.h.b16 %v1117
        %v2010 = vunpack.c.l.b16 %v1118
        %v2011 = vunpack.c.h.b16 %v1118
        %v2012 = vunpack.c.l.b16 %v1119
        %v2013 = vunpack.c.h.b16 %v1119
        %v2014 = vunpack.c.l.b16 %v1120
        %v2015 = vunpack.c.h.b16 %v1120
        %v2016 = vunpack.c.l.b16 %v1121
        %v2017 = vunpack.c.h.b16 %v1121
        %v2018 = vunpack.c.l.b16 %v1122
        %v2019 = vunpack.c.h.b16 %v1122
        %v2020 = vunpack.c.l.b16 %v1123
        %v2021 = vunpack.c.h.b16 %v1123
        %v2022 = vunpack.c.l.b16 %v1124
        %v2023 = vunpack.c.h.b16 %v1124
        %v2024 = vunpack.c.l.b16 %v1125
        %v2025 = vunpack.c.h.b16 %v1125
        %v2026 = vunpack.c.l.b16 %v1126
        %v2027 = vunpack.c.h.b16 %v1126
        %v2028 = vunpack.c.l.b16 %v1127
        %v2029 = vunpack.c.h.b16 %v1127
        %v2030 = vunpack.c.l.b16 %v1128
        %v2031 = vunpack.c.h.b16 %v1128
        %v2032 = vunpack.c.l.b16 %v1129
        %v2033 = vunpack.c.h.b16 %v1129
        %v2034 = vunpack.c.l.b16 %v1130
        %v2035 = vunpack.c.h.b16 %v1130
        %v2036 = vunpack.c.l.b16 %v1131
        %v2037 = vunpack.c.h.b16 %v1131
        %v2038 = vunpack.c.l.b16 %v1132
        %v2039 = vunpack.c.h.b16 %v1132
        %v2040 = vunpack.c.l.b16 %v1133
        %v2041 = vunpack.c.h.b16 %v1133
        %v2042 = vunpack.c.l.b16 %v1134
        %v2043 = vunpack.c.h.b16 %v1134
        %v2044 = vunpack.c.l.b16 %v1135
        %v2045 = vunpack.c.h.b16 %v1135
        %v2046 = vunpack.c.l.b16 %v1136
        %v2047 = vunpack.c.h.b16 %v1136
        %v2048 = vunpack.c.l.b16 %v1137
        %v2049 = vunpack.c.h.b16 %v1137
        %v2050 = vunpack.c.l.b16 %v1138
        %v2051 = vunpack.c.h.b16 %v1138
        %v2052 = vunpack.c.l.b16 %v1139
        %v2053 = vunpack.c.h.b16 %v1139
        %v2054 = vunpack.c.l.b16 %v1140
        %v2055 = vunpack.c.h.b16 %v1140
        %v2056 = vunpack.c.l.b16 %v1141
        %v2057 = vunpack.c.h.b16 %v1141
        %v2058 = vunpack.c.l.b16 %v1142
        %v2059 = vunpack.c.h.b16 %v1142
        %v2060 = vunpack.c.l.b16 %v1143
        %v2061 = vunpack.c.h.b16 %v1143
        %v2062 = vunpack.c.l.b16 %v1144
        %v2063 = vunpack.c.h.b16 %v1144
        %v2064 = vunpack.c.l.b16 %v1145
        %v2065 = vunpack.c.h.b16 %v1145
        %v2066 = vunpack.c.l.b16 %v1146
        %v2067 = vunpack.c.h.b16 %v1146
        %v2068 = vunpack.c.l.b16 %v1147
        %v2069 = vunpack.c.h.b16 %v1147
        %v2070 = vunpack.c.l.b16 %v1148
        %v2071 = vunpack.c.h.b16 %v1148
        %v2072 = vunpack.c.l.b16 %v1149
        %v2073 = vunpack.c.h.b16 %v1149
        %v2074 = vunpack.c.l.b16 %v1150
        %v2075 = vunpack.c.h.b16 %v1150
        %v2076 = vunpack.c.l.b16 %v1151
        %v2077 = vunpack.c.h.b16 %v1151
        %v2078 = vunpack.c.l.b16 %v1152
        %v2079 = vunpack.c.h.b16 %v1152
        %v2080 = vunpack.c.l.b16 %v1153
        %v2081 = vunpack.c.h.b16 %v1153
        %v2082 = vunpack.c.l.b16 %v1154
        %v2083 = vunpack.c.h.b16 %v1154
        %v2084 = vunpack.c.l.b16 %v1155
        %v2085 = vunpack.c.h.b16 %v1155
        %v2086 = vunpack.c.l.b16 %v1156
        %v2087 = vunpack.c.h.b16 %v1156
        %v2088 = vunpack.c.l.b16 %v1157
        %v2089 = vunpack.c.h.b16 %v1157
        %v2090 = vunpack.c.l.b16 %v1158
        %v2091 = vunpack.c.h.b16 %v1158
        %v2092 = vunpack.c.l.b16 %v1159
        %v2093 = vunpack.c.h.b16 %v1159
        %v2094 = vunpack.c.l.b16 %v1160
        %v2095 = vunpack.c.h.b16 %v1160
        %v2096 = vunpack.c.l.b16 %v1161
        %v2097 = vunpack.c.h.b16 %v1161
        %v2098 = vunpack.c.l.b16 %v1162
        %v2099 = vunpack.c.h.b16 %v1162
        %v2100 = vunpack.c.l.b16 %v1163
        %v2101 = vunpack.c.h.b16 %v1163
        %v2102 = vunpack.c.l.b16 %v1164
        %v2103 = vunpack.c.h.b16 %v1164
        %v2104 = vunpack.c.l.b16 %v1165
        %v2105 = vunpack.c.h.b16 %v1165
        %v2106 = vunpack.c.l.b16 %v1166
        %v2107 = vunpack.c.h.b16 %v1166
        %v2108 = vunpack.c.l.b16 %v1167
        %v2109 = vunpack.c.h.b16 %v1167
        %v2110 = vunpack.c.l.b16 %v1168
        %v2111 = vunpack.c.h.b16 %v1168
        %v2112 = vunpack.c.l.b16 %v1169
        %v2113 = vunpack.c.h.b16 %v1169
        %v2114 = vunpack.c.l.b16 %v1170
        %v2115 = vunpack.c.h.b16 %v1170
        %v2116 = vunpack.c.l.b16 %v1171
        %v2117 = vunpack.c.h.b16 %v1171
        %v2118 = vunpack.c.l.b16 %v1172
        %v2119 = vunpack.c.h.b16 %v1172
        %v2120 = vunpack.c.l.b16 %v1173
        %v2121 = vunpack.c.h.b16 %v1173
        %v2122 = vunpack.c.l.b16 %v1174
        %v2123 = vunpack.c.h.b16 %v1174
        %v2124 = vunpack.c.l.b16 %v1175
        %v2125 = vunpack.c.h.b16 %v1175
        %v2126 = vunpack.c.l.b16 %v1176
        %v2127 = vunpack.c.h.b16 %v1176
        %v2128 = vunpack.c.l.b16 %v1177
        %v2129 = vunpack.c.h.b16 %v1177
        %v2130 = vunpack.c.l.b16 %v1178
        %v2131 = vunpack.c.h.b16 %v1178
        %v2132 = vunpack.c.l.b16 %v1179
        %v2133 = vunpack.c.h.b16 %v1179
        %v2134 = vunpack.c.l.b16 %v1180
        %v2135 = vunpack.c.h.b16 %v1180
        %v2136 = vunpack.c.l.b16 %v1181
        %v2137 = vunpack.c.h.b16 %v1181
        %v2138 = vunpack.c.l.b16 %v1182
        %v2139 = vunpack.c.h.b16 %v1182
        %v2140 = vunpack.c.l.b16 %v1183
        %v2141 = vunpack.c.h.b16 %v1183
        %v2142 = vunpack.c.l.b16 %v1184
        %v2143 = vunpack.c.h.b16 %v1184
        %v2144 = vunpack.c.l.b16 %v1185
        %v2145 = vunpack.c.h.b16 %v1185
        %v2146 = vunpack.c.l.b16 %v1186
        %v2147 = vunpack.c.h.b16 %v1186
        %v2148 = vunpack.c.l.b16 %v1187
        %v2149 = vunpack.c.h.b16 %v1187
        %v2150 = vunpack.c.l.b16 %v1188
        %v2151 = vunpack.c.h.b16 %v1188
        %v2152 = vunpack.c.l.b16 %v1189
        %v2153 = vunpack.c.h.b16 %v1189
        %v2154 = vunpack.c.l.b16 %v1190
        %v2155 = vunpack.c.h.b16 %v1190
        %v2156 = vunpack.c.l.b16 %v1191
        %v2157 = vunpack.c.h.b16 %v1191
        %v2158 = vunpack.c.l.b16 %v1192
        %v2159 = vunpack.c.h.b16 %v1192
        %v2160 = vunpack.c.l.b16 %v1193
        %v2161 = vunpack.c.h.b16 %v1193
        %v2162 = vpack.c.b16 %v1682, %v1650
        %v2163 = vpack.c.b16 %v1683, %v1651
        %v2164 = vpack.c.b16 %v1684, %v1652
        %v2165 = vpack.c.b16 %v1685, %v1653
        %v2166 = vpack.c.b16 %v1686, %v1654
        %v2167 = vpack.c.b16 %v1687, %v1655
        %v2168 = vpack.c.b16 %v1688, %v1656
        %v2169 = vpack.c.b16 %v1689, %v1657
        %v2170 = vpack.c.b16 %v1690, %v1658
        %v2171 = vpack.c.b16 %v1691, %v1659
        %v2172 = vpack.c.b16 %v1692, %v1660
        %v2173 = vpack.c.b16 %v1693, %v1661
        %v2174 = vpack.c.b16 %v1694, %v1662
        %v2175 = vpack.c.b16 %v1695, %v1663
        %v2176 = vpack.c.b16 %v1696, %v1664
        %v2177 = vpack.c.b16 %v1697, %v1665
        %v2178 = vpack.c.b16 %v1698, %v1666
        %v2179 = vpack.c.b16 %v1699, %v1667
        %v2180 = vpack.c.b16 %v1700, %v1668
        %v2181 = vpack.c.b16 %v1701, %v1669
        %v2182 = vpack.c.b16 %v1702, %v1670
        %v2183 = vpack.c.b16 %v1703, %v1671
        %v2184 = vpack.c.b16 %v1704, %v1672
        %v2185 = vpack.c.b16 %v1705, %v1673
        %v2186 = vpack.c.b16 %v1706, %v1674
        %v2187 = vpack.c.b16 %v1707, %v1675
        %v2188 = vpack.c.b16 %v1708, %v1676
        %v2189 = vpack.c.b16 %v1709, %v1677
        %v2190 = vpack.c.b16 %v1710, %v1678
        %v2191 = vpack.c.b16 %v1711, %v1679
        %v2192 = vpack.c.b16 %v1712, %v1680
        %v2193 = vpack.c.b16 %v1713, %v1681
        %v2194 = vpack.c.b16 %v1746, %v1714
        %v2195 = vpack.c.b16 %v1747, %v1715
        %v2196 = vpack.c.b16 %v1748, %v1716
        %v2197 = vpack.c.b16 %v1749, %v1717
        %v2198 = vpack.c.b16 %v1750, %v1718
        %v2199 = vpack.c.b16 %v1751, %v1719
        %v2200 = vpack.c.b16 %v1752, %v1720
        %v2201 = vpack.c.b16 %v1753, %v1721
        %v2202 = vpack.c.b16 %v1754, %v1722
        %v2203 = vpack.c.b16 %v1755, %v1723
        %v2204 = vpack.c.b16 %v1756, %v1724
        %v2205 = vpack.c.b16 %v1757, %v1725
        %v2206 = vpack.c.b16 %v1758, %v1726
        %v2207 = vpack.c.b16 %v1759, %v1727
        %v2208 = vpack.c.b16 %v1760, %v1728
        %v2209 = vpack.c.b16 %v1761, %v1729
        %v2210 = vpack.c.b16 %v1762, %v1730
        %v2211 = vpack.c.b16 %v1763, %v1731
        %v2212 = vpack.c.b16 %v1764, %v1732
        %v2213 = vpack.c.b16 %v1765, %v1733
        %v2214 = vpack.c.b16 %v1766, %v1734
        %v2215 = vpack.c.b16 %v1767, %v1735
        %v2216 = vpack.c.b16 %v1768, %v1736
        %v2217 = vpack.c.b16 %v1769, %v1737
        %v2218 = vpack.c.b16 %v1770, %v1738
        %v2219 = vpack.c.b16 %v1771, %v1739
        %v2220 = vpack.c.b16 %v1772, %v1740
        %v2221 = vpack.c.b16 %v1773, %v1741
        %v2222 = vpack.c.b16 %v1774, %v1742
        %v2223 = vpack.c.b16 %v1775, %v1743
        %v2224 = vpack.c.b16 %v1776, %v1744
        %v2225 = vpack.c.b16 %v1777, %v1745
        %v2226 = vpack.c.b16 %v1810, %v1778
        %v2227 = vpack.c.b16 %v1811, %v1779
        %v2228 = vpack.c.b16 %v1812, %v1780
        %v2229 = vpack.c.b16 %v1813, %v1781
        %v2230 = vpack.c.b16 %v1814, %v1782
        %v2231 = vpack.c.b16 %v1815, %v1783
        %v2232 = vpack.c.b16 %v1816, %v1784
        %v2233 = vpack.c.b16 %v1817, %v1785
        %v2234 = vpack.c.b16 %v1818, %v1786
        %v2235 = vpack.c.b16 %v1819, %v1787
        %v2236 = vpack.c.b16 %v1820, %v1788
        %v2237 = vpack.c.b16 %v1821, %v1789
        %v2238 = vpack.c.b16 %v1822, %v1790
        %v2239 = vpack.c.b16 %v1823, %v1791
        %v2240 = vpack.c.b16 %v1824, %v1792
        %v2241 = vpack.c.b16 %v1825, %v1793
        %v2242 = vpack.c.b16 %v1826, %v1794
        %v2243 = vpack.c.b16 %v1827, %v1795
        %v2244 = vpack.c.b16 %v1828, %v1796
        %v2245 = vpack.c.b16 %v1829, %v1797
        %v2246 = vpack.c.b16 %v1830, %v1798
        %v2247 = vpack.c.b16 %v1831, %v1799
        %v2248 = vpack.c.b16 %v1832, %v1800
        %v2249 = vpack.c.b16 %v1833, %v1801
        %v2250 = vpack.c.b16 %v1834, %v1802
        %v2251 = vpack.c.b16 %v1835, %v1803
        %v2252 = vpack.c.b16 %v1836, %v1804
        %v2253 = vpack.c.b16 %v1837, %v1805
        %v2254 = vpack.c.b16 %v1838, %v1806
        %v2255 = vpack.c.b16 %v1839, %v1807
        %v2256 = vpack.c.b16 %v1840, %v1808
        %v2257 = vpack.c.b16 %v1841, %v1809
        %v2258 = vpack.c.b16 %v1874, %v1842
        %v2259 = vpack.c.b16 %v1875, %v1843
        %v2260 = vpack.c.b16 %v1876, %v1844
        %v2261 = vpack.c.b16 %v1877, %v1845
        %v2262 = vpack.c.b16 %v1878, %v1846
        %v2263 = vpack.c.b16 %v1879, %v1847
        %v2264 = vpack.c.b16 %v1880, %v1848
        %v2265 = vpack.c.b16 %v1881, %v1849
        %v2266 = vpack.c.b16 %v1882, %v1850
        %v2267 = vpack.c.b16 %v1883, %v1851
        %v2268 = vpack.c.b16 %v1884, %v1852
        %v2269 = vpack.c.b16 %v1885, %v1853
        %v2270 = vpack.c.b16 %v1886, %v1854
        %v2271 = vpack.c.b16 %v1887, %v1855
        %v2272 = vpack.c.b16 %v1888, %v1856
        %v2273 = vpack.c.b16 %v1889, %v1857
        %v2274 = vpack.c.b16 %v1890, %v1858
        %v2275 = vpack.c.b16 %v1891, %v1859
        %v2276 = vpack.c.b16 %v1892, %v1860
        %v2277 = vpack.c.b16 %v1893, %v1861
        %v2278 = vpack.c.b16 %v1894, %v1862
        %v2279 = vpack.c.b16 %v1895, %v1863
        %v2280 = vpack.c.b16 %v1896, %v1864
        %v2281 = vpack.c.b16 %v1897, %v1865
        %v2282 = vpack.c.b16 %v1898, %v1866
        %v2283 = vpack.c.b16 %v1899, %v1867
        %v2284 = vpack.c.b16 %v1900, %v1868
        %v2285 = vpack.c.b16 %v1901, %v1869
        %v2286 = vpack.c.b16 %v1902, %v1870
        %v2287 = vpack.c.b16 %v1903, %v1871
        %v2288 = vpack.c.b16 %v1904, %v1872
        %v2289 = vpack.c.b16 %v1905, %v1873
        %v2290 = vpack.c.b16 %v1938, %v1906
        %v2291 = vpack.c.b16 %v1939, %v1907
        %v2292 = vpack.c.b16 %v1940, %v1908
        %v2293 = vpack.c.b16 %v1941, %v1909
        %v2294 = vpack.c.b16 %v1942, %v1910
        %v2295 = vpack.c.b16 %v1943, %v1911
        %v2296 = vpack.c.b16 %v1944, %v1912
        %v2297 = vpack.c.b16 %v1945, %v1913
        %v2298 = vpack.c.b16 %v1946, %v1914
        %v2299 = vpack.c.b16 %v1947, %v1915
        %v2300 = vpack.c.b16 %v1948, %v1916
        %v2301 = vpack.c.b16 %v1949, %v1917
        %v2302 = vpack.c.b16 %v1950, %v1918
        %v2303 = vpack.c.b16 %v1951, %v1919
        %v2304 = vpack.c.b16 %v1952, %v1920
        %v2305 = vpack.c.b16 %v1953, %v1921
        %v2306 = vpack.c.b16 %v1954, %v1922
        %v2307 = vpack.c.b16 %v1955, %v1923
        %v2308 = vpack.c.b16 %v1956, %v1924
        %v2309 = vpack.c.b16 %v1957, %v1925
        %v2310 = vpack.c.b16 %v1958, %v1926
        %v2311 = vpack.c.b16 %v1959, %v1927
        %v2312 = vpack.c.b16 %v1960, %v1928
        %v2313 = vpack.c.b16 %v1961, %v1929
        %v2314 = vpack.c.b16 %v1962, %v1930
        %v2315 = vpack.c.b16 %v1963, %v1931
        %v2316 = vpack.c.b16 %v1964, %v1932
        %v2317 = vpack.c.b16 %v1965, %v1933
        %v2318 = vpack.c.b16 %v1966, %v1934
        %v2319 = vpack.c.b16 %v1967, %v1935
        %v2320 = vpack.c.b16 %v1968, %v1936
        %v2321 = vpack.c.b16 %v1969, %v1937
        %v2322 = vpack.c.b16 %v2002, %v1970
        %v2323 = vpack.c.b16 %v2003, %v1971
        %v2324 = vpack.c.b16 %v2004, %v1972
        %v2325 = vpack.c.b16 %v2005, %v1973
        %v2326 = vpack.c.b16 %v2006, %v1974
        %v2327 = vpack.c.b16 %v2007, %v1975
        %v2328 = vpack.c.b16 %v2008, %v1976
        %v2329 = vpack.c.b16 %v2009, %v1977
        %v2330 = vpack.c.b16 %v2010, %v1978
        %v2331 = vpack.c.b16 %v2011, %v1979
        %v2332 = vpack.c.b16 %v2012, %v1980
        %v2333 = vpack.c.b16 %v2013, %v1981
        %v2334 = vpack.c.b16 %v2014, %v1982
        %v2335 = vpack.c.b16 %v2015, %v1983
        %v2336 = vpack.c.b16 %v2016, %v1984
        %v2337 = vpack.c.b16 %v2017, %v1985
        %v2338 = vpack.c.b16 %v2018, %v1986
        %v2339 = vpack.c.b16 %v2019, %v1987
        %v2340 = vpack.c.b16 %v2020, %v1988
        %v2341 = vpack.c.b16 %v2021, %v1989
        %v2342 = vpack.c.b16 %v2022, %v1990
        %v2343 = vpack.c.b16 %v2023, %v1991
        %v2344 = vpack.c.b16 %v2024, %v1992
        %v2345 = vpack.c.b16 %v2025, %v1993
        %v2346 = vpack.c.b16 %v2026, %v1994
        %v2347 = vpack.c.b16 %v2027, %v1995
        %v2348 = vpack.c.b16 %v2028, %v1996
        %v2349 = vpack.c.b16 %v2029, %v1997
        %v2350 = vpack.c.b16 %v2030, %v1998
        %v2351 = vpack.c.b16 %v2031, %v1999
        %v2352 = vpack.c.b16 %v2032, %v2000
        %v2353 = vpack.c.b16 %v2033, %v2001
        %v2354 = vpack.c.b16 %v2066, %v2034
        %v2355 = vpack.c.b16 %v2067, %v2035
        %v2356 = vpack.c.b16 %v2068, %v2036
        %v2357 = vpack.c.b16 %v2069, %v2037
        %v2358 = vpack.c.b16 %v2070, %v2038
        %v2359 = vpack.c.b16 %v2071, %v2039
        %v2360 = vpack.c.b16 %v2072, %v2040
        %v2361 = vpack.c.b16 %v2073, %v2041
        %v2362 = vpack.c.b16 %v2074, %v2042
        %v2363 = vpack.c.b16 %v2075, %v2043
        %v2364 = vpack.c.b16 %v2076, %v2044
        %v2365 = vpack.c.b16 %v2077, %v2045
        %v2366 = vpack.c.b16 %v2078, %v2046
        %v2367 = vpack.c.b16 %v2079, %v2047
        %v2368 = vpack.c.b16 %v2080, %v2048
        %v2369 = vpack.c.b16 %v2081, %v2049
        %v2370 = vpack.c.b16 %v2082, %v2050
        %v2371 = vpack.c.b16 %v2083, %v2051
        %v2372 = vpack.c.b16 %v2084, %v2052
        %v2373 = vpack.c.b16 %v2085, %v2053
        %v2374 = vpack.c.b16 %v2086, %v2054
        %v2375 = vpack.c.b16 %v2087, %v2055
        %v2376 = vpack.c.b16 %v2088, %v2056
        %v2377 = vpack.c.b16 %v2089, %v2057
        %v2378 = vpack.c.b16 %v2090, %v2058
        %v2379 = vpack.c.b16 %v2091, %v2059
        %v2380 = vpack.c.b16 %v2092, %v2060
        %v2381 = vpack.c.b16 %v2093, %v2061
        %v2382 = vpack.c.b16 %v2094, %v2062
        %v2383 = vpack.c.b16 %v2095, %v2063
        %v2384 = vpack.c.b16 %v2096, %v2064
        %v2385 = vpack.c.b16 %v2097, %v2065
        %v2386 = vpack.c.b16 %v2130, %v2098
        %v2387 = vpack.c.b16 %v2131, %v2099
        %v2388 = vpack.c.b16 %v2132, %v2100
        %v2389 = vpack.c.b16 %v2133, %v2101
        %v2390 = vpack.c.b16 %v2134, %v2102
        %v2391 = vpack.c.b16 %v2135, %v2103
        %v2392 = vpack.c.b16 %v2136, %v2104
        %v2393 = vpack.c.b16 %v2137, %v2105
        %v2394 = vpack.c.b16 %v2138, %v2106
        %v2395 = vpack.c.b16 %v2139, %v2107
        %v2396 = vpack.c.b16 %v2140, %v2108
        %v2397 = vpack.c.b16 %v2141, %v2109
        %v2398 = vpack.c.b16 %v2142, %v2110
        %v2399 = vpack.c.b16 %v2143, %v2111
        %v2400 = vpack.c.b16 %v2144, %v2112
        %v2401 = vpack.c.b16 %v2145, %v2113
        %v2402 = vpack.c.b16 %v2146, %v2114
        %v2403 = vpack.c.b16 %v2147, %v2115
        %v2404 = vpack.c.b16 %v2148, %v2116
        %v2405 = vpack.c.b16 %v2149, %v2117
        %v2406 = vpack.c.b16 %v2150, %v2118
        %v2407 = vpack.c.b16 %v2151, %v2119
        %v2408 = vpack.c.b16 %v2152, %v2120
        %v2409 = vpack.c.b16 %v2153, %v2121
        %v2410 = vpack.c.b16 %v2154, %v2122
        %v2411 = vpack.c.b16 %v2155, %v2123
        %v2412 = vpack.c.b16 %v2156, %v2124
        %v2413 = vpack.c.b16 %v2157, %v2125
        %v2414 = vpack.c.b16 %v2158, %v2126
        %v2415 = vpack.c.b16 %v2159, %v2127
        %v2416 = vpack.c.b16 %v2160, %v2128
        %v2417 = vpack.c.b16 %v2161, %v2129
        %2674 = vmatprep.subr.bf16.mxu0 %v2387
        %2675 = vmatpush1.bf16.msra.mxu0 %v2386
        %2676 = vmatprep.subr.bf16.mxu0 %v2355
        %2677 = vmatpush1.bf16.msra.mxu0 %v2354
        %2678 = vmatprep.subr.bf16.mxu0 %v2323
        %2679 = vmatpush1.bf16.msra.mxu0 %v2322
        %2680 = vmatprep.subr.bf16.mxu0 %v2291
        %2681 = vmatpush1.bf16.msra.mxu0 %v2290
        %2682 = vmatprep.subr.bf16.mxu0 %v2259
        %2683 = vmatpush1.bf16.msra.mxu0 %v2258
        %2684 = vmatprep.subr.bf16.mxu0 %v2227
        %2685 = vmatpush1.bf16.msra.mxu0 %v2226
        %2686 = vmatprep.subr.bf16.mxu0 %v2195
        %2687 = vmatpush1.bf16.msra.mxu0 %v2194
        %2688 = vmatprep.subr.bf16.mxu0 %v2163
        %2689 = vmatpush1.bf16.msra.mxu0 %v2162
        %2690 = vmatprep.subr.bf16.mxu0 0
        %2691 = vmatpush2.bf16.msra.mxu0 0
        %2692 = vmatprep.subr.bf16.mxu0 0
        %2693 = vmatpush2.bf16.msra.mxu0 0
        %2694 = vmatprep.subr.bf16.mxu0 0
        %2695 = vmatpush2.bf16.msra.mxu0 0
        %2696 = vmatprep.subr.bf16.mxu0 0
        %2697 = vmatpush2.bf16.msra.mxu0 0
        %2698 = vmatprep.subr.bf16.mxu0 0
        %2699 = vmatpush2.bf16.msra.mxu0 0
        %2700 = vmatprep.subr.bf16.mxu0 0
        %2701 = vmatpush2.bf16.msra.mxu0 0
        %2702 = vmatprep.subr.bf16.mxu0 0
        %2703 = vmatpush2.bf16.msra.mxu0 0
        %2704 = vmatprep.subr.bf16.mxu0 0
        %2705 = vmatpush2.bf16.msra.mxu0 0
        %2706 = vmatprep.mubr.bf16.mxu0 0
        %2707 = vmatmul.mubr.bf16.gmra.mxu0 %v1392
        %v2708 = vpop.f32.mrf.mxu0
        %v2709 = vadd.f32 %v1205, %v2708
        %v2710 = vpop.f32.mrf.mxu0
        %v2711 = vadd.f32 %v1209, %v2710
        %v2712 = vpop.f32.mrf.mxu0
        %v2713 = vpop.f32.mrf.mxu0
        %2714 = vdwg.mxu0
        %2715 = vmatprep.subr.bf16.mxu0 %v2389
        %2716 = vmatpush1.bf16.msra.mxu0 %v2388
        %2717 = vmatprep.subr.bf16.mxu0 %v2357
        %2718 = vmatpush1.bf16.msra.mxu0 %v2356
        %2719 = vmatprep.subr.bf16.mxu0 %v2325
        %2720 = vmatpush1.bf16.msra.mxu0 %v2324
        %2721 = vmatprep.subr.bf16.mxu0 %v2293
        %2722 = vmatpush1.bf16.msra.mxu0 %v2292
        %2723 = vmatprep.subr.bf16.mxu0 %v2261
        %2724 = vmatpush1.bf16.msra.mxu0 %v2260
        %2725 = vmatprep.subr.bf16.mxu0 %v2229
        %2726 = vmatpush1.bf16.msra.mxu0 %v2228
        %2727 = vmatprep.subr.bf16.mxu0 %v2197
        %2728 = vmatpush1.bf16.msra.mxu0 %v2196
        %2729 = vmatprep.subr.bf16.mxu0 %v2165
        %2730 = vmatpush1.bf16.msra.mxu0 %v2164
        %2731 = vmatprep.subr.bf16.mxu0 0
        %2732 = vmatpush2.bf16.msra.mxu0 0
        %2733 = vmatprep.subr.bf16.mxu0 0
        %2734 = vmatpush2.bf16.msra.mxu0 0
        %2735 = vmatprep.subr.bf16.mxu0 0
        %2736 = vmatpush2.bf16.msra.mxu0 0
        %2737 = vmatprep.subr.bf16.mxu0 0
        %2738 = vmatpush2.bf16.msra.mxu0 0
        %2739 = vmatprep.subr.bf16.mxu0 0
        %2740 = vmatpush2.bf16.msra.mxu0 0
        %2741 = vmatprep.subr.bf16.mxu0 0
        %2742 = vmatpush2.bf16.msra.mxu0 0
        %2743 = vmatprep.subr.bf16.mxu0 0
        %2744 = vmatpush2.bf16.msra.mxu0 0
        %2745 = vmatprep.subr.bf16.mxu0 0
        %2746 = vmatpush2.bf16.msra.mxu0 0
        %2747 = vmatprep.mubr.bf16.mxu0 0
        %2748 = vmatmul.mubr.bf16.gmra.mxu0 %v1392
        %v2749 = vpop.f32.mrf.mxu0
        %v2750 = vadd.f32 %v1213, %v2749
        %v2751 = vpop.f32.mrf.mxu0
        %v2752 = vadd.f32 %v1217, %v2751
        %v2753 = vpop.f32.mrf.mxu0
        %v2754 = vpop.f32.mrf.mxu0
        %2755 = vdwg.mxu0
        %2756 = vmatprep.subr.bf16.mxu0 %v2391
        %2757 = vmatpush1.bf16.msra.mxu0 %v2390
        %2758 = vmatprep.subr.bf16.mxu0 %v2359
        %2759 = vmatpush1.bf16.msra.mxu0 %v2358
        %2760 = vmatprep.subr.bf16.mxu0 %v2327
        %2761 = vmatpush1.bf16.msra.mxu0 %v2326
        %2762 = vmatprep.subr.bf16.mxu0 %v2295
        %2763 = vmatpush1.bf16.msra.mxu0 %v2294
        %2764 = vmatprep.subr.bf16.mxu0 %v2263
        %2765 = vmatpush1.bf16.msra.mxu0 %v2262
        %2766 = vmatprep.subr.bf16.mxu0 %v2231
        %2767 = vmatpush1.bf16.msra.mxu0 %v2230
        %2768 = vmatprep.subr.bf16.mxu0 %v2199
        %2769 = vmatpush1.bf16.msra.mxu0 %v2198
        %2770 = vmatprep.subr.bf16.mxu0 %v2167
        %2771 = vmatpush1.bf16.msra.mxu0 %v2166
        %2772 = vmatprep.subr.bf16.mxu0 0
        %2773 = vmatpush2.bf16.msra.mxu0 0
        %2774 = vmatprep.subr.bf16.mxu0 0
        %2775 = vmatpush2.bf16.msra.mxu0 0
        %2776 = vmatprep.subr.bf16.mxu0 0
        %2777 = vmatpush2.bf16.msra.mxu0 0
        %2778 = vmatprep.subr.bf16.mxu0 0
        %2779 = vmatpush2.bf16.msra.mxu0 0
        %2780 = vmatprep.subr.bf16.mxu0 0
        %2781 = vmatpush2.bf16.msra.mxu0 0
        %2782 = vmatprep.subr.bf16.mxu0 0
        %2783 = vmatpush2.bf16.msra.mxu0 0
        %2784 = vmatprep.subr.bf16.mxu0 0
        %2785 = vmatpush2.bf16.msra.mxu0 0
        %2786 = vmatprep.subr.bf16.mxu0 0
        %2787 = vmatpush2.bf16.msra.mxu0 0
        %2788 = vmatprep.mubr.bf16.mxu0 0
        %2789 = vmatmul.mubr.bf16.gmra.mxu0 %v1392
        %v2790 = vpop.f32.mrf.mxu0
        %v2791 = vadd.f32 %v1221, %v2790
        %v2792 = vpop.f32.mrf.mxu0
        %v2793 = vadd.f32 %v1225, %v2792
        %v2794 = vpop.f32.mrf.mxu0
        %v2795 = vpop.f32.mrf.mxu0
        %2796 = vdwg.mxu0
        %2797 = vmatprep.subr.bf16.mxu0 %v2393
        %2798 = vmatpush1.bf16.msra.mxu0 %v2392
        %2799 = vmatprep.subr.bf16.mxu0 %v2361
        %2800 = vmatpush1.bf16.msra.mxu0 %v2360
        %2801 = vmatprep.subr.bf16.mxu0 %v2329
        %2802 = vmatpush1.bf16.msra.mxu0 %v2328
        %2803 = vmatprep.subr.bf16.mxu0 %v2297
        %2804 = vmatpush1.bf16.msra.mxu0 %v2296
        %2805 = vmatprep.subr.bf16.mxu0 %v2265
        %2806 = vmatpush1.bf16.msra.mxu0 %v2264
        %2807 = vmatprep.subr.bf16.mxu0 %v2233
        %2808 = vmatpush1.bf16.msra.mxu0 %v2232
        %2809 = vmatprep.subr.bf16.mxu0 %v2201
        %2810 = vmatpush1.bf16.msra.mxu0 %v2200
        %2811 = vmatprep.subr.bf16.mxu0 %v2169
        %2812 = vmatpush1.bf16.msra.mxu0 %v2168
        %2813 = vmatprep.subr.bf16.mxu0 0
        %2814 = vmatpush2.bf16.msra.mxu0 0
        %2815 = vmatprep.subr.bf16.mxu0 0
        %2816 = vmatpush2.bf16.msra.mxu0 0
        %2817 = vmatprep.subr.bf16.mxu0 0
        %2818 = vmatpush2.bf16.msra.mxu0 0
        %2819 = vmatprep.subr.bf16.mxu0 0
        %2820 = vmatpush2.bf16.msra.mxu0 0
        %2821 = vmatprep.subr.bf16.mxu0 0
        %2822 = vmatpush2.bf16.msra.mxu0 0
        %2823 = vmatprep.subr.bf16.mxu0 0
        %2824 = vmatpush2.bf16.msra.mxu0 0
        %2825 = vmatprep.subr.bf16.mxu0 0
        %2826 = vmatpush2.bf16.msra.mxu0 0
        %2827 = vmatprep.subr.bf16.mxu0 0
        %2828 = vmatpush2.bf16.msra.mxu0 0
        %2829 = vmatprep.mubr.bf16.mxu0 0
        %2830 = vmatmul.mubr.bf16.gmra.mxu0 %v1392
        %v2831 = vpop.f32.mrf.mxu0
        %v2832 = vadd.f32 %v1229, %v2831
        %v2833 = vpop.f32.mrf.mxu0
        %v2834 = vadd.f32 %v1233, %v2833
        %v2835 = vpop.f32.mrf.mxu0
        %v2836 = vpop.f32.mrf.mxu0
        %2837 = vdwg.mxu0
        %2838 = vmatprep.subr.bf16.mxu0 %v2395
        %2839 = vmatpush1.bf16.msra.mxu0 %v2394
        %2840 = vmatprep.subr.bf16.mxu0 %v2363
        %2841 = vmatpush1.bf16.msra.mxu0 %v2362
        %2842 = vmatprep.subr.bf16.mxu0 %v2331
        %2843 = vmatpush1.bf16.msra.mxu0 %v2330
        %2844 = vmatprep.subr.bf16.mxu0 %v2299
        %2845 = vmatpush1.bf16.msra.mxu0 %v2298
        %2846 = vmatprep.subr.bf16.mxu0 %v2267
        %2847 = vmatpush1.bf16.msra.mxu0 %v2266
        %2848 = vmatprep.subr.bf16.mxu0 %v2235
        %2849 = vmatpush1.bf16.msra.mxu0 %v2234
        %2850 = vmatprep.subr.bf16.mxu0 %v2203
        %2851 = vmatpush1.bf16.msra.mxu0 %v2202
        %2852 = vmatprep.subr.bf16.mxu0 %v2171
        %2853 = vmatpush1.bf16.msra.mxu0 %v2170
        %2854 = vmatprep.subr.bf16.mxu0 0
        %2855 = vmatpush2.bf16.msra.mxu0 0
        %2856 = vmatprep.subr.bf16.mxu0 0
        %2857 = vmatpush2.bf16.msra.mxu0 0
        %2858 = vmatprep.subr.bf16.mxu0 0
        %2859 = vmatpush2.bf16.msra.mxu0 0
        %2860 = vmatprep.subr.bf16.mxu0 0
        %2861 = vmatpush2.bf16.msra.mxu0 0
        %2862 = vmatprep.subr.bf16.mxu0 0
        %2863 = vmatpush2.bf16.msra.mxu0 0
        %2864 = vmatprep.subr.bf16.mxu0 0
        %2865 = vmatpush2.bf16.msra.mxu0 0
        %2866 = vmatprep.subr.bf16.mxu0 0
        %2867 = vmatpush2.bf16.msra.mxu0 0
        %2868 = vmatprep.subr.bf16.mxu0 0
        %2869 = vmatpush2.bf16.msra.mxu0 0
        %2870 = vmatprep.mubr.bf16.mxu0 0
        %2871 = vmatmul.mubr.bf16.gmra.mxu0 %v1392
        %v2872 = vpop.f32.mrf.mxu0
        %v2873 = vadd.f32 %v1237, %v2872
        %v2874 = vpop.f32.mrf.mxu0
        %v2875 = vadd.f32 %v1241, %v2874
        %v2876 = vpop.f32.mrf.mxu0
        %v2877 = vpop.f32.mrf.mxu0
        %2878 = vdwg.mxu0
        %2879 = vmatprep.subr.bf16.mxu0 %v2397
        %2880 = vmatpush1.bf16.msra.mxu0 %v2396
        %2881 = vmatprep.subr.bf16.mxu0 %v2365
        %2882 = vmatpush1.bf16.msra.mxu0 %v2364
        %2883 = vmatprep.subr.bf16.mxu0 %v2333
        %2884 = vmatpush1.bf16.msra.mxu0 %v2332
        %2885 = vmatprep.subr.bf16.mxu0 %v2301
        %2886 = vmatpush1.bf16.msra.mxu0 %v2300
        %2887 = vmatprep.subr.bf16.mxu0 %v2269
        %2888 = vmatpush1.bf16.msra.mxu0 %v2268
        %2889 = vmatprep.subr.bf16.mxu0 %v2237
        %2890 = vmatpush1.bf16.msra.mxu0 %v2236
        %2891 = vmatprep.subr.bf16.mxu0 %v2205
        %2892 = vmatpush1.bf16.msra.mxu0 %v2204
        %2893 = vmatprep.subr.bf16.mxu0 %v2173
        %2894 = vmatpush1.bf16.msra.mxu0 %v2172
        %2895 = vmatprep.subr.bf16.mxu0 0
        %2896 = vmatpush2.bf16.msra.mxu0 0
        %2897 = vmatprep.subr.bf16.mxu0 0
        %2898 = vmatpush2.bf16.msra.mxu0 0
        %2899 = vmatprep.subr.bf16.mxu0 0
        %2900 = vmatpush2.bf16.msra.mxu0 0
        %2901 = vmatprep.subr.bf16.mxu0 0
        %2902 = vmatpush2.bf16.msra.mxu0 0
        %2903 = vmatprep.subr.bf16.mxu0 0
        %2904 = vmatpush2.bf16.msra.mxu0 0
        %2905 = vmatprep.subr.bf16.mxu0 0
        %2906 = vmatpush2.bf16.msra.mxu0 0
        %2907 = vmatprep.subr.bf16.mxu0 0
        %2908 = vmatpush2.bf16.msra.mxu0 0
        %2909 = vmatprep.subr.bf16.mxu0 0
        %2910 = vmatpush2.bf16.msra.mxu0 0
        %2911 = vmatprep.mubr.bf16.mxu0 0
        %2912 = vmatmul.mubr.bf16.gmra.mxu0 %v1392
        %v2913 = vpop.f32.mrf.mxu0
        %v2914 = vadd.f32 %v1245, %v2913
        %v2915 = vpop.f32.mrf.mxu0
        %v2916 = vadd.f32 %v1249, %v2915
        %v2917 = vpop.f32.mrf.mxu0
        %v2918 = vpop.f32.mrf.mxu0
        %2919 = vdwg.mxu0
        %2920 = vmatprep.subr.bf16.mxu0 %v2399
        %2921 = vmatpush1.bf16.msra.mxu0 %v2398
        %2922 = vmatprep.subr.bf16.mxu0 %v2367
        %2923 = vmatpush1.bf16.msra.mxu0 %v2366
        %2924 = vmatprep.subr.bf16.mxu0 %v2335
        %2925 = vmatpush1.bf16.msra.mxu0 %v2334
        %2926 = vmatprep.subr.bf16.mxu0 %v2303
        %2927 = vmatpush1.bf16.msra.mxu0 %v2302
        %2928 = vmatprep.subr.bf16.mxu0 %v2271
        %2929 = vmatpush1.bf16.msra.mxu0 %v2270
        %2930 = vmatprep.subr.bf16.mxu0 %v2239
        %2931 = vmatpush1.bf16.msra.mxu0 %v2238
        %2932 = vmatprep.subr.bf16.mxu0 %v2207
        %2933 = vmatpush1.bf16.msra.mxu0 %v2206
        %2934 = vmatprep.subr.bf16.mxu0 %v2175
        %2935 = vmatpush1.bf16.msra.mxu0 %v2174
        %2936 = vmatprep.subr.bf16.mxu0 0
        %2937 = vmatpush2.bf16.msra.mxu0 0
        %2938 = vmatprep.subr.bf16.mxu0 0
        %2939 = vmatpush2.bf16.msra.mxu0 0
        %2940 = vmatprep.subr.bf16.mxu0 0
        %2941 = vmatpush2.bf16.msra.mxu0 0
        %2942 = vmatprep.subr.bf16.mxu0 0
        %2943 = vmatpush2.bf16.msra.mxu0 0
        %2944 = vmatprep.subr.bf16.mxu0 0
        %2945 = vmatpush2.bf16.msra.mxu0 0
        %2946 = vmatprep.subr.bf16.mxu0 0
        %2947 = vmatpush2.bf16.msra.mxu0 0
        %2948 = vmatprep.subr.bf16.mxu0 0
        %2949 = vmatpush2.bf16.msra.mxu0 0
        %2950 = vmatprep.subr.bf16.mxu0 0
        %2951 = vmatpush2.bf16.msra.mxu0 0
        %2952 = vmatprep.mubr.bf16.mxu0 0
        %2953 = vmatmul.mubr.bf16.gmra.mxu0 %v1392
        %v2954 = vpop.f32.mrf.mxu0
        %v2955 = vadd.f32 %v1253, %v2954
        %v2956 = vpop.f32.mrf.mxu0
        %v2957 = vadd.f32 %v1257, %v2956
        %v2958 = vpop.f32.mrf.mxu0
        %v2959 = vpop.f32.mrf.mxu0
        %2960 = vdwg.mxu0
        %2961 = vmatprep.subr.bf16.mxu0 %v2401
        %2962 = vmatpush1.bf16.msra.mxu0 %v2400
        %2963 = vmatprep.subr.bf16.mxu0 %v2369
        %2964 = vmatpush1.bf16.msra.mxu0 %v2368
        %2965 = vmatprep.subr.bf16.mxu0 %v2337
        %2966 = vmatpush1.bf16.msra.mxu0 %v2336
        %2967 = vmatprep.subr.bf16.mxu0 %v2305
        %2968 = vmatpush1.bf16.msra.mxu0 %v2304
        %2969 = vmatprep.subr.bf16.mxu0 %v2273
        %2970 = vmatpush1.bf16.msra.mxu0 %v2272
        %2971 = vmatprep.subr.bf16.mxu0 %v2241
        %2972 = vmatpush1.bf16.msra.mxu0 %v2240
        %2973 = vmatprep.subr.bf16.mxu0 %v2209
        %2974 = vmatpush1.bf16.msra.mxu0 %v2208
        %2975 = vmatprep.subr.bf16.mxu0 %v2177
        %2976 = vmatpush1.bf16.msra.mxu0 %v2176
        %2977 = vmatprep.subr.bf16.mxu0 0
        %2978 = vmatpush2.bf16.msra.mxu0 0
        %2979 = vmatprep.subr.bf16.mxu0 0
        %2980 = vmatpush2.bf16.msra.mxu0 0
        %2981 = vmatprep.subr.bf16.mxu0 0
        %2982 = vmatpush2.bf16.msra.mxu0 0
        %2983 = vmatprep.subr.bf16.mxu0 0
        %2984 = vmatpush2.bf16.msra.mxu0 0
        %2985 = vmatprep.subr.bf16.mxu0 0
        %2986 = vmatpush2.bf16.msra.mxu0 0
        %2987 = vmatprep.subr.bf16.mxu0 0
        %2988 = vmatpush2.bf16.msra.mxu0 0
        %2989 = vmatprep.subr.bf16.mxu0 0
        %2990 = vmatpush2.bf16.msra.mxu0 0
        %2991 = vmatprep.subr.bf16.mxu0 0
        %2992 = vmatpush2.bf16.msra.mxu0 0
        %2993 = vmatprep.mubr.bf16.mxu0 0
        %2994 = vmatmul.mubr.bf16.gmra.mxu0 %v1392
        %v2995 = vpop.f32.mrf.mxu0
        %v2996 = vadd.f32 %v1261, %v2995
        %v2997 = vpop.f32.mrf.mxu0
        %v2998 = vadd.f32 %v1265, %v2997
        %v2999 = vpop.f32.mrf.mxu0
        %v3000 = vpop.f32.mrf.mxu0
        %3001 = vdwg.mxu0
        %3002 = vmatprep.subr.bf16.mxu0 %v2403
        %3003 = vmatpush1.bf16.msra.mxu0 %v2402
        %3004 = vmatprep.subr.bf16.mxu0 %v2371
        %3005 = vmatpush1.bf16.msra.mxu0 %v2370
        %3006 = vmatprep.subr.bf16.mxu0 %v2339
        %3007 = vmatpush1.bf16.msra.mxu0 %v2338
        %3008 = vmatprep.subr.bf16.mxu0 %v2307
        %3009 = vmatpush1.bf16.msra.mxu0 %v2306
        %3010 = vmatprep.subr.bf16.mxu0 %v2275
        %3011 = vmatpush1.bf16.msra.mxu0 %v2274
        %3012 = vmatprep.subr.bf16.mxu0 %v2243
        %3013 = vmatpush1.bf16.msra.mxu0 %v2242
        %3014 = vmatprep.subr.bf16.mxu0 %v2211
        %3015 = vmatpush1.bf16.msra.mxu0 %v2210
        %3016 = vmatprep.subr.bf16.mxu0 %v2179
        %3017 = vmatpush1.bf16.msra.mxu0 %v2178
        %3018 = vmatprep.subr.bf16.mxu0 0
        %3019 = vmatpush2.bf16.msra.mxu0 0
        %3020 = vmatprep.subr.bf16.mxu0 0
        %3021 = vmatpush2.bf16.msra.mxu0 0
        %3022 = vmatprep.subr.bf16.mxu0 0
        %3023 = vmatpush2.bf16.msra.mxu0 0
        %3024 = vmatprep.subr.bf16.mxu0 0
        %3025 = vmatpush2.bf16.msra.mxu0 0
        %3026 = vmatprep.subr.bf16.mxu0 0
        %3027 = vmatpush2.bf16.msra.mxu0 0
        %3028 = vmatprep.subr.bf16.mxu0 0
        %3029 = vmatpush2.bf16.msra.mxu0 0
        %3030 = vmatprep.subr.bf16.mxu0 0
        %3031 = vmatpush2.bf16.msra.mxu0 0
        %3032 = vmatprep.subr.bf16.mxu0 0
        %3033 = vmatpush2.bf16.msra.mxu0 0
        %3034 = vmatprep.mubr.bf16.mxu0 0
        %3035 = vmatmul.mubr.bf16.gmra.mxu0 %v1392
        %v3036 = vpop.f32.mrf.mxu0
        %v3037 = vadd.f32 %v1269, %v3036
        %v3038 = vpop.f32.mrf.mxu0
        %v3039 = vadd.f32 %v1273, %v3038
        %v3040 = vpop.f32.mrf.mxu0
        %v3041 = vpop.f32.mrf.mxu0
        %3042 = vdwg.mxu0
        %3043 = vmatprep.subr.bf16.mxu0 %v2405
        %3044 = vmatpush1.bf16.msra.mxu0 %v2404
        %3045 = vmatprep.subr.bf16.mxu0 %v2373
        %3046 = vmatpush1.bf16.msra.mxu0 %v2372
        %3047 = vmatprep.subr.bf16.mxu0 %v2341
        %3048 = vmatpush1.bf16.msra.mxu0 %v2340
        %3049 = vmatprep.subr.bf16.mxu0 %v2309
        %3050 = vmatpush1.bf16.msra.mxu0 %v2308
        %3051 = vmatprep.subr.bf16.mxu0 %v2277
        %3052 = vmatpush1.bf16.msra.mxu0 %v2276
        %3053 = vmatprep.subr.bf16.mxu0 %v2245
        %3054 = vmatpush1.bf16.msra.mxu0 %v2244
        %3055 = vmatprep.subr.bf16.mxu0 %v2213
        %3056 = vmatpush1.bf16.msra.mxu0 %v2212
        %3057 = vmatprep.subr.bf16.mxu0 %v2181
        %3058 = vmatpush1.bf16.msra.mxu0 %v2180
        %3059 = vmatprep.subr.bf16.mxu0 0
        %3060 = vmatpush2.bf16.msra.mxu0 0
        %3061 = vmatprep.subr.bf16.mxu0 0
        %3062 = vmatpush2.bf16.msra.mxu0 0
        %3063 = vmatprep.subr.bf16.mxu0 0
        %3064 = vmatpush2.bf16.msra.mxu0 0
        %3065 = vmatprep.subr.bf16.mxu0 0
        %3066 = vmatpush2.bf16.msra.mxu0 0
        %3067 = vmatprep.subr.bf16.mxu0 0
        %3068 = vmatpush2.bf16.msra.mxu0 0
        %3069 = vmatprep.subr.bf16.mxu0 0
        %3070 = vmatpush2.bf16.msra.mxu0 0
        %3071 = vmatprep.subr.bf16.mxu0 0
        %3072 = vmatpush2.bf16.msra.mxu0 0
        %3073 = vmatprep.subr.bf16.mxu0 0
        %3074 = vmatpush2.bf16.msra.mxu0 0
        %3075 = vmatprep.mubr.bf16.mxu0 0
        %3076 = vmatmul.mubr.bf16.gmra.mxu0 %v1392
        %v3077 = vpop.f32.mrf.mxu0
        %v3078 = vadd.f32 %v1277, %v3077
        %v3079 = vpop.f32.mrf.mxu0
        %v3080 = vadd.f32 %v1281, %v3079
        %v3081 = vpop.f32.mrf.mxu0
        %v3082 = vpop.f32.mrf.mxu0
        %3083 = vdwg.mxu0
        %3084 = vmatprep.subr.bf16.mxu0 %v2407
        %3085 = vmatpush1.bf16.msra.mxu0 %v2406
        %3086 = vmatprep.subr.bf16.mxu0 %v2375
        %3087 = vmatpush1.bf16.msra.mxu0 %v2374
        %3088 = vmatprep.subr.bf16.mxu0 %v2343
        %3089 = vmatpush1.bf16.msra.mxu0 %v2342
        %3090 = vmatprep.subr.bf16.mxu0 %v2311
        %3091 = vmatpush1.bf16.msra.mxu0 %v2310
        %3092 = vmatprep.subr.bf16.mxu0 %v2279
        %3093 = vmatpush1.bf16.msra.mxu0 %v2278
        %3094 = vmatprep.subr.bf16.mxu0 %v2247
        %3095 = vmatpush1.bf16.msra.mxu0 %v2246
        %3096 = vmatprep.subr.bf16.mxu0 %v2215
        %3097 = vmatpush1.bf16.msra.mxu0 %v2214
        %3098 = vmatprep.subr.bf16.mxu0 %v2183
        %3099 = vmatpush1.bf16.msra.mxu0 %v2182
        %3100 = vmatprep.subr.bf16.mxu0 0
        %3101 = vmatpush2.bf16.msra.mxu0 0
        %3102 = vmatprep.subr.bf16.mxu0 0
        %3103 = vmatpush2.bf16.msra.mxu0 0
        %3104 = vmatprep.subr.bf16.mxu0 0
        %3105 = vmatpush2.bf16.msra.mxu0 0
        %3106 = vmatprep.subr.bf16.mxu0 0
        %3107 = vmatpush2.bf16.msra.mxu0 0
        %3108 = vmatprep.subr.bf16.mxu0 0
        %3109 = vmatpush2.bf16.msra.mxu0 0
        %3110 = vmatprep.subr.bf16.mxu0 0
        %3111 = vmatpush2.bf16.msra.mxu0 0
        %3112 = vmatprep.subr.bf16.mxu0 0
        %3113 = vmatpush2.bf16.msra.mxu0 0
        %3114 = vmatprep.subr.bf16.mxu0 0
        %3115 = vmatpush2.bf16.msra.mxu0 0
        %3116 = vmatprep.mubr.bf16.mxu0 0
        %3117 = vmatmul.mubr.bf16.gmra.mxu0 %v1392
        %v3118 = vpop.f32.mrf.mxu0
        %v3119 = vadd.f32 %v1285, %v3118
        %v3120 = vpop.f32.mrf.mxu0
        %v3121 = vadd.f32 %v1289, %v3120
        %v3122 = vpop.f32.mrf.mxu0
        %v3123 = vpop.f32.mrf.mxu0
        %3124 = vdwg.mxu0
        %3125 = vmatprep.subr.bf16.mxu0 %v2409
        %3126 = vmatpush1.bf16.msra.mxu0 %v2408
        %3127 = vmatprep.subr.bf16.mxu0 %v2377
        %3128 = vmatpush1.bf16.msra.mxu0 %v2376
        %3129 = vmatprep.subr.bf16.mxu0 %v2345
        %3130 = vmatpush1.bf16.msra.mxu0 %v2344
        %3131 = vmatprep.subr.bf16.mxu0 %v2313
        %3132 = vmatpush1.bf16.msra.mxu0 %v2312
        %3133 = vmatprep.subr.bf16.mxu0 %v2281
        %3134 = vmatpush1.bf16.msra.mxu0 %v2280
        %3135 = vmatprep.subr.bf16.mxu0 %v2249
        %3136 = vmatpush1.bf16.msra.mxu0 %v2248
        %3137 = vmatprep.subr.bf16.mxu0 %v2217
        %3138 = vmatpush1.bf16.msra.mxu0 %v2216
        %3139 = vmatprep.subr.bf16.mxu0 %v2185
        %3140 = vmatpush1.bf16.msra.mxu0 %v2184
        %3141 = vmatprep.subr.bf16.mxu0 0
        %3142 = vmatpush2.bf16.msra.mxu0 0
        %3143 = vmatprep.subr.bf16.mxu0 0
        %3144 = vmatpush2.bf16.msra.mxu0 0
        %3145 = vmatprep.subr.bf16.mxu0 0
        %3146 = vmatpush2.bf16.msra.mxu0 0
        %3147 = vmatprep.subr.bf16.mxu0 0
        %3148 = vmatpush2.bf16.msra.mxu0 0
        %3149 = vmatprep.subr.bf16.mxu0 0
        %3150 = vmatpush2.bf16.msra.mxu0 0
        %3151 = vmatprep.subr.bf16.mxu0 0
        %3152 = vmatpush2.bf16.msra.mxu0 0
        %3153 = vmatprep.subr.bf16.mxu0 0
        %3154 = vmatpush2.bf16.msra.mxu0 0
        %3155 = vmatprep.subr.bf16.mxu0 0
        %3156 = vmatpush2.bf16.msra.mxu0 0
        %3157 = vmatprep.mubr.bf16.mxu0 0
        %3158 = vmatmul.mubr.bf16.gmra.mxu0 %v1392
        %v3159 = vpop.f32.mrf.mxu0
        %v3160 = vadd.f32 %v1293, %v3159
        %v3161 = vpop.f32.mrf.mxu0
        %v3162 = vadd.f32 %v1297, %v3161
        %v3163 = vpop.f32.mrf.mxu0
        %v3164 = vpop.f32.mrf.mxu0
        %3165 = vdwg.mxu0
        %3166 = vmatprep.subr.bf16.mxu0 %v2411
        %3167 = vmatpush1.bf16.msra.mxu0 %v2410
        %3168 = vmatprep.subr.bf16.mxu0 %v2379
        %3169 = vmatpush1.bf16.msra.mxu0 %v2378
        %3170 = vmatprep.subr.bf16.mxu0 %v2347
        %3171 = vmatpush1.bf16.msra.mxu0 %v2346
        %3172 = vmatprep.subr.bf16.mxu0 %v2315
        %3173 = vmatpush1.bf16.msra.mxu0 %v2314
        %3174 = vmatprep.subr.bf16.mxu0 %v2283
        %3175 = vmatpush1.bf16.msra.mxu0 %v2282
        %3176 = vmatprep.subr.bf16.mxu0 %v2251
        %3177 = vmatpush1.bf16.msra.mxu0 %v2250
        %3178 = vmatprep.subr.bf16.mxu0 %v2219
        %3179 = vmatpush1.bf16.msra.mxu0 %v2218
        %3180 = vmatprep.subr.bf16.mxu0 %v2187
        %3181 = vmatpush1.bf16.msra.mxu0 %v2186
        %3182 = vmatprep.subr.bf16.mxu0 0
        %3183 = vmatpush2.bf16.msra.mxu0 0
        %3184 = vmatprep.subr.bf16.mxu0 0
        %3185 = vmatpush2.bf16.msra.mxu0 0
        %3186 = vmatprep.subr.bf16.mxu0 0
        %3187 = vmatpush2.bf16.msra.mxu0 0
        %3188 = vmatprep.subr.bf16.mxu0 0
        %3189 = vmatpush2.bf16.msra.mxu0 0
        %3190 = vmatprep.subr.bf16.mxu0 0
        %3191 = vmatpush2.bf16.msra.mxu0 0
        %3192 = vmatprep.subr.bf16.mxu0 0
        %3193 = vmatpush2.bf16.msra.mxu0 0
        %3194 = vmatprep.subr.bf16.mxu0 0
        %3195 = vmatpush2.bf16.msra.mxu0 0
        %3196 = vmatprep.subr.bf16.mxu0 0
        %3197 = vmatpush2.bf16.msra.mxu0 0
        %3198 = vmatprep.mubr.bf16.mxu0 0
        %3199 = vmatmul.mubr.bf16.gmra.mxu0 %v1392
        %v3200 = vpop.f32.mrf.mxu0
        %v3201 = vadd.f32 %v1301, %v3200
        %v3202 = vpop.f32.mrf.mxu0
        %v3203 = vadd.f32 %v1305, %v3202
        %v3204 = vpop.f32.mrf.mxu0
        %v3205 = vpop.f32.mrf.mxu0
        %3206 = vdwg.mxu0
        %3207 = vmatprep.subr.bf16.mxu0 %v2413
        %3208 = vmatpush1.bf16.msra.mxu0 %v2412
        %3209 = vmatprep.subr.bf16.mxu0 %v2381
        %3210 = vmatpush1.bf16.msra.mxu0 %v2380
        %3211 = vmatprep.subr.bf16.mxu0 %v2349
        %3212 = vmatpush1.bf16.msra.mxu0 %v2348
        %3213 = vmatprep.subr.bf16.mxu0 %v2317
        %3214 = vmatpush1.bf16.msra.mxu0 %v2316
        %3215 = vmatprep.subr.bf16.mxu0 %v2285
        %3216 = vmatpush1.bf16.msra.mxu0 %v2284
        %3217 = vmatprep.subr.bf16.mxu0 %v2253
        %3218 = vmatpush1.bf16.msra.mxu0 %v2252
        %3219 = vmatprep.subr.bf16.mxu0 %v2221
        %3220 = vmatpush1.bf16.msra.mxu0 %v2220
        %3221 = vmatprep.subr.bf16.mxu0 %v2189
        %3222 = vmatpush1.bf16.msra.mxu0 %v2188
        %3223 = vmatprep.subr.bf16.mxu0 0
        %3224 = vmatpush2.bf16.msra.mxu0 0
        %3225 = vmatprep.subr.bf16.mxu0 0
        %3226 = vmatpush2.bf16.msra.mxu0 0
        %3227 = vmatprep.subr.bf16.mxu0 0
        %3228 = vmatpush2.bf16.msra.mxu0 0
        %3229 = vmatprep.subr.bf16.mxu0 0
        %3230 = vmatpush2.bf16.msra.mxu0 0
        %3231 = vmatprep.subr.bf16.mxu0 0
        %3232 = vmatpush2.bf16.msra.mxu0 0
        %3233 = vmatprep.subr.bf16.mxu0 0
        %3234 = vmatpush2.bf16.msra.mxu0 0
        %3235 = vmatprep.subr.bf16.mxu0 0
        %3236 = vmatpush2.bf16.msra.mxu0 0
        %3237 = vmatprep.subr.bf16.mxu0 0
        %3238 = vmatpush2.bf16.msra.mxu0 0
        %3239 = vmatprep.mubr.bf16.mxu0 0
        %3240 = vmatmul.mubr.bf16.gmra.mxu0 %v1392
        %v3241 = vpop.f32.mrf.mxu0
        %v3242 = vadd.f32 %v1309, %v3241
        %v3243 = vpop.f32.mrf.mxu0
        %v3244 = vadd.f32 %v1313, %v3243
        %v3245 = vpop.f32.mrf.mxu0
        %v3246 = vpop.f32.mrf.mxu0
        %3247 = vdwg.mxu0
        %3248 = vmatprep.subr.bf16.mxu0 %v2415
        %3249 = vmatpush1.bf16.msra.mxu0 %v2414
        %3250 = vmatprep.subr.bf16.mxu0 %v2383
        %3251 = vmatpush1.bf16.msra.mxu0 %v2382
        %3252 = vmatprep.subr.bf16.mxu0 %v2351
        %3253 = vmatpush1.bf16.msra.mxu0 %v2350
        %3254 = vmatprep.subr.bf16.mxu0 %v2319
        %3255 = vmatpush1.bf16.msra.mxu0 %v2318
        %3256 = vmatprep.subr.bf16.mxu0 %v2287
        %3257 = vmatpush1.bf16.msra.mxu0 %v2286
        %3258 = vmatprep.subr.bf16.mxu0 %v2255
        %3259 = vmatpush1.bf16.msra.mxu0 %v2254
        %3260 = vmatprep.subr.bf16.mxu0 %v2223
        %3261 = vmatpush1.bf16.msra.mxu0 %v2222
        %3262 = vmatprep.subr.bf16.mxu0 %v2191
        %3263 = vmatpush1.bf16.msra.mxu0 %v2190
        %3264 = vmatprep.subr.bf16.mxu0 0
        %3265 = vmatpush2.bf16.msra.mxu0 0
        %3266 = vmatprep.subr.bf16.mxu0 0
        %3267 = vmatpush2.bf16.msra.mxu0 0
        %3268 = vmatprep.subr.bf16.mxu0 0
        %3269 = vmatpush2.bf16.msra.mxu0 0
        %3270 = vmatprep.subr.bf16.mxu0 0
        %3271 = vmatpush2.bf16.msra.mxu0 0
        %3272 = vmatprep.subr.bf16.mxu0 0
        %3273 = vmatpush2.bf16.msra.mxu0 0
        %3274 = vmatprep.subr.bf16.mxu0 0
        %3275 = vmatpush2.bf16.msra.mxu0 0
        %3276 = vmatprep.subr.bf16.mxu0 0
        %3277 = vmatpush2.bf16.msra.mxu0 0
        %3278 = vmatprep.subr.bf16.mxu0 0
        %3279 = vmatpush2.bf16.msra.mxu0 0
        %3280 = vmatprep.mubr.bf16.mxu0 0
        %3281 = vmatmul.mubr.bf16.gmra.mxu0 %v1392
        %v3282 = vpop.f32.mrf.mxu0
        %v3283 = vadd.f32 %v1317, %v3282
        %v3284 = vpop.f32.mrf.mxu0
        %v3285 = vadd.f32 %v1321, %v3284
        %v3286 = vpop.f32.mrf.mxu0
        %v3287 = vpop.f32.mrf.mxu0
        %3288 = vdwg.mxu0
        %3289 = vmatprep.subr.bf16.mxu0 %v2417
        %3290 = vmatpush1.bf16.msra.mxu0 %v2416
        %3291 = vmatprep.subr.bf16.mxu0 %v2385
        %3292 = vmatpush1.bf16.msra.mxu0 %v2384
        %3293 = vmatprep.subr.bf16.mxu0 %v2353
        %3294 = vmatpush1.bf16.msra.mxu0 %v2352
        %3295 = vmatprep.subr.bf16.mxu0 %v2321
        %3296 = vmatpush1.bf16.msra.mxu0 %v2320
        %3297 = vmatprep.subr.bf16.mxu0 %v2289
        %3298 = vmatpush1.bf16.msra.mxu0 %v2288
        %3299 = vmatprep.subr.bf16.mxu0 %v2257
        %3300 = vmatpush1.bf16.msra.mxu0 %v2256
        %3301 = vmatprep.subr.bf16.mxu0 %v2225
        %3302 = vmatpush1.bf16.msra.mxu0 %v2224
        %3303 = vmatprep.subr.bf16.mxu0 %v2193
        %3304 = vmatpush1.bf16.msra.mxu0 %v2192
        %3305 = vmatprep.subr.bf16.mxu0 0
        %3306 = vmatpush2.bf16.msra.mxu0 0
        %3307 = vmatprep.subr.bf16.mxu0 0
        %3308 = vmatpush2.bf16.msra.mxu0 0
        %3309 = vmatprep.subr.bf16.mxu0 0
        %3310 = vmatpush2.bf16.msra.mxu0 0
        %3311 = vmatprep.subr.bf16.mxu0 0
        %3312 = vmatpush2.bf16.msra.mxu0 0
        %3313 = vmatprep.subr.bf16.mxu0 0
        %3314 = vmatpush2.bf16.msra.mxu0 0
        %3315 = vmatprep.subr.bf16.mxu0 0
        %3316 = vmatpush2.bf16.msra.mxu0 0
        %3317 = vmatprep.subr.bf16.mxu0 0
        %3318 = vmatpush2.bf16.msra.mxu0 0
        %3319 = vmatprep.subr.bf16.mxu0 0
        %3320 = vmatpush2.bf16.msra.mxu0 0
        %3321 = vmatprep.mubr.bf16.mxu0 0
        %3322 = vmatmul.mubr.bf16.gmra.mxu0 %v1392
        %v3323 = vpop.f32.mrf.mxu0
        %v3324 = vadd.f32 %v1325, %v3323
        %v3325 = vpop.f32.mrf.mxu0
        %v3326 = vadd.f32 %v1329, %v3325
        %v3327 = vpop.f32.mrf.mxu0
        %v3328 = vpop.f32.mrf.mxu0
        %3329 = vdwg.mxu0
        %3331 = vrot.lane.b32.xlu0 %v2709, 64
        %v3332 = vpop.permute.xlu0 %3331
        %3335 = vrot.lane.b32.xlu0 %v2711, 64
        %v3336 = vpop.permute.xlu0 %3335
        %3339 = vrot.lane.b32.xlu0 %v2750, 64
        %v3340 = vpop.permute.xlu0 %3339
        %3343 = vrot.lane.b32.xlu0 %v2752, 64
        %v3344 = vpop.permute.xlu0 %3343
        %3347 = vrot.lane.b32.xlu0 %v2791, 64
        %v3348 = vpop.permute.xlu0 %3347
        %3351 = vrot.lane.b32.xlu0 %v2793, 64
        %v3352 = vpop.permute.xlu0 %3351
        %3355 = vrot.lane.b32.xlu0 %v2832, 64
        %v3356 = vpop.permute.xlu0 %3355
        %3359 = vrot.lane.b32.xlu0 %v2834, 64
        %v3360 = vpop.permute.xlu0 %3359
        %3363 = vrot.lane.b32.xlu0 %v2873, 64
        %v3364 = vpop.permute.xlu0 %3363
        %3367 = vrot.lane.b32.xlu0 %v2875, 64
        %v3368 = vpop.permute.xlu0 %3367
        %3371 = vrot.lane.b32.xlu0 %v2914, 64
        %v3372 = vpop.permute.xlu0 %3371
        %3375 = vrot.lane.b32.xlu0 %v2916, 64
        %v3376 = vpop.permute.xlu0 %3375
        %3379 = vrot.lane.b32.xlu0 %v2955, 64
        %v3380 = vpop.permute.xlu0 %3379
        %3383 = vrot.lane.b32.xlu0 %v2957, 64
        %v3384 = vpop.permute.xlu0 %3383
        %3387 = vrot.lane.b32.xlu0 %v2996, 64
        %v3388 = vpop.permute.xlu0 %3387
        %3391 = vrot.lane.b32.xlu0 %v2998, 64
        %v3392 = vpop.permute.xlu0 %3391
        %3395 = vrot.lane.b32.xlu0 %v3037, 64
        %v3396 = vpop.permute.xlu0 %3395
        %3399 = vrot.lane.b32.xlu0 %v3039, 64
        %v3400 = vpop.permute.xlu0 %3399
        %3403 = vrot.lane.b32.xlu0 %v3078, 64
        %v3404 = vpop.permute.xlu0 %3403
        %3407 = vrot.lane.b32.xlu0 %v3080, 64
        %v3408 = vpop.permute.xlu0 %3407
        %3411 = vrot.lane.b32.xlu0 %v3119, 64
        %v3412 = vpop.permute.xlu0 %3411
        %3415 = vrot.lane.b32.xlu0 %v3121, 64
        %v3416 = vpop.permute.xlu0 %3415
        %3419 = vrot.lane.b32.xlu0 %v3160, 64
        %v3420 = vpop.permute.xlu0 %3419
        %3423 = vrot.lane.b32.xlu0 %v3162, 64
        %v3424 = vpop.permute.xlu0 %3423
        %3427 = vrot.lane.b32.xlu0 %v3201, 64
        %v3428 = vpop.permute.xlu0 %3427
        %3431 = vrot.lane.b32.xlu0 %v3203, 64
        %v3432 = vpop.permute.xlu0 %3431
        %3435 = vrot.lane.b32.xlu0 %v3242, 64
        %v3436 = vpop.permute.xlu0 %3435
        %3439 = vrot.lane.b32.xlu0 %v3244, 64
        %v3440 = vpop.permute.xlu0 %3439
        %3443 = vrot.lane.b32.xlu0 %v3283, 64
        %v3444 = vpop.permute.xlu0 %3443
        %3447 = vrot.lane.b32.xlu0 %v3285, 64
        %v3448 = vpop.permute.xlu0 %3447
        %3451 = vrot.lane.b32.xlu0 %v3324, 64
        %v3452 = vpop.permute.xlu0 %3451
        %3455 = vrot.lane.b32.xlu0 %v3326, 64
        %v3456 = vpop.permute.xlu0 %3455
        %v3458 = vcombine.low %v2709, %v2711
        %v3459 = vcombine.high %v2709, %v2711
        %v3461 = vunpack.c.l.s4 1983009808
        %v3462 = vunpack.c.0.s8 %v3461
        %v3463 = vlaneseq
        %v3464 = vshrl.u32 %v3463, 7
        %v3465 = vsub.s32 %v3462, %v3464
        %v3466 = vrot.slane %v3458, %v3465
        %v3468 = vunpack.c.l.s4 1983009808
        %v3469 = vunpack.c.0.s8 %v3468
        %v3470 = vlaneseq
        %v3471 = vshrl.u32 %v3470, 7
        %v3472 = vsub.s32 %v3469, %v3471
        %v3473 = vrot.slane %v3459, %v3472
        %v3474 = vcombine.low %v3332, %v3336
        %v3475 = vcombine.high %v3332, %v3336
        %v3477 = vunpack.c.l.s4 1983009808
        %v3478 = vunpack.c.0.s8 %v3477
        %v3479 = vlaneseq
        %v3480 = vshrl.u32 %v3479, 7
        %v3481 = vsub.s32 %v3478, %v3480
        %v3482 = vrot.slane %v3474, %v3481
        %v3484 = vunpack.c.l.s4 1983009808
        %v3485 = vunpack.c.0.s8 %v3484
        %v3486 = vlaneseq
        %v3487 = vshrl.u32 %v3486, 7
        %v3488 = vsub.s32 %v3485, %v3487
        %v3489 = vrot.slane %v3475, %v3488
        %v3490 = vcombine.low %v2750, %v2752
        %v3491 = vcombine.high %v2750, %v2752
        %v3493 = vunpack.c.l.s4 1983009808
        %v3494 = vunpack.c.0.s8 %v3493
        %v3495 = vlaneseq
        %v3496 = vshrl.u32 %v3495, 7
        %v3497 = vsub.s32 %v3494, %v3496
        %v3498 = vrot.slane %v3490, %v3497
        %v3500 = vunpack.c.l.s4 1983009808
        %v3501 = vunpack.c.0.s8 %v3500
        %v3502 = vlaneseq
        %v3503 = vshrl.u32 %v3502, 7
        %v3504 = vsub.s32 %v3501, %v3503
        %v3505 = vrot.slane %v3491, %v3504
        %v3506 = vcombine.low %v3340, %v3344
        %v3507 = vcombine.high %v3340, %v3344
        %v3509 = vunpack.c.l.s4 1983009808
        %v3510 = vunpack.c.0.s8 %v3509
        %v3511 = vlaneseq
        %v3512 = vshrl.u32 %v3511, 7
        %v3513 = vsub.s32 %v3510, %v3512
        %v3514 = vrot.slane %v3506, %v3513
        %v3516 = vunpack.c.l.s4 1983009808
        %v3517 = vunpack.c.0.s8 %v3516
        %v3518 = vlaneseq
        %v3519 = vshrl.u32 %v3518, 7
        %v3520 = vsub.s32 %v3517, %v3519
        %v3521 = vrot.slane %v3507, %v3520
        %v3522 = vcombine.low %v3466, %v3482
        %v3523 = vcombine.high %v3466, %v3482
        %v3525 = vunpack.c.l.s4 1934713408
        %v3526 = vunpack.c.0.s8 %v3525
        %v3527 = vlaneseq
        %v3528 = vshrl.u32 %v3527, 7
        %v3529 = vsub.s32 %v3526, %v3528
        %v3530 = vrot.slane %v3522, %v3529
        %v3532 = vunpack.c.l.s4 1934713408
        %v3533 = vunpack.c.0.s8 %v3532
        %v3534 = vlaneseq
        %v3535 = vshrl.u32 %v3534, 7
        %v3536 = vsub.s32 %v3533, %v3535
        %v3537 = vrot.slane %v3523, %v3536
        %v3538 = vcombine.low %v3473, %v3489
        %v3539 = vcombine.high %v3473, %v3489
        %v3541 = vunpack.c.l.s4 1934713408
        %v3542 = vunpack.c.0.s8 %v3541
        %v3543 = vlaneseq
        %v3544 = vshrl.u32 %v3543, 7
        %v3545 = vsub.s32 %v3542, %v3544
        %v3546 = vrot.slane %v3538, %v3545
        %v3548 = vunpack.c.l.s4 1934713408
        %v3549 = vunpack.c.0.s8 %v3548
        %v3550 = vlaneseq
        %v3551 = vshrl.u32 %v3550, 7
        %v3552 = vsub.s32 %v3549, %v3551
        %v3553 = vrot.slane %v3539, %v3552
        %v3554 = vcombine.low %v3498, %v3514
        %v3555 = vcombine.high %v3498, %v3514
        %v3557 = vunpack.c.l.s4 1934713408
        %v3558 = vunpack.c.0.s8 %v3557
        %v3559 = vlaneseq
        %v3560 = vshrl.u32 %v3559, 7
        %v3561 = vsub.s32 %v3558, %v3560
        %v3562 = vrot.slane %v3554, %v3561
        %v3564 = vunpack.c.l.s4 1934713408
        %v3565 = vunpack.c.0.s8 %v3564
        %v3566 = vlaneseq
        %v3567 = vshrl.u32 %v3566, 7
        %v3568 = vsub.s32 %v3565, %v3567
        %v3569 = vrot.slane %v3555, %v3568
        %v3570 = vcombine.low %v3505, %v3521
        %v3571 = vcombine.high %v3505, %v3521
        %v3573 = vunpack.c.l.s4 1934713408
        %v3574 = vunpack.c.0.s8 %v3573
        %v3575 = vlaneseq
        %v3576 = vshrl.u32 %v3575, 7
        %v3577 = vsub.s32 %v3574, %v3576
        %v3578 = vrot.slane %v3570, %v3577
        %v3580 = vunpack.c.l.s4 1934713408
        %v3581 = vunpack.c.0.s8 %v3580
        %v3582 = vlaneseq
        %v3583 = vshrl.u32 %v3582, 7
        %v3584 = vsub.s32 %v3581, %v3583
        %v3585 = vrot.slane %v3571, %v3584
        %v3586 = vcombine.low %v3530, %v3562
        %v3587 = vcombine.high %v3530, %v3562
        %v3588 = vcombine.low %v3537, %v3569
        %v3589 = vcombine.high %v3537, %v3569
        %v3590 = vcombine.low %v3546, %v3578
        %v3591 = vcombine.high %v3546, %v3578
        %v3592 = vcombine.low %v3553, %v3585
        %v3593 = vcombine.high %v3553, %v3585
        %v3594 = vcombine.low %v2791, %v2793
        %v3595 = vcombine.high %v2791, %v2793
        %v3597 = vunpack.c.l.s4 1983009808
        %v3598 = vunpack.c.0.s8 %v3597
        %v3599 = vlaneseq
        %v3600 = vshrl.u32 %v3599, 7
        %v3601 = vsub.s32 %v3598, %v3600
        %v3602 = vrot.slane %v3594, %v3601
        %v3604 = vunpack.c.l.s4 1983009808
        %v3605 = vunpack.c.0.s8 %v3604
        %v3606 = vlaneseq
        %v3607 = vshrl.u32 %v3606, 7
        %v3608 = vsub.s32 %v3605, %v3607
        %v3609 = vrot.slane %v3595, %v3608
        %v3610 = vcombine.low %v3348, %v3352
        %v3611 = vcombine.high %v3348, %v3352
        %v3613 = vunpack.c.l.s4 1983009808
        %v3614 = vunpack.c.0.s8 %v3613
        %v3615 = vlaneseq
        %v3616 = vshrl.u32 %v3615, 7
        %v3617 = vsub.s32 %v3614, %v3616
        %v3618 = vrot.slane %v3610, %v3617
        %v3620 = vunpack.c.l.s4 1983009808
        %v3621 = vunpack.c.0.s8 %v3620
        %v3622 = vlaneseq
        %v3623 = vshrl.u32 %v3622, 7
        %v3624 = vsub.s32 %v3621, %v3623
        %v3625 = vrot.slane %v3611, %v3624
        %v3626 = vcombine.low %v2832, %v2834
        %v3627 = vcombine.high %v2832, %v2834
        %v3629 = vunpack.c.l.s4 1983009808
        %v3630 = vunpack.c.0.s8 %v3629
        %v3631 = vlaneseq
        %v3632 = vshrl.u32 %v3631, 7
        %v3633 = vsub.s32 %v3630, %v3632
        %v3634 = vrot.slane %v3626, %v3633
        %v3636 = vunpack.c.l.s4 1983009808
        %v3637 = vunpack.c.0.s8 %v3636
        %v3638 = vlaneseq
        %v3639 = vshrl.u32 %v3638, 7
        %v3640 = vsub.s32 %v3637, %v3639
        %v3641 = vrot.slane %v3627, %v3640
        %v3642 = vcombine.low %v3356, %v3360
        %v3643 = vcombine.high %v3356, %v3360
        %v3645 = vunpack.c.l.s4 1983009808
        %v3646 = vunpack.c.0.s8 %v3645
        %v3647 = vlaneseq
        %v3648 = vshrl.u32 %v3647, 7
        %v3649 = vsub.s32 %v3646, %v3648
        %v3650 = vrot.slane %v3642, %v3649
        %v3652 = vunpack.c.l.s4 1983009808
        %v3653 = vunpack.c.0.s8 %v3652
        %v3654 = vlaneseq
        %v3655 = vshrl.u32 %v3654, 7
        %v3656 = vsub.s32 %v3653, %v3655
        %v3657 = vrot.slane %v3643, %v3656
        %v3658 = vcombine.low %v3602, %v3618
        %v3659 = vcombine.high %v3602, %v3618
        %v3661 = vunpack.c.l.s4 1934713408
        %v3662 = vunpack.c.0.s8 %v3661
        %v3663 = vlaneseq
        %v3664 = vshrl.u32 %v3663, 7
        %v3665 = vsub.s32 %v3662, %v3664
        %v3666 = vrot.slane %v3658, %v3665
        %v3668 = vunpack.c.l.s4 1934713408
        %v3669 = vunpack.c.0.s8 %v3668
        %v3670 = vlaneseq
        %v3671 = vshrl.u32 %v3670, 7
        %v3672 = vsub.s32 %v3669, %v3671
        %v3673 = vrot.slane %v3659, %v3672
        %v3674 = vcombine.low %v3609, %v3625
        %v3675 = vcombine.high %v3609, %v3625
        %v3677 = vunpack.c.l.s4 1934713408
        %v3678 = vunpack.c.0.s8 %v3677
        %v3679 = vlaneseq
        %v3680 = vshrl.u32 %v3679, 7
        %v3681 = vsub.s32 %v3678, %v3680
        %v3682 = vrot.slane %v3674, %v3681
        %v3684 = vunpack.c.l.s4 1934713408
        %v3685 = vunpack.c.0.s8 %v3684
        %v3686 = vlaneseq
        %v3687 = vshrl.u32 %v3686, 7
        %v3688 = vsub.s32 %v3685, %v3687
        %v3689 = vrot.slane %v3675, %v3688
        %v3690 = vcombine.low %v3634, %v3650
        %v3691 = vcombine.high %v3634, %v3650
        %v3693 = vunpack.c.l.s4 1934713408
        %v3694 = vunpack.c.0.s8 %v3693
        %v3695 = vlaneseq
        %v3696 = vshrl.u32 %v3695, 7
        %v3697 = vsub.s32 %v3694, %v3696
        %v3698 = vrot.slane %v3690, %v3697
        %v3700 = vunpack.c.l.s4 1934713408
        %v3701 = vunpack.c.0.s8 %v3700
        %v3702 = vlaneseq
        %v3703 = vshrl.u32 %v3702, 7
        %v3704 = vsub.s32 %v3701, %v3703
        %v3705 = vrot.slane %v3691, %v3704
        %v3706 = vcombine.low %v3641, %v3657
        %v3707 = vcombine.high %v3641, %v3657
        %v3709 = vunpack.c.l.s4 1934713408
        %v3710 = vunpack.c.0.s8 %v3709
        %v3711 = vlaneseq
        %v3712 = vshrl.u32 %v3711, 7
        %v3713 = vsub.s32 %v3710, %v3712
        %v3714 = vrot.slane %v3706, %v3713
        %v3716 = vunpack.c.l.s4 1934713408
        %v3717 = vunpack.c.0.s8 %v3716
        %v3718 = vlaneseq
        %v3719 = vshrl.u32 %v3718, 7
        %v3720 = vsub.s32 %v3717, %v3719
        %v3721 = vrot.slane %v3707, %v3720
        %v3722 = vcombine.low %v3666, %v3698
        %v3723 = vcombine.high %v3666, %v3698
        %v3724 = vcombine.low %v3673, %v3705
        %v3725 = vcombine.high %v3673, %v3705
        %v3726 = vcombine.low %v3682, %v3714
        %v3727 = vcombine.high %v3682, %v3714
        %v3728 = vcombine.low %v3689, %v3721
        %v3729 = vcombine.high %v3689, %v3721
        %v3730 = vcombine.low %v2873, %v2875
        %v3731 = vcombine.high %v2873, %v2875
        %v3733 = vunpack.c.l.s4 1983009808
        %v3734 = vunpack.c.0.s8 %v3733
        %v3735 = vlaneseq
        %v3736 = vshrl.u32 %v3735, 7
        %v3737 = vsub.s32 %v3734, %v3736
        %v3738 = vrot.slane %v3730, %v3737
        %v3740 = vunpack.c.l.s4 1983009808
        %v3741 = vunpack.c.0.s8 %v3740
        %v3742 = vlaneseq
        %v3743 = vshrl.u32 %v3742, 7
        %v3744 = vsub.s32 %v3741, %v3743
        %v3745 = vrot.slane %v3731, %v3744
        %v3746 = vcombine.low %v3364, %v3368
        %v3747 = vcombine.high %v3364, %v3368
        %v3749 = vunpack.c.l.s4 1983009808
        %v3750 = vunpack.c.0.s8 %v3749
        %v3751 = vlaneseq
        %v3752 = vshrl.u32 %v3751, 7
        %v3753 = vsub.s32 %v3750, %v3752
        %v3754 = vrot.slane %v3746, %v3753
        %v3756 = vunpack.c.l.s4 1983009808
        %v3757 = vunpack.c.0.s8 %v3756
        %v3758 = vlaneseq
        %v3759 = vshrl.u32 %v3758, 7
        %v3760 = vsub.s32 %v3757, %v3759
        %v3761 = vrot.slane %v3747, %v3760
        %v3762 = vcombine.low %v2914, %v2916
        %v3763 = vcombine.high %v2914, %v2916
        %v3765 = vunpack.c.l.s4 1983009808
        %v3766 = vunpack.c.0.s8 %v3765
        %v3767 = vlaneseq
        %v3768 = vshrl.u32 %v3767, 7
        %v3769 = vsub.s32 %v3766, %v3768
        %v3770 = vrot.slane %v3762, %v3769
        %v3772 = vunpack.c.l.s4 1983009808
        %v3773 = vunpack.c.0.s8 %v3772
        %v3774 = vlaneseq
        %v3775 = vshrl.u32 %v3774, 7
        %v3776 = vsub.s32 %v3773, %v3775
        %v3777 = vrot.slane %v3763, %v3776
        %v3778 = vcombine.low %v3372, %v3376
        %v3779 = vcombine.high %v3372, %v3376
        %v3781 = vunpack.c.l.s4 1983009808
        %v3782 = vunpack.c.0.s8 %v3781
        %v3783 = vlaneseq
        %v3784 = vshrl.u32 %v3783, 7
        %v3785 = vsub.s32 %v3782, %v3784
        %v3786 = vrot.slane %v3778, %v3785
        %v3788 = vunpack.c.l.s4 1983009808
        %v3789 = vunpack.c.0.s8 %v3788
        %v3790 = vlaneseq
        %v3791 = vshrl.u32 %v3790, 7
        %v3792 = vsub.s32 %v3789, %v3791
        %v3793 = vrot.slane %v3779, %v3792
        %v3794 = vcombine.low %v3738, %v3754
        %v3795 = vcombine.high %v3738, %v3754
        %v3797 = vunpack.c.l.s4 1934713408
        %v3798 = vunpack.c.0.s8 %v3797
        %v3799 = vlaneseq
        %v3800 = vshrl.u32 %v3799, 7
        %v3801 = vsub.s32 %v3798, %v3800
        %v3802 = vrot.slane %v3794, %v3801
        %v3804 = vunpack.c.l.s4 1934713408
        %v3805 = vunpack.c.0.s8 %v3804
        %v3806 = vlaneseq
        %v3807 = vshrl.u32 %v3806, 7
        %v3808 = vsub.s32 %v3805, %v3807
        %v3809 = vrot.slane %v3795, %v3808
        %v3810 = vcombine.low %v3745, %v3761
        %v3811 = vcombine.high %v3745, %v3761
        %v3813 = vunpack.c.l.s4 1934713408
        %v3814 = vunpack.c.0.s8 %v3813
        %v3815 = vlaneseq
        %v3816 = vshrl.u32 %v3815, 7
        %v3817 = vsub.s32 %v3814, %v3816
        %v3818 = vrot.slane %v3810, %v3817
        %v3820 = vunpack.c.l.s4 1934713408
        %v3821 = vunpack.c.0.s8 %v3820
        %v3822 = vlaneseq
        %v3823 = vshrl.u32 %v3822, 7
        %v3824 = vsub.s32 %v3821, %v3823
        %v3825 = vrot.slane %v3811, %v3824
        %v3826 = vcombine.low %v3770, %v3786
        %v3827 = vcombine.high %v3770, %v3786
        %v3829 = vunpack.c.l.s4 1934713408
        %v3830 = vunpack.c.0.s8 %v3829
        %v3831 = vlaneseq
        %v3832 = vshrl.u32 %v3831, 7
        %v3833 = vsub.s32 %v3830, %v3832
        %v3834 = vrot.slane %v3826, %v3833
        %v3836 = vunpack.c.l.s4 1934713408
        %v3837 = vunpack.c.0.s8 %v3836
        %v3838 = vlaneseq
        %v3839 = vshrl.u32 %v3838, 7
        %v3840 = vsub.s32 %v3837, %v3839
        %v3841 = vrot.slane %v3827, %v3840
        %v3842 = vcombine.low %v3777, %v3793
        %v3843 = vcombine.high %v3777, %v3793
        %v3845 = vunpack.c.l.s4 1934713408
        %v3846 = vunpack.c.0.s8 %v3845
        %v3847 = vlaneseq
        %v3848 = vshrl.u32 %v3847, 7
        %v3849 = vsub.s32 %v3846, %v3848
        %v3850 = vrot.slane %v3842, %v3849
        %v3852 = vunpack.c.l.s4 1934713408
        %v3853 = vunpack.c.0.s8 %v3852
        %v3854 = vlaneseq
        %v3855 = vshrl.u32 %v3854, 7
        %v3856 = vsub.s32 %v3853, %v3855
        %v3857 = vrot.slane %v3843, %v3856
        %v3858 = vcombine.low %v3802, %v3834
        %v3859 = vcombine.high %v3802, %v3834
        %v3860 = vcombine.low %v3809, %v3841
        %v3861 = vcombine.high %v3809, %v3841
        %v3862 = vcombine.low %v3818, %v3850
        %v3863 = vcombine.high %v3818, %v3850
        %v3864 = vcombine.low %v3825, %v3857
        %v3865 = vcombine.high %v3825, %v3857
        %v3866 = vcombine.low %v2955, %v2957
        %v3867 = vcombine.high %v2955, %v2957
        %v3869 = vunpack.c.l.s4 1983009808
        %v3870 = vunpack.c.0.s8 %v3869
        %v3871 = vlaneseq
        %v3872 = vshrl.u32 %v3871, 7
        %v3873 = vsub.s32 %v3870, %v3872
        %v3874 = vrot.slane %v3866, %v3873
        %v3876 = vunpack.c.l.s4 1983009808
        %v3877 = vunpack.c.0.s8 %v3876
        %v3878 = vlaneseq
        %v3879 = vshrl.u32 %v3878, 7
        %v3880 = vsub.s32 %v3877, %v3879
        %v3881 = vrot.slane %v3867, %v3880
        %v3882 = vcombine.low %v3380, %v3384
        %v3883 = vcombine.high %v3380, %v3384
        %v3885 = vunpack.c.l.s4 1983009808
        %v3886 = vunpack.c.0.s8 %v3885
        %v3887 = vlaneseq
        %v3888 = vshrl.u32 %v3887, 7
        %v3889 = vsub.s32 %v3886, %v3888
        %v3890 = vrot.slane %v3882, %v3889
        %v3892 = vunpack.c.l.s4 1983009808
        %v3893 = vunpack.c.0.s8 %v3892
        %v3894 = vlaneseq
        %v3895 = vshrl.u32 %v3894, 7
        %v3896 = vsub.s32 %v3893, %v3895
        %v3897 = vrot.slane %v3883, %v3896
        %v3898 = vcombine.low %v2996, %v2998
        %v3899 = vcombine.high %v2996, %v2998
        %v3901 = vunpack.c.l.s4 1983009808
        %v3902 = vunpack.c.0.s8 %v3901
        %v3903 = vlaneseq
        %v3904 = vshrl.u32 %v3903, 7
        %v3905 = vsub.s32 %v3902, %v3904
        %v3906 = vrot.slane %v3898, %v3905
        %v3908 = vunpack.c.l.s4 1983009808
        %v3909 = vunpack.c.0.s8 %v3908
        %v3910 = vlaneseq
        %v3911 = vshrl.u32 %v3910, 7
        %v3912 = vsub.s32 %v3909, %v3911
        %v3913 = vrot.slane %v3899, %v3912
        %v3914 = vcombine.low %v3388, %v3392
        %v3915 = vcombine.high %v3388, %v3392
        %v3917 = vunpack.c.l.s4 1983009808
        %v3918 = vunpack.c.0.s8 %v3917
        %v3919 = vlaneseq
        %v3920 = vshrl.u32 %v3919, 7
        %v3921 = vsub.s32 %v3918, %v3920
        %v3922 = vrot.slane %v3914, %v3921
        %v3924 = vunpack.c.l.s4 1983009808
        %v3925 = vunpack.c.0.s8 %v3924
        %v3926 = vlaneseq
        %v3927 = vshrl.u32 %v3926, 7
        %v3928 = vsub.s32 %v3925, %v3927
        %v3929 = vrot.slane %v3915, %v3928
        %v3930 = vcombine.low %v3874, %v3890
        %v3931 = vcombine.high %v3874, %v3890
        %v3933 = vunpack.c.l.s4 1934713408
        %v3934 = vunpack.c.0.s8 %v3933
        %v3935 = vlaneseq
        %v3936 = vshrl.u32 %v3935, 7
        %v3937 = vsub.s32 %v3934, %v3936
        %v3938 = vrot.slane %v3930, %v3937
        %v3940 = vunpack.c.l.s4 1934713408
        %v3941 = vunpack.c.0.s8 %v3940
        %v3942 = vlaneseq
        %v3943 = vshrl.u32 %v3942, 7
        %v3944 = vsub.s32 %v3941, %v3943
        %v3945 = vrot.slane %v3931, %v3944
        %v3946 = vcombine.low %v3881, %v3897
        %v3947 = vcombine.high %v3881, %v3897
        %v3949 = vunpack.c.l.s4 1934713408
        %v3950 = vunpack.c.0.s8 %v3949
        %v3951 = vlaneseq
        %v3952 = vshrl.u32 %v3951, 7
        %v3953 = vsub.s32 %v3950, %v3952
        %v3954 = vrot.slane %v3946, %v3953
        %v3956 = vunpack.c.l.s4 1934713408
        %v3957 = vunpack.c.0.s8 %v3956
        %v3958 = vlaneseq
        %v3959 = vshrl.u32 %v3958, 7
        %v3960 = vsub.s32 %v3957, %v3959
        %v3961 = vrot.slane %v3947, %v3960
        %v3962 = vcombine.low %v3906, %v3922
        %v3963 = vcombine.high %v3906, %v3922
        %v3965 = vunpack.c.l.s4 1934713408
        %v3966 = vunpack.c.0.s8 %v3965
        %v3967 = vlaneseq
        %v3968 = vshrl.u32 %v3967, 7
        %v3969 = vsub.s32 %v3966, %v3968
        %v3970 = vrot.slane %v3962, %v3969
        %v3972 = vunpack.c.l.s4 1934713408
        %v3973 = vunpack.c.0.s8 %v3972
        %v3974 = vlaneseq
        %v3975 = vshrl.u32 %v3974, 7
        %v3976 = vsub.s32 %v3973, %v3975
        %v3977 = vrot.slane %v3963, %v3976
        %v3978 = vcombine.low %v3913, %v3929
        %v3979 = vcombine.high %v3913, %v3929
        %v3981 = vunpack.c.l.s4 1934713408
        %v3982 = vunpack.c.0.s8 %v3981
        %v3983 = vlaneseq
        %v3984 = vshrl.u32 %v3983, 7
        %v3985 = vsub.s32 %v3982, %v3984
        %v3986 = vrot.slane %v3978, %v3985
        %v3988 = vunpack.c.l.s4 1934713408
        %v3989 = vunpack.c.0.s8 %v3988
        %v3990 = vlaneseq
        %v3991 = vshrl.u32 %v3990, 7
        %v3992 = vsub.s32 %v3989, %v3991
        %v3993 = vrot.slane %v3979, %v3992
        %v3994 = vcombine.low %v3938, %v3970
        %v3995 = vcombine.high %v3938, %v3970
        %v3996 = vcombine.low %v3945, %v3977
        %v3997 = vcombine.high %v3945, %v3977
        %v3998 = vcombine.low %v3954, %v3986
        %v3999 = vcombine.high %v3954, %v3986
        %v4000 = vcombine.low %v3961, %v3993
        %v4001 = vcombine.high %v3961, %v3993
        %v4002 = vcombine.low %v3037, %v3039
        %v4003 = vcombine.high %v3037, %v3039
        %v4005 = vunpack.c.l.s4 1983009808
        %v4006 = vunpack.c.0.s8 %v4005
        %v4007 = vlaneseq
        %v4008 = vshrl.u32 %v4007, 7
        %v4009 = vsub.s32 %v4006, %v4008
        %v4010 = vrot.slane %v4002, %v4009
        %v4012 = vunpack.c.l.s4 1983009808
        %v4013 = vunpack.c.0.s8 %v4012
        %v4014 = vlaneseq
        %v4015 = vshrl.u32 %v4014, 7
        %v4016 = vsub.s32 %v4013, %v4015
        %v4017 = vrot.slane %v4003, %v4016
        %v4018 = vcombine.low %v3396, %v3400
        %v4019 = vcombine.high %v3396, %v3400
        %v4021 = vunpack.c.l.s4 1983009808
        %v4022 = vunpack.c.0.s8 %v4021
        %v4023 = vlaneseq
        %v4024 = vshrl.u32 %v4023, 7
        %v4025 = vsub.s32 %v4022, %v4024
        %v4026 = vrot.slane %v4018, %v4025
        %v4028 = vunpack.c.l.s4 1983009808
        %v4029 = vunpack.c.0.s8 %v4028
        %v4030 = vlaneseq
        %v4031 = vshrl.u32 %v4030, 7
        %v4032 = vsub.s32 %v4029, %v4031
        %v4033 = vrot.slane %v4019, %v4032
        %v4034 = vcombine.low %v3078, %v3080
        %v4035 = vcombine.high %v3078, %v3080
        %v4037 = vunpack.c.l.s4 1983009808
        %v4038 = vunpack.c.0.s8 %v4037
        %v4039 = vlaneseq
        %v4040 = vshrl.u32 %v4039, 7
        %v4041 = vsub.s32 %v4038, %v4040
        %v4042 = vrot.slane %v4034, %v4041
        %v4044 = vunpack.c.l.s4 1983009808
        %v4045 = vunpack.c.0.s8 %v4044
        %v4046 = vlaneseq
        %v4047 = vshrl.u32 %v4046, 7
        %v4048 = vsub.s32 %v4045, %v4047
        %v4049 = vrot.slane %v4035, %v4048
        %v4050 = vcombine.low %v3404, %v3408
        %v4051 = vcombine.high %v3404, %v3408
        %v4053 = vunpack.c.l.s4 1983009808
        %v4054 = vunpack.c.0.s8 %v4053
        %v4055 = vlaneseq
        %v4056 = vshrl.u32 %v4055, 7
        %v4057 = vsub.s32 %v4054, %v4056
        %v4058 = vrot.slane %v4050, %v4057
        %v4060 = vunpack.c.l.s4 1983009808
        %v4061 = vunpack.c.0.s8 %v4060
        %v4062 = vlaneseq
        %v4063 = vshrl.u32 %v4062, 7
        %v4064 = vsub.s32 %v4061, %v4063
        %v4065 = vrot.slane %v4051, %v4064
        %v4066 = vcombine.low %v4010, %v4026
        %v4067 = vcombine.high %v4010, %v4026
        %v4069 = vunpack.c.l.s4 1934713408
        %v4070 = vunpack.c.0.s8 %v4069
        %v4071 = vlaneseq
        %v4072 = vshrl.u32 %v4071, 7
        %v4073 = vsub.s32 %v4070, %v4072
        %v4074 = vrot.slane %v4066, %v4073
        %v4076 = vunpack.c.l.s4 1934713408
        %v4077 = vunpack.c.0.s8 %v4076
        %v4078 = vlaneseq
        %v4079 = vshrl.u32 %v4078, 7
        %v4080 = vsub.s32 %v4077, %v4079
        %v4081 = vrot.slane %v4067, %v4080
        %v4082 = vcombine.low %v4017, %v4033
        %v4083 = vcombine.high %v4017, %v4033
        %v4085 = vunpack.c.l.s4 1934713408
        %v4086 = vunpack.c.0.s8 %v4085
        %v4087 = vlaneseq
        %v4088 = vshrl.u32 %v4087, 7
        %v4089 = vsub.s32 %v4086, %v4088
        %v4090 = vrot.slane %v4082, %v4089
        %v4092 = vunpack.c.l.s4 1934713408
        %v4093 = vunpack.c.0.s8 %v4092
        %v4094 = vlaneseq
        %v4095 = vshrl.u32 %v4094, 7
        %v4096 = vsub.s32 %v4093, %v4095
        %v4097 = vrot.slane %v4083, %v4096
        %v4098 = vcombine.low %v4042, %v4058
        %v4099 = vcombine.high %v4042, %v4058
        %v4101 = vunpack.c.l.s4 1934713408
        %v4102 = vunpack.c.0.s8 %v4101
        %v4103 = vlaneseq
        %v4104 = vshrl.u32 %v4103, 7
        %v4105 = vsub.s32 %v4102, %v4104
        %v4106 = vrot.slane %v4098, %v4105
        %v4108 = vunpack.c.l.s4 1934713408
        %v4109 = vunpack.c.0.s8 %v4108
        %v4110 = vlaneseq
        %v4111 = vshrl.u32 %v4110, 7
        %v4112 = vsub.s32 %v4109, %v4111
        %v4113 = vrot.slane %v4099, %v4112
        %v4114 = vcombine.low %v4049, %v4065
        %v4115 = vcombine.high %v4049, %v4065
        %v4117 = vunpack.c.l.s4 1934713408
        %v4118 = vunpack.c.0.s8 %v4117
        %v4119 = vlaneseq
        %v4120 = vshrl.u32 %v4119, 7
        %v4121 = vsub.s32 %v4118, %v4120
        %v4122 = vrot.slane %v4114, %v4121
        %v4124 = vunpack.c.l.s4 1934713408
        %v4125 = vunpack.c.0.s8 %v4124
        %v4126 = vlaneseq
        %v4127 = vshrl.u32 %v4126, 7
        %v4128 = vsub.s32 %v4125, %v4127
        %v4129 = vrot.slane %v4115, %v4128
        %v4130 = vcombine.low %v4074, %v4106
        %v4131 = vcombine.high %v4074, %v4106
        %v4132 = vcombine.low %v4081, %v4113
        %v4133 = vcombine.high %v4081, %v4113
        %v4134 = vcombine.low %v4090, %v4122
        %v4135 = vcombine.high %v4090, %v4122
        %v4136 = vcombine.low %v4097, %v4129
        %v4137 = vcombine.high %v4097, %v4129
        %v4138 = vcombine.low %v3119, %v3121
        %v4139 = vcombine.high %v3119, %v3121
        %v4141 = vunpack.c.l.s4 1983009808
        %v4142 = vunpack.c.0.s8 %v4141
        %v4143 = vlaneseq
        %v4144 = vshrl.u32 %v4143, 7
        %v4145 = vsub.s32 %v4142, %v4144
        %v4146 = vrot.slane %v4138, %v4145
        %v4148 = vunpack.c.l.s4 1983009808
        %v4149 = vunpack.c.0.s8 %v4148
        %v4150 = vlaneseq
        %v4151 = vshrl.u32 %v4150, 7
        %v4152 = vsub.s32 %v4149, %v4151
        %v4153 = vrot.slane %v4139, %v4152
        %v4154 = vcombine.low %v3412, %v3416
        %v4155 = vcombine.high %v3412, %v3416
        %v4157 = vunpack.c.l.s4 1983009808
        %v4158 = vunpack.c.0.s8 %v4157
        %v4159 = vlaneseq
        %v4160 = vshrl.u32 %v4159, 7
        %v4161 = vsub.s32 %v4158, %v4160
        %v4162 = vrot.slane %v4154, %v4161
        %v4164 = vunpack.c.l.s4 1983009808
        %v4165 = vunpack.c.0.s8 %v4164
        %v4166 = vlaneseq
        %v4167 = vshrl.u32 %v4166, 7
        %v4168 = vsub.s32 %v4165, %v4167
        %v4169 = vrot.slane %v4155, %v4168
        %v4170 = vcombine.low %v3160, %v3162
        %v4171 = vcombine.high %v3160, %v3162
        %v4173 = vunpack.c.l.s4 1983009808
        %v4174 = vunpack.c.0.s8 %v4173
        %v4175 = vlaneseq
        %v4176 = vshrl.u32 %v4175, 7
        %v4177 = vsub.s32 %v4174, %v4176
        %v4178 = vrot.slane %v4170, %v4177
        %v4180 = vunpack.c.l.s4 1983009808
        %v4181 = vunpack.c.0.s8 %v4180
        %v4182 = vlaneseq
        %v4183 = vshrl.u32 %v4182, 7
        %v4184 = vsub.s32 %v4181, %v4183
        %v4185 = vrot.slane %v4171, %v4184
        %v4186 = vcombine.low %v3420, %v3424
        %v4187 = vcombine.high %v3420, %v3424
        %v4189 = vunpack.c.l.s4 1983009808
        %v4190 = vunpack.c.0.s8 %v4189
        %v4191 = vlaneseq
        %v4192 = vshrl.u32 %v4191, 7
        %v4193 = vsub.s32 %v4190, %v4192
        %v4194 = vrot.slane %v4186, %v4193
        %v4196 = vunpack.c.l.s4 1983009808
        %v4197 = vunpack.c.0.s8 %v4196
        %v4198 = vlaneseq
        %v4199 = vshrl.u32 %v4198, 7
        %v4200 = vsub.s32 %v4197, %v4199
        %v4201 = vrot.slane %v4187, %v4200
        %v4202 = vcombine.low %v4146, %v4162
        %v4203 = vcombine.high %v4146, %v4162
        %v4205 = vunpack.c.l.s4 1934713408
        %v4206 = vunpack.c.0.s8 %v4205
        %v4207 = vlaneseq
        %v4208 = vshrl.u32 %v4207, 7
        %v4209 = vsub.s32 %v4206, %v4208
        %v4210 = vrot.slane %v4202, %v4209
        %v4212 = vunpack.c.l.s4 1934713408
        %v4213 = vunpack.c.0.s8 %v4212
        %v4214 = vlaneseq
        %v4215 = vshrl.u32 %v4214, 7
        %v4216 = vsub.s32 %v4213, %v4215
        %v4217 = vrot.slane %v4203, %v4216
        %v4218 = vcombine.low %v4153, %v4169
        %v4219 = vcombine.high %v4153, %v4169
        %v4221 = vunpack.c.l.s4 1934713408
        %v4222 = vunpack.c.0.s8 %v4221
        %v4223 = vlaneseq
        %v4224 = vshrl.u32 %v4223, 7
        %v4225 = vsub.s32 %v4222, %v4224
        %v4226 = vrot.slane %v4218, %v4225
        %v4228 = vunpack.c.l.s4 1934713408
        %v4229 = vunpack.c.0.s8 %v4228
        %v4230 = vlaneseq
        %v4231 = vshrl.u32 %v4230, 7
        %v4232 = vsub.s32 %v4229, %v4231
        %v4233 = vrot.slane %v4219, %v4232
        %v4234 = vcombine.low %v4178, %v4194
        %v4235 = vcombine.high %v4178, %v4194
        %v4237 = vunpack.c.l.s4 1934713408
        %v4238 = vunpack.c.0.s8 %v4237
        %v4239 = vlaneseq
        %v4240 = vshrl.u32 %v4239, 7
        %v4241 = vsub.s32 %v4238, %v4240
        %v4242 = vrot.slane %v4234, %v4241
        %v4244 = vunpack.c.l.s4 1934713408
        %v4245 = vunpack.c.0.s8 %v4244
        %v4246 = vlaneseq
        %v4247 = vshrl.u32 %v4246, 7
        %v4248 = vsub.s32 %v4245, %v4247
        %v4249 = vrot.slane %v4235, %v4248
        %v4250 = vcombine.low %v4185, %v4201
        %v4251 = vcombine.high %v4185, %v4201
        %v4253 = vunpack.c.l.s4 1934713408
        %v4254 = vunpack.c.0.s8 %v4253
        %v4255 = vlaneseq
        %v4256 = vshrl.u32 %v4255, 7
        %v4257 = vsub.s32 %v4254, %v4256
        %v4258 = vrot.slane %v4250, %v4257
        %v4260 = vunpack.c.l.s4 1934713408
        %v4261 = vunpack.c.0.s8 %v4260
        %v4262 = vlaneseq
        %v4263 = vshrl.u32 %v4262, 7
        %v4264 = vsub.s32 %v4261, %v4263
        %v4265 = vrot.slane %v4251, %v4264
        %v4266 = vcombine.low %v4210, %v4242
        %v4267 = vcombine.high %v4210, %v4242
        %v4268 = vcombine.low %v4217, %v4249
        %v4269 = vcombine.high %v4217, %v4249
        %v4270 = vcombine.low %v4226, %v4258
        %v4271 = vcombine.high %v4226, %v4258
        %v4272 = vcombine.low %v4233, %v4265
        %v4273 = vcombine.high %v4233, %v4265
        %v4274 = vcombine.low %v3201, %v3203
        %v4275 = vcombine.high %v3201, %v3203
        %v4277 = vunpack.c.l.s4 1983009808
        %v4278 = vunpack.c.0.s8 %v4277
        %v4279 = vlaneseq
        %v4280 = vshrl.u32 %v4279, 7
        %v4281 = vsub.s32 %v4278, %v4280
        %v4282 = vrot.slane %v4274, %v4281
        %v4284 = vunpack.c.l.s4 1983009808
        %v4285 = vunpack.c.0.s8 %v4284
        %v4286 = vlaneseq
        %v4287 = vshrl.u32 %v4286, 7
        %v4288 = vsub.s32 %v4285, %v4287
        %v4289 = vrot.slane %v4275, %v4288
        %v4290 = vcombine.low %v3428, %v3432
        %v4291 = vcombine.high %v3428, %v3432
        %v4293 = vunpack.c.l.s4 1983009808
        %v4294 = vunpack.c.0.s8 %v4293
        %v4295 = vlaneseq
        %v4296 = vshrl.u32 %v4295, 7
        %v4297 = vsub.s32 %v4294, %v4296
        %v4298 = vrot.slane %v4290, %v4297
        %v4300 = vunpack.c.l.s4 1983009808
        %v4301 = vunpack.c.0.s8 %v4300
        %v4302 = vlaneseq
        %v4303 = vshrl.u32 %v4302, 7
        %v4304 = vsub.s32 %v4301, %v4303
        %v4305 = vrot.slane %v4291, %v4304
        %v4306 = vcombine.low %v3242, %v3244
        %v4307 = vcombine.high %v3242, %v3244
        %v4309 = vunpack.c.l.s4 1983009808
        %v4310 = vunpack.c.0.s8 %v4309
        %v4311 = vlaneseq
        %v4312 = vshrl.u32 %v4311, 7
        %v4313 = vsub.s32 %v4310, %v4312
        %v4314 = vrot.slane %v4306, %v4313
        %v4316 = vunpack.c.l.s4 1983009808
        %v4317 = vunpack.c.0.s8 %v4316
        %v4318 = vlaneseq
        %v4319 = vshrl.u32 %v4318, 7
        %v4320 = vsub.s32 %v4317, %v4319
        %v4321 = vrot.slane %v4307, %v4320
        %v4322 = vcombine.low %v3436, %v3440
        %v4323 = vcombine.high %v3436, %v3440
        %v4325 = vunpack.c.l.s4 1983009808
        %v4326 = vunpack.c.0.s8 %v4325
        %v4327 = vlaneseq
        %v4328 = vshrl.u32 %v4327, 7
        %v4329 = vsub.s32 %v4326, %v4328
        %v4330 = vrot.slane %v4322, %v4329
        %v4332 = vunpack.c.l.s4 1983009808
        %v4333 = vunpack.c.0.s8 %v4332
        %v4334 = vlaneseq
        %v4335 = vshrl.u32 %v4334, 7
        %v4336 = vsub.s32 %v4333, %v4335
        %v4337 = vrot.slane %v4323, %v4336
        %v4338 = vcombine.low %v4282, %v4298
        %v4339 = vcombine.high %v4282, %v4298
        %v4341 = vunpack.c.l.s4 1934713408
        %v4342 = vunpack.c.0.s8 %v4341
        %v4343 = vlaneseq
        %v4344 = vshrl.u32 %v4343, 7
        %v4345 = vsub.s32 %v4342, %v4344
        %v4346 = vrot.slane %v4338, %v4345
        %v4348 = vunpack.c.l.s4 1934713408
        %v4349 = vunpack.c.0.s8 %v4348
        %v4350 = vlaneseq
        %v4351 = vshrl.u32 %v4350, 7
        %v4352 = vsub.s32 %v4349, %v4351
        %v4353 = vrot.slane %v4339, %v4352
        %v4354 = vcombine.low %v4289, %v4305
        %v4355 = vcombine.high %v4289, %v4305
        %v4357 = vunpack.c.l.s4 1934713408
        %v4358 = vunpack.c.0.s8 %v4357
        %v4359 = vlaneseq
        %v4360 = vshrl.u32 %v4359, 7
        %v4361 = vsub.s32 %v4358, %v4360
        %v4362 = vrot.slane %v4354, %v4361
        %v4364 = vunpack.c.l.s4 1934713408
        %v4365 = vunpack.c.0.s8 %v4364
        %v4366 = vlaneseq
        %v4367 = vshrl.u32 %v4366, 7
        %v4368 = vsub.s32 %v4365, %v4367
        %v4369 = vrot.slane %v4355, %v4368
        %v4370 = vcombine.low %v4314, %v4330
        %v4371 = vcombine.high %v4314, %v4330
        %v4373 = vunpack.c.l.s4 1934713408
        %v4374 = vunpack.c.0.s8 %v4373
        %v4375 = vlaneseq
        %v4376 = vshrl.u32 %v4375, 7
        %v4377 = vsub.s32 %v4374, %v4376
        %v4378 = vrot.slane %v4370, %v4377
        %v4380 = vunpack.c.l.s4 1934713408
        %v4381 = vunpack.c.0.s8 %v4380
        %v4382 = vlaneseq
        %v4383 = vshrl.u32 %v4382, 7
        %v4384 = vsub.s32 %v4381, %v4383
        %v4385 = vrot.slane %v4371, %v4384
        %v4386 = vcombine.low %v4321, %v4337
        %v4387 = vcombine.high %v4321, %v4337
        %v4389 = vunpack.c.l.s4 1934713408
        %v4390 = vunpack.c.0.s8 %v4389
        %v4391 = vlaneseq
        %v4392 = vshrl.u32 %v4391, 7
        %v4393 = vsub.s32 %v4390, %v4392
        %v4394 = vrot.slane %v4386, %v4393
        %v4396 = vunpack.c.l.s4 1934713408
        %v4397 = vunpack.c.0.s8 %v4396
        %v4398 = vlaneseq
        %v4399 = vshrl.u32 %v4398, 7
        %v4400 = vsub.s32 %v4397, %v4399
        %v4401 = vrot.slane %v4387, %v4400
        %v4402 = vcombine.low %v4346, %v4378
        %v4403 = vcombine.high %v4346, %v4378
        %v4404 = vcombine.low %v4353, %v4385
        %v4405 = vcombine.high %v4353, %v4385
        %v4406 = vcombine.low %v4362, %v4394
        %v4407 = vcombine.high %v4362, %v4394
        %v4408 = vcombine.low %v4369, %v4401
        %v4409 = vcombine.high %v4369, %v4401
        %v4410 = vcombine.low %v3283, %v3285
        %v4411 = vcombine.high %v3283, %v3285
        %v4413 = vunpack.c.l.s4 1983009808
        %v4414 = vunpack.c.0.s8 %v4413
        %v4415 = vlaneseq
        %v4416 = vshrl.u32 %v4415, 7
        %v4417 = vsub.s32 %v4414, %v4416
        %v4418 = vrot.slane %v4410, %v4417
        %v4420 = vunpack.c.l.s4 1983009808
        %v4421 = vunpack.c.0.s8 %v4420
        %v4422 = vlaneseq
        %v4423 = vshrl.u32 %v4422, 7
        %v4424 = vsub.s32 %v4421, %v4423
        %v4425 = vrot.slane %v4411, %v4424
        %v4426 = vcombine.low %v3444, %v3448
        %v4427 = vcombine.high %v3444, %v3448
        %v4429 = vunpack.c.l.s4 1983009808
        %v4430 = vunpack.c.0.s8 %v4429
        %v4431 = vlaneseq
        %v4432 = vshrl.u32 %v4431, 7
        %v4433 = vsub.s32 %v4430, %v4432
        %v4434 = vrot.slane %v4426, %v4433
        %v4436 = vunpack.c.l.s4 1983009808
        %v4437 = vunpack.c.0.s8 %v4436
        %v4438 = vlaneseq
        %v4439 = vshrl.u32 %v4438, 7
        %v4440 = vsub.s32 %v4437, %v4439
        %v4441 = vrot.slane %v4427, %v4440
        %v4442 = vcombine.low %v3324, %v3326
        %v4443 = vcombine.high %v3324, %v3326
        %v4445 = vunpack.c.l.s4 1983009808
        %v4446 = vunpack.c.0.s8 %v4445
        %v4447 = vlaneseq
        %v4448 = vshrl.u32 %v4447, 7
        %v4449 = vsub.s32 %v4446, %v4448
        %v4450 = vrot.slane %v4442, %v4449
        %v4452 = vunpack.c.l.s4 1983009808
        %v4453 = vunpack.c.0.s8 %v4452
        %v4454 = vlaneseq
        %v4455 = vshrl.u32 %v4454, 7
        %v4456 = vsub.s32 %v4453, %v4455
        %v4457 = vrot.slane %v4443, %v4456
        %v4458 = vcombine.low %v3452, %v3456
        %v4459 = vcombine.high %v3452, %v3456
        %v4461 = vunpack.c.l.s4 1983009808
        %v4462 = vunpack.c.0.s8 %v4461
        %v4463 = vlaneseq
        %v4464 = vshrl.u32 %v4463, 7
        %v4465 = vsub.s32 %v4462, %v4464
        %v4466 = vrot.slane %v4458, %v4465
        %v4468 = vunpack.c.l.s4 1983009808
        %v4469 = vunpack.c.0.s8 %v4468
        %v4470 = vlaneseq
        %v4471 = vshrl.u32 %v4470, 7
        %v4472 = vsub.s32 %v4469, %v4471
        %v4473 = vrot.slane %v4459, %v4472
        %v4474 = vcombine.low %v4418, %v4434
        %v4475 = vcombine.high %v4418, %v4434
        %v4477 = vunpack.c.l.s4 1934713408
        %v4478 = vunpack.c.0.s8 %v4477
        %v4479 = vlaneseq
        %v4480 = vshrl.u32 %v4479, 7
        %v4481 = vsub.s32 %v4478, %v4480
        %v4482 = vrot.slane %v4474, %v4481
        %v4484 = vunpack.c.l.s4 1934713408
        %v4485 = vunpack.c.0.s8 %v4484
        %v4486 = vlaneseq
        %v4487 = vshrl.u32 %v4486, 7
        %v4488 = vsub.s32 %v4485, %v4487
        %v4489 = vrot.slane %v4475, %v4488
        %v4490 = vcombine.low %v4425, %v4441
        %v4491 = vcombine.high %v4425, %v4441
        %v4493 = vunpack.c.l.s4 1934713408
        %v4494 = vunpack.c.0.s8 %v4493
        %v4495 = vlaneseq
        %v4496 = vshrl.u32 %v4495, 7
        %v4497 = vsub.s32 %v4494, %v4496
        %v4498 = vrot.slane %v4490, %v4497
        %v4500 = vunpack.c.l.s4 1934713408
        %v4501 = vunpack.c.0.s8 %v4500
        %v4502 = vlaneseq
        %v4503 = vshrl.u32 %v4502, 7
        %v4504 = vsub.s32 %v4501, %v4503
        %v4505 = vrot.slane %v4491, %v4504
        %v4506 = vcombine.low %v4450, %v4466
        %v4507 = vcombine.high %v4450, %v4466
        %v4509 = vunpack.c.l.s4 1934713408
        %v4510 = vunpack.c.0.s8 %v4509
        %v4511 = vlaneseq
        %v4512 = vshrl.u32 %v4511, 7
        %v4513 = vsub.s32 %v4510, %v4512
        %v4514 = vrot.slane %v4506, %v4513
        %v4516 = vunpack.c.l.s4 1934713408
        %v4517 = vunpack.c.0.s8 %v4516
        %v4518 = vlaneseq
        %v4519 = vshrl.u32 %v4518, 7
        %v4520 = vsub.s32 %v4517, %v4519
        %v4521 = vrot.slane %v4507, %v4520
        %v4522 = vcombine.low %v4457, %v4473
        %v4523 = vcombine.high %v4457, %v4473
        %v4525 = vunpack.c.l.s4 1934713408
        %v4526 = vunpack.c.0.s8 %v4525
        %v4527 = vlaneseq
        %v4528 = vshrl.u32 %v4527, 7
        %v4529 = vsub.s32 %v4526, %v4528
        %v4530 = vrot.slane %v4522, %v4529
        %v4532 = vunpack.c.l.s4 1934713408
        %v4533 = vunpack.c.0.s8 %v4532
        %v4534 = vlaneseq
        %v4535 = vshrl.u32 %v4534, 7
        %v4536 = vsub.s32 %v4533, %v4535
        %v4537 = vrot.slane %v4523, %v4536
        %v4538 = vcombine.low %v4482, %v4514
        %v4539 = vcombine.high %v4482, %v4514
        %v4540 = vcombine.low %v4489, %v4521
        %v4541 = vcombine.high %v4489, %v4521
        %v4542 = vcombine.low %v4498, %v4530
        %v4543 = vcombine.high %v4498, %v4530
        %v4544 = vcombine.low %v4505, %v4537
        %v4545 = vcombine.high %v4505, %v4537
        %v4546 = vadd.s32 %v850, 16
        %v4547 = vadd.s32 %v850, 24
        %v4548 = vadd.s32 %v850, 32
        %v4549 = vadd.s32 %v850, 40
        %v4550 = vadd.s32 %v850, 48
        %v4551 = vadd.s32 %v850, 56
        %v4552 = vlaneseq
        %v4553 = vand.u32 %v4552, 127
        %vm4554 = vcmp.eq.s32.totalorder %v850, %v4553
        %vm4555 = vcmp.eq.s32.totalorder %v851, %v4553
        %vm4556 = vcmp.eq.s32.totalorder %v4546, %v4553
        %vm4557 = vcmp.eq.s32.totalorder %v4547, %v4553
        %vm4558 = vcmp.eq.s32.totalorder %v4548, %v4553
        %vm4559 = vcmp.eq.s32.totalorder %v4549, %v4553
        %vm4560 = vcmp.eq.s32.totalorder %v4550, %v4553
        %vm4561 = vcmp.eq.s32.totalorder %v4551, %v4553
        %v4562 = vsel %vm4554, 1, 0
        %v4563 = vsel %vm4555, 1, 0
        %v4564 = vsel %vm4556, 1, 0
        %v4565 = vsel %vm4557, 1, 0
        %v4566 = vsel %vm4558, 1, 0
        %v4567 = vsel %vm4559, 1, 0
        %v4568 = vsel %vm4560, 1, 0
        %v4569 = vsel %vm4561, 1, 0
        %v4570 = vcvt.s32.f32 %v4562
        %v4571 = vcvt.s32.f32 %v4563
        %v4572 = vcvt.s32.f32 %v4564
        %v4573 = vcvt.s32.f32 %v4565
        %v4574 = vcvt.s32.f32 %v4566
        %v4575 = vcvt.s32.f32 %v4567
        %v4576 = vcvt.s32.f32 %v4568
        %v4577 = vcvt.s32.f32 %v4569
        %v4578 = vadd.f32 %v3586, %v4570
        %v4579 = vadd.f32 %v3722, %v4571
        %v4580 = vadd.f32 %v3858, %v4572
        %v4581 = vadd.f32 %v3994, %v4573
        %v4582 = vadd.f32 %v4130, %v4574
        %v4583 = vadd.f32 %v4266, %v4575
        %v4584 = vadd.f32 %v4402, %v4576
        %v4585 = vadd.f32 %v4538, %v4577
        %v4586 = vadd.f32 %v3587, %v4570
        %v4587 = vadd.f32 %v3723, %v4571
        %v4588 = vadd.f32 %v3859, %v4572
        %v4589 = vadd.f32 %v3995, %v4573
        %v4590 = vadd.f32 %v4131, %v4574
        %v4591 = vadd.f32 %v4267, %v4575
        %v4592 = vadd.f32 %v4403, %v4576
        %v4593 = vadd.f32 %v4539, %v4577
        %v4594 = vadd.f32 %v3588, %v4570
        %v4595 = vadd.f32 %v3724, %v4571
        %v4596 = vadd.f32 %v3860, %v4572
        %v4597 = vadd.f32 %v3996, %v4573
        %v4598 = vadd.f32 %v4132, %v4574
        %v4599 = vadd.f32 %v4268, %v4575
        %v4600 = vadd.f32 %v4404, %v4576
        %v4601 = vadd.f32 %v4540, %v4577
        %v4602 = vadd.f32 %v3589, %v4570
        %v4603 = vadd.f32 %v3725, %v4571
        %v4604 = vadd.f32 %v3861, %v4572
        %v4605 = vadd.f32 %v3997, %v4573
        %v4606 = vadd.f32 %v4133, %v4574
        %v4607 = vadd.f32 %v4269, %v4575
        %v4608 = vadd.f32 %v4405, %v4576
        %v4609 = vadd.f32 %v4541, %v4577
        %v4610 = vadd.f32 %v3590, %v4570
        %v4611 = vadd.f32 %v3726, %v4571
        %v4612 = vadd.f32 %v3862, %v4572
        %v4613 = vadd.f32 %v3998, %v4573
        %v4614 = vadd.f32 %v4134, %v4574
        %v4615 = vadd.f32 %v4270, %v4575
        %v4616 = vadd.f32 %v4406, %v4576
        %v4617 = vadd.f32 %v4542, %v4577
        %v4618 = vadd.f32 %v3591, %v4570
        %v4619 = vadd.f32 %v3727, %v4571
        %v4620 = vadd.f32 %v3863, %v4572
        %v4621 = vadd.f32 %v3999, %v4573
        %v4622 = vadd.f32 %v4135, %v4574
        %v4623 = vadd.f32 %v4271, %v4575
        %v4624 = vadd.f32 %v4407, %v4576
        %v4625 = vadd.f32 %v4543, %v4577
        %v4626 = vadd.f32 %v3592, %v4570
        %v4627 = vadd.f32 %v3728, %v4571
        %v4628 = vadd.f32 %v3864, %v4572
        %v4629 = vadd.f32 %v4000, %v4573
        %v4630 = vadd.f32 %v4136, %v4574
        %v4631 = vadd.f32 %v4272, %v4575
        %v4632 = vadd.f32 %v4408, %v4576
        %v4633 = vadd.f32 %v4544, %v4577
        %v4634 = vadd.f32 %v3593, %v4570
        %v4635 = vadd.f32 %v3729, %v4571
        %v4636 = vadd.f32 %v3865, %v4572
        %v4637 = vadd.f32 %v4001, %v4573
        %v4638 = vadd.f32 %v4137, %v4574
        %v4639 = vadd.f32 %v4273, %v4575
        %v4640 = vadd.f32 %v4409, %v4576
        %v4641 = vadd.f32 %v4545, %v4577
        %4642 = vst.msk [vmem:[%s448] sm:$0xff] %vm711, %v4578
        %4643 = vst.msk [vmem:[%s448 + $0x8] sm:$0xff] %vm711, %v4579
        %4644 = vst.msk [vmem:[%s448 + $0x10] sm:$0xff] %vm711, %v4580
        %4645 = vst.msk [vmem:[%s448 + $0x18] sm:$0xff] %vm711, %v4581
        %4646 = vst.msk [vmem:[%s448 + $0x20] sm:$0xff] %vm711, %v4582
        %4647 = vst.msk [vmem:[%s448 + $0x28] sm:$0xff] %vm711, %v4583
        %4648 = vst.msk [vmem:[%s448 + $0x30] sm:$0xff] %vm711, %v4584
        %4649 = vst.msk [vmem:[%s448 + $0x38] sm:$0xff] %vm711, %v4585
        %4650 = vst.msk [vmem:[%s448 + $0x40] sm:$0xff] %vm711, %v4586
        %4651 = vst.msk [vmem:[%s448 + $0x48] sm:$0xff] %vm711, %v4587
        %4652 = vst.msk [vmem:[%s448 + $0x50] sm:$0xff] %vm711, %v4588
        %4653 = vst.msk [vmem:[%s448 + $0x58] sm:$0xff] %vm711, %v4589
        %4654 = vst.msk [vmem:[%s448 + $0x60] sm:$0xff] %vm711, %v4590
        %4655 = vst.msk [vmem:[%s448 + $0x68] sm:$0xff] %vm711, %v4591
        %4656 = vst.msk [vmem:[%s448 + $0x70] sm:$0xff] %vm711, %v4592
        %4657 = vst.msk [vmem:[%s448 + $0x78] sm:$0xff] %vm711, %v4593
        %4658 = vst.msk [vmem:[%s448 + $0x80] sm:$0xff] %vm711, %v4594
        %4659 = vst.msk [vmem:[%s448 + $0x88] sm:$0xff] %vm711, %v4595
        %4660 = vst.msk [vmem:[%s448 + $0x90] sm:$0xff] %vm711, %v4596
        %4661 = vst.msk [vmem:[%s448 + $0x98] sm:$0xff] %vm711, %v4597
        %4662 = vst.msk [vmem:[%s448 + $0xa0] sm:$0xff] %vm711, %v4598
        %4663 = vst.msk [vmem:[%s448 + $0xa8] sm:$0xff] %vm711, %v4599
        %4664 = vst.msk [vmem:[%s448 + $0xb0] sm:$0xff] %vm711, %v4600
        %4665 = vst.msk [vmem:[%s448 + $0xb8] sm:$0xff] %vm711, %v4601
        %4666 = vst.msk [vmem:[%s448 + $0xc0] sm:$0xff] %vm711, %v4602
        %4667 = vst.msk [vmem:[%s448 + $0xc8] sm:$0xff] %vm711, %v4603
        %4668 = vst.msk [vmem:[%s448 + $0xd0] sm:$0xff] %vm711, %v4604
        %4669 = vst.msk [vmem:[%s448 + $0xd8] sm:$0xff] %vm711, %v4605
        %4670 = vst.msk [vmem:[%s448 + $0xe0] sm:$0xff] %vm711, %v4606
        %4671 = vst.msk [vmem:[%s448 + $0xe8] sm:$0xff] %vm711, %v4607
        %4672 = vst.msk [vmem:[%s448 + $0xf0] sm:$0xff] %vm711, %v4608
        %4673 = vst.msk [vmem:[%s448 + $0xf8] sm:$0xff] %vm711, %v4609
        %4674 = vst.msk [vmem:[%s448 + $0x100] sm:$0xff] %vm711, %v4610
        %4675 = vst.msk [vmem:[%s448 + $0x108] sm:$0xff] %vm711, %v4611
        %4676 = vst.msk [vmem:[%s448 + $0x110] sm:$0xff] %vm711, %v4612
        %4677 = vst.msk [vmem:[%s448 + $0x118] sm:$0xff] %vm711, %v4613
        %4678 = vst.msk [vmem:[%s448 + $0x120] sm:$0xff] %vm711, %v4614
        %4679 = vst.msk [vmem:[%s448 + $0x128] sm:$0xff] %vm711, %v4615
        %4680 = vst.msk [vmem:[%s448 + $0x130] sm:$0xff] %vm711, %v4616
        %4681 = vst.msk [vmem:[%s448 + $0x138] sm:$0xff] %vm711, %v4617
        %4682 = vst.msk [vmem:[%s448 + $0x140] sm:$0xff] %vm711, %v4618
        %4683 = vst.msk [vmem:[%s448 + $0x148] sm:$0xff] %vm711, %v4619
        %4684 = vst.msk [vmem:[%s448 + $0x150] sm:$0xff] %vm711, %v4620
        %4685 = vst.msk [vmem:[%s448 + $0x158] sm:$0xff] %vm711, %v4621
        %4686 = vst.msk [vmem:[%s448 + $0x160] sm:$0xff] %vm711, %v4622
        %4687 = vst.msk [vmem:[%s448 + $0x168] sm:$0xff] %vm711, %v4623
        %4688 = vst.msk [vmem:[%s448 + $0x170] sm:$0xff] %vm711, %v4624
        %4689 = vst.msk [vmem:[%s448 + $0x178] sm:$0xff] %vm711, %v4625
        %4690 = vst.msk [vmem:[%s448 + $0x180] sm:$0xff] %vm711, %v4626
        %4691 = vst.msk [vmem:[%s448 + $0x188] sm:$0xff] %vm711, %v4627
        %4692 = vst.msk [vmem:[%s448 + $0x190] sm:$0xff] %vm711, %v4628
        %4693 = vst.msk [vmem:[%s448 + $0x198] sm:$0xff] %vm711, %v4629
        %4694 = vst.msk [vmem:[%s448 + $0x1a0] sm:$0xff] %vm711, %v4630
        %4695 = vst.msk [vmem:[%s448 + $0x1a8] sm:$0xff] %vm711, %v4631
        %4696 = vst.msk [vmem:[%s448 + $0x1b0] sm:$0xff] %vm711, %v4632
        %4697 = vst.msk [vmem:[%s448 + $0x1b8] sm:$0xff] %vm711, %v4633
        %4698 = vst.msk [vmem:[%s448 + $0x1c0] sm:$0xff] %vm711, %v4634
        %4699 = vst.msk [vmem:[%s448 + $0x1c8] sm:$0xff] %vm711, %v4635
        %4700 = vst.msk [vmem:[%s448 + $0x1d0] sm:$0xff] %vm711, %v4636
        %4701 = vst.msk [vmem:[%s448 + $0x1d8] sm:$0xff] %vm711, %v4637
        %4702 = vst.msk [vmem:[%s448 + $0x1e0] sm:$0xff] %vm711, %v4638
        %4703 = vst.msk [vmem:[%s448 + $0x1e8] sm:$0xff] %vm711, %v4639
        %4704 = vst.msk [vmem:[%s448 + $0x1f0] sm:$0xff] %vm711, %v4640
        %4705 = vst.msk [vmem:[%s448 + $0x1f8] sm:$0xff] %vm711, %v4641
        %v4706 = vpack.c.bf16 %v4579, %v4578
        %v4707 = vpack.c.bf16 %v4581, %v4580
        %v4708 = vpack.c.bf16 %v4583, %v4582
        %v4709 = vpack.c.bf16 %v4585, %v4584
        %v4710 = vpack.c.bf16 %v4587, %v4586
        %v4711 = vpack.c.bf16 %v4589, %v4588
        %v4712 = vpack.c.bf16 %v4591, %v4590
        %v4713 = vpack.c.bf16 %v4593, %v4592
        %v4714 = vpack.c.bf16 %v4595, %v4594
        %v4715 = vpack.c.bf16 %v4597, %v4596
        %v4716 = vpack.c.bf16 %v4599, %v4598
        %v4717 = vpack.c.bf16 %v4601, %v4600
        %v4718 = vpack.c.bf16 %v4603, %v4602
        %v4719 = vpack.c.bf16 %v4605, %v4604
        %v4720 = vpack.c.bf16 %v4607, %v4606
        %v4721 = vpack.c.bf16 %v4609, %v4608
        %v4722 = vpack.c.bf16 %v4611, %v4610
        %v4723 = vpack.c.bf16 %v4613, %v4612
        %v4724 = vpack.c.bf16 %v4615, %v4614
        %v4725 = vpack.c.bf16 %v4617, %v4616
        %v4726 = vpack.c.bf16 %v4619, %v4618
        %v4727 = vpack.c.bf16 %v4621, %v4620
        %v4728 = vpack.c.bf16 %v4623, %v4622
        %v4729 = vpack.c.bf16 %v4625, %v4624
        %v4730 = vpack.c.bf16 %v4627, %v4626
        %v4731 = vpack.c.bf16 %v4629, %v4628
        %v4732 = vpack.c.bf16 %v4631, %v4630
        %v4733 = vpack.c.bf16 %v4633, %v4632
        %v4734 = vpack.c.bf16 %v4635, %v4634
        %v4735 = vpack.c.bf16 %v4637, %v4636
        %v4736 = vpack.c.bf16 %v4639, %v4638
        %v4737 = vpack.c.bf16 %v4641, %v4640
        %4738 = vmatprep.subr.bf16.mxu0 0
        %4739 = vmatpush1.bf16.msra.mxu0 0
        %4740 = vmatprep.subr.bf16.mxu0 0
        %4741 = vmatpush1.bf16.msra.mxu0 0
        %4742 = vmatprep.subr.bf16.mxu0 0
        %4743 = vmatpush1.bf16.msra.mxu0 0
        %4744 = vmatprep.subr.bf16.mxu0 0
        %4745 = vmatpush1.bf16.msra.mxu0 0
        %4746 = vmatprep.subr.bf16.mxu0 0
        %4747 = vmatpush1.bf16.msra.mxu0 %v4709
        %4748 = vmatprep.subr.bf16.mxu0 0
        %4749 = vmatpush1.bf16.msra.mxu0 %v4708
        %4750 = vmatprep.subr.bf16.mxu0 0
        %4751 = vmatpush1.bf16.msra.mxu0 %v4707
        %4752 = vmatprep.subr.bf16.mxu0 0
        %4753 = vmatpush1.bf16.msra.mxu0 %v4706
        %4754 = vmatprep.subr.bf16.mxu0 0
        %4755 = vmatpush2.bf16.msra.mxu0 0
        %4756 = vmatprep.subr.bf16.mxu0 0
        %4757 = vmatpush2.bf16.msra.mxu0 0
        %4758 = vmatprep.subr.bf16.mxu0 0
        %4759 = vmatpush2.bf16.msra.mxu0 0
        %4760 = vmatprep.subr.bf16.mxu0 0
        %4761 = vmatpush2.bf16.msra.mxu0 0
        %4762 = vmatprep.subr.bf16.mxu0 0
        %4763 = vmatpush2.bf16.msra.mxu0 0
        %4764 = vmatprep.subr.bf16.mxu0 0
        %4765 = vmatpush2.bf16.msra.mxu0 0
        %4766 = vmatprep.subr.bf16.mxu0 0
        %4767 = vmatpush2.bf16.msra.mxu0 0
        %4768 = vmatprep.subr.bf16.mxu0 0
        %4769 = vmatpush2.bf16.msra.mxu0 0
        %4770 = vmatprep.mubr.bf16.mxu0 0
        %4771 = vmatmul.mubr.bf16.gmra.mxu0 %v713
        %v4772 = vpop.f32.mrf.mxu0
        %v4773 = vadd.f32 0.0, %v4772
        %v4774 = vpop.f32.mrf.mxu0
        %v4775 = vpop.f32.mrf.mxu0
        %v4776 = vadd.f32 0.0, %v4775
        %v4777 = vpop.f32.mrf.mxu0
        %4778 = vdwg.mxu0
        %4779 = vmatprep.subr.bf16.mxu0 0
        %4780 = vmatpush1.bf16.msra.mxu0 0
        %4781 = vmatprep.subr.bf16.mxu0 0
        %4782 = vmatpush1.bf16.msra.mxu0 0
        %4783 = vmatprep.subr.bf16.mxu0 0
        %4784 = vmatpush1.bf16.msra.mxu0 0
        %4785 = vmatprep.subr.bf16.mxu0 0
        %4786 = vmatpush1.bf16.msra.mxu0 0
        %4787 = vmatprep.subr.bf16.mxu0 0
        %4788 = vmatpush1.bf16.msra.mxu0 %v4713
        %4789 = vmatprep.subr.bf16.mxu0 0
        %4790 = vmatpush1.bf16.msra.mxu0 %v4712
        %4791 = vmatprep.subr.bf16.mxu0 0
        %4792 = vmatpush1.bf16.msra.mxu0 %v4711
        %4793 = vmatprep.subr.bf16.mxu0 0
        %4794 = vmatpush1.bf16.msra.mxu0 %v4710
        %4795 = vmatprep.subr.bf16.mxu0 0
        %4796 = vmatpush2.bf16.msra.mxu0 0
        %4797 = vmatprep.subr.bf16.mxu0 0
        %4798 = vmatpush2.bf16.msra.mxu0 0
        %4799 = vmatprep.subr.bf16.mxu0 0
        %4800 = vmatpush2.bf16.msra.mxu0 0
        %4801 = vmatprep.subr.bf16.mxu0 0
        %4802 = vmatpush2.bf16.msra.mxu0 0
        %4803 = vmatprep.subr.bf16.mxu0 0
        %4804 = vmatpush2.bf16.msra.mxu0 0
        %4805 = vmatprep.subr.bf16.mxu0 0
        %4806 = vmatpush2.bf16.msra.mxu0 0
        %4807 = vmatprep.subr.bf16.mxu0 0
        %4808 = vmatpush2.bf16.msra.mxu0 0
        %4809 = vmatprep.subr.bf16.mxu0 0
        %4810 = vmatpush2.bf16.msra.mxu0 0
        %4811 = vmatprep.mubr.bf16.mxu0 0
        %4812 = vmatmul.mubr.bf16.gmra.mxu0 %v716
        %v4813 = vpop.f32.mrf.mxu0
        %v4814 = vadd.f32 0.0, %v4813
        %v4815 = vpop.f32.mrf.mxu0
        %v4816 = vpop.f32.mrf.mxu0
        %v4817 = vadd.f32 0.0, %v4816
        %v4818 = vpop.f32.mrf.mxu0
        %4819 = vdwg.mxu0
        %4820 = vmatprep.subr.bf16.mxu0 0
        %4821 = vmatpush1.bf16.msra.mxu0 0
        %4822 = vmatprep.subr.bf16.mxu0 0
        %4823 = vmatpush1.bf16.msra.mxu0 0
        %4824 = vmatprep.subr.bf16.mxu0 0
        %4825 = vmatpush1.bf16.msra.mxu0 0
        %4826 = vmatprep.subr.bf16.mxu0 0
        %4827 = vmatpush1.bf16.msra.mxu0 0
        %4828 = vmatprep.subr.bf16.mxu0 0
        %4829 = vmatpush1.bf16.msra.mxu0 %v4717
        %4830 = vmatprep.subr.bf16.mxu0 0
        %4831 = vmatpush1.bf16.msra.mxu0 %v4716
        %4832 = vmatprep.subr.bf16.mxu0 0
        %4833 = vmatpush1.bf16.msra.mxu0 %v4715
        %4834 = vmatprep.subr.bf16.mxu0 0
        %4835 = vmatpush1.bf16.msra.mxu0 %v4714
        %4836 = vmatprep.subr.bf16.mxu0 0
        %4837 = vmatpush2.bf16.msra.mxu0 0
        %4838 = vmatprep.subr.bf16.mxu0 0
        %4839 = vmatpush2.bf16.msra.mxu0 0
        %4840 = vmatprep.subr.bf16.mxu0 0
        %4841 = vmatpush2.bf16.msra.mxu0 0
        %4842 = vmatprep.subr.bf16.mxu0 0
        %4843 = vmatpush2.bf16.msra.mxu0 0
        %4844 = vmatprep.subr.bf16.mxu0 0
        %4845 = vmatpush2.bf16.msra.mxu0 0
        %4846 = vmatprep.subr.bf16.mxu0 0
        %4847 = vmatpush2.bf16.msra.mxu0 0
        %4848 = vmatprep.subr.bf16.mxu0 0
        %4849 = vmatpush2.bf16.msra.mxu0 0
        %4850 = vmatprep.subr.bf16.mxu0 0
        %4851 = vmatpush2.bf16.msra.mxu0 0
        %4852 = vmatprep.mubr.bf16.mxu0 0
        %4853 = vmatmul.mubr.bf16.gmra.mxu0 %v719
        %v4854 = vpop.f32.mrf.mxu0
        %v4855 = vadd.f32 0.0, %v4854
        %v4856 = vpop.f32.mrf.mxu0
        %v4857 = vpop.f32.mrf.mxu0
        %v4858 = vadd.f32 0.0, %v4857
        %v4859 = vpop.f32.mrf.mxu0
        %4860 = vdwg.mxu0
        %4861 = vmatprep.subr.bf16.mxu0 0
        %4862 = vmatpush1.bf16.msra.mxu0 0
        %4863 = vmatprep.subr.bf16.mxu0 0
        %4864 = vmatpush1.bf16.msra.mxu0 0
        %4865 = vmatprep.subr.bf16.mxu0 0
        %4866 = vmatpush1.bf16.msra.mxu0 0
        %4867 = vmatprep.subr.bf16.mxu0 0
        %4868 = vmatpush1.bf16.msra.mxu0 0
        %4869 = vmatprep.subr.bf16.mxu0 0
        %4870 = vmatpush1.bf16.msra.mxu0 %v4721
        %4871 = vmatprep.subr.bf16.mxu0 0
        %4872 = vmatpush1.bf16.msra.mxu0 %v4720
        %4873 = vmatprep.subr.bf16.mxu0 0
        %4874 = vmatpush1.bf16.msra.mxu0 %v4719
        %4875 = vmatprep.subr.bf16.mxu0 0
        %4876 = vmatpush1.bf16.msra.mxu0 %v4718
        %4877 = vmatprep.subr.bf16.mxu0 0
        %4878 = vmatpush2.bf16.msra.mxu0 0
        %4879 = vmatprep.subr.bf16.mxu0 0
        %4880 = vmatpush2.bf16.msra.mxu0 0
        %4881 = vmatprep.subr.bf16.mxu0 0
        %4882 = vmatpush2.bf16.msra.mxu0 0
        %4883 = vmatprep.subr.bf16.mxu0 0
        %4884 = vmatpush2.bf16.msra.mxu0 0
        %4885 = vmatprep.subr.bf16.mxu0 0
        %4886 = vmatpush2.bf16.msra.mxu0 0
        %4887 = vmatprep.subr.bf16.mxu0 0
        %4888 = vmatpush2.bf16.msra.mxu0 0
        %4889 = vmatprep.subr.bf16.mxu0 0
        %4890 = vmatpush2.bf16.msra.mxu0 0
        %4891 = vmatprep.subr.bf16.mxu0 0
        %4892 = vmatpush2.bf16.msra.mxu0 0
        %4893 = vmatprep.mubr.bf16.mxu0 0
        %4894 = vmatmul.mubr.bf16.gmra.mxu0 %v722
        %v4895 = vpop.f32.mrf.mxu0
        %v4896 = vadd.f32 0.0, %v4895
        %v4897 = vpop.f32.mrf.mxu0
        %v4898 = vpop.f32.mrf.mxu0
        %v4899 = vadd.f32 0.0, %v4898
        %v4900 = vpop.f32.mrf.mxu0
        %4901 = vdwg.mxu0
        %4902 = vmatprep.subr.bf16.mxu0 0
        %4903 = vmatpush1.bf16.msra.mxu0 0
        %4904 = vmatprep.subr.bf16.mxu0 0
        %4905 = vmatpush1.bf16.msra.mxu0 0
        %4906 = vmatprep.subr.bf16.mxu0 0
        %4907 = vmatpush1.bf16.msra.mxu0 0
        %4908 = vmatprep.subr.bf16.mxu0 0
        %4909 = vmatpush1.bf16.msra.mxu0 0
        %4910 = vmatprep.subr.bf16.mxu0 0
        %4911 = vmatpush1.bf16.msra.mxu0 %v4725
        %4912 = vmatprep.subr.bf16.mxu0 0
        %4913 = vmatpush1.bf16.msra.mxu0 %v4724
        %4914 = vmatprep.subr.bf16.mxu0 0
        %4915 = vmatpush1.bf16.msra.mxu0 %v4723
        %4916 = vmatprep.subr.bf16.mxu0 0
        %4917 = vmatpush1.bf16.msra.mxu0 %v4722
        %4918 = vmatprep.subr.bf16.mxu0 0
        %4919 = vmatpush2.bf16.msra.mxu0 0
        %4920 = vmatprep.subr.bf16.mxu0 0
        %4921 = vmatpush2.bf16.msra.mxu0 0
        %4922 = vmatprep.subr.bf16.mxu0 0
        %4923 = vmatpush2.bf16.msra.mxu0 0
        %4924 = vmatprep.subr.bf16.mxu0 0
        %4925 = vmatpush2.bf16.msra.mxu0 0
        %4926 = vmatprep.subr.bf16.mxu0 0
        %4927 = vmatpush2.bf16.msra.mxu0 0
        %4928 = vmatprep.subr.bf16.mxu0 0
        %4929 = vmatpush2.bf16.msra.mxu0 0
        %4930 = vmatprep.subr.bf16.mxu0 0
        %4931 = vmatpush2.bf16.msra.mxu0 0
        %4932 = vmatprep.subr.bf16.mxu0 0
        %4933 = vmatpush2.bf16.msra.mxu0 0
        %4934 = vmatprep.mubr.bf16.mxu0 0
        %4935 = vmatmul.mubr.bf16.gmra.mxu0 %v725
        %v4936 = vpop.f32.mrf.mxu0
        %v4937 = vadd.f32 0.0, %v4936
        %v4938 = vpop.f32.mrf.mxu0
        %v4939 = vpop.f32.mrf.mxu0
        %v4940 = vadd.f32 0.0, %v4939
        %v4941 = vpop.f32.mrf.mxu0
        %4942 = vdwg.mxu0
        %4943 = vmatprep.subr.bf16.mxu0 0
        %4944 = vmatpush1.bf16.msra.mxu0 0
        %4945 = vmatprep.subr.bf16.mxu0 0
        %4946 = vmatpush1.bf16.msra.mxu0 0
        %4947 = vmatprep.subr.bf16.mxu0 0
        %4948 = vmatpush1.bf16.msra.mxu0 0
        %4949 = vmatprep.subr.bf16.mxu0 0
        %4950 = vmatpush1.bf16.msra.mxu0 0
        %4951 = vmatprep.subr.bf16.mxu0 0
        %4952 = vmatpush1.bf16.msra.mxu0 %v4729
        %4953 = vmatprep.subr.bf16.mxu0 0
        %4954 = vmatpush1.bf16.msra.mxu0 %v4728
        %4955 = vmatprep.subr.bf16.mxu0 0
        %4956 = vmatpush1.bf16.msra.mxu0 %v4727
        %4957 = vmatprep.subr.bf16.mxu0 0
        %4958 = vmatpush1.bf16.msra.mxu0 %v4726
        %4959 = vmatprep.subr.bf16.mxu0 0
        %4960 = vmatpush2.bf16.msra.mxu0 0
        %4961 = vmatprep.subr.bf16.mxu0 0
        %4962 = vmatpush2.bf16.msra.mxu0 0
        %4963 = vmatprep.subr.bf16.mxu0 0
        %4964 = vmatpush2.bf16.msra.mxu0 0
        %4965 = vmatprep.subr.bf16.mxu0 0
        %4966 = vmatpush2.bf16.msra.mxu0 0
        %4967 = vmatprep.subr.bf16.mxu0 0
        %4968 = vmatpush2.bf16.msra.mxu0 0
        %4969 = vmatprep.subr.bf16.mxu0 0
        %4970 = vmatpush2.bf16.msra.mxu0 0
        %4971 = vmatprep.subr.bf16.mxu0 0
        %4972 = vmatpush2.bf16.msra.mxu0 0
        %4973 = vmatprep.subr.bf16.mxu0 0
        %4974 = vmatpush2.bf16.msra.mxu0 0
        %4975 = vmatprep.mubr.bf16.mxu0 0
        %4976 = vmatmul.mubr.bf16.gmra.mxu0 %v728
        %v4977 = vpop.f32.mrf.mxu0
        %v4978 = vadd.f32 0.0, %v4977
        %v4979 = vpop.f32.mrf.mxu0
        %v4980 = vpop.f32.mrf.mxu0
        %v4981 = vadd.f32 0.0, %v4980
        %v4982 = vpop.f32.mrf.mxu0
        %4983 = vdwg.mxu0
        %4984 = vmatprep.subr.bf16.mxu0 0
        %4985 = vmatpush1.bf16.msra.mxu0 0
        %4986 = vmatprep.subr.bf16.mxu0 0
        %4987 = vmatpush1.bf16.msra.mxu0 0
        %4988 = vmatprep.subr.bf16.mxu0 0
        %4989 = vmatpush1.bf16.msra.mxu0 0
        %4990 = vmatprep.subr.bf16.mxu0 0
        %4991 = vmatpush1.bf16.msra.mxu0 0
        %4992 = vmatprep.subr.bf16.mxu0 0
        %4993 = vmatpush1.bf16.msra.mxu0 %v4733
        %4994 = vmatprep.subr.bf16.mxu0 0
        %4995 = vmatpush1.bf16.msra.mxu0 %v4732
        %4996 = vmatprep.subr.bf16.mxu0 0
        %4997 = vmatpush1.bf16.msra.mxu0 %v4731
        %4998 = vmatprep.subr.bf16.mxu0 0
        %4999 = vmatpush1.bf16.msra.mxu0 %v4730
        %5000 = vmatprep.subr.bf16.mxu0 0
        %5001 = vmatpush2.bf16.msra.mxu0 0
        %5002 = vmatprep.subr.bf16.mxu0 0
        %5003 = vmatpush2.bf16.msra.mxu0 0
        %5004 = vmatprep.subr.bf16.mxu0 0
        %5005 = vmatpush2.bf16.msra.mxu0 0
        %5006 = vmatprep.subr.bf16.mxu0 0
        %5007 = vmatpush2.bf16.msra.mxu0 0
        %5008 = vmatprep.subr.bf16.mxu0 0
        %5009 = vmatpush2.bf16.msra.mxu0 0
        %5010 = vmatprep.subr.bf16.mxu0 0
        %5011 = vmatpush2.bf16.msra.mxu0 0
        %5012 = vmatprep.subr.bf16.mxu0 0
        %5013 = vmatpush2.bf16.msra.mxu0 0
        %5014 = vmatprep.subr.bf16.mxu0 0
        %5015 = vmatpush2.bf16.msra.mxu0 0
        %5016 = vmatprep.mubr.bf16.mxu0 0
        %5017 = vmatmul.mubr.bf16.gmra.mxu0 %v731
        %v5018 = vpop.f32.mrf.mxu0
        %v5019 = vadd.f32 0.0, %v5018
        %v5020 = vpop.f32.mrf.mxu0
        %v5021 = vpop.f32.mrf.mxu0
        %v5022 = vadd.f32 0.0, %v5021
        %v5023 = vpop.f32.mrf.mxu0
        %5024 = vdwg.mxu0
        %5025 = vmatprep.subr.bf16.mxu0 0
        %5026 = vmatpush1.bf16.msra.mxu0 0
        %5027 = vmatprep.subr.bf16.mxu0 0
        %5028 = vmatpush1.bf16.msra.mxu0 0
        %5029 = vmatprep.subr.bf16.mxu0 0
        %5030 = vmatpush1.bf16.msra.mxu0 0
        %5031 = vmatprep.subr.bf16.mxu0 0
        %5032 = vmatpush1.bf16.msra.mxu0 0
        %5033 = vmatprep.subr.bf16.mxu0 0
        %5034 = vmatpush1.bf16.msra.mxu0 %v4737
        %5035 = vmatprep.subr.bf16.mxu0 0
        %5036 = vmatpush1.bf16.msra.mxu0 %v4736
        %5037 = vmatprep.subr.bf16.mxu0 0
        %5038 = vmatpush1.bf16.msra.mxu0 %v4735
        %5039 = vmatprep.subr.bf16.mxu0 0
        %5040 = vmatpush1.bf16.msra.mxu0 %v4734
        %5041 = vmatprep.subr.bf16.mxu0 0
        %5042 = vmatpush2.bf16.msra.mxu0 0
        %5043 = vmatprep.subr.bf16.mxu0 0
        %5044 = vmatpush2.bf16.msra.mxu0 0
        %5045 = vmatprep.subr.bf16.mxu0 0
        %5046 = vmatpush2.bf16.msra.mxu0 0
        %5047 = vmatprep.subr.bf16.mxu0 0
        %5048 = vmatpush2.bf16.msra.mxu0 0
        %5049 = vmatprep.subr.bf16.mxu0 0
        %5050 = vmatpush2.bf16.msra.mxu0 0
        %5051 = vmatprep.subr.bf16.mxu0 0
        %5052 = vmatpush2.bf16.msra.mxu0 0
        %5053 = vmatprep.subr.bf16.mxu0 0
        %5054 = vmatpush2.bf16.msra.mxu0 0
        %5055 = vmatprep.subr.bf16.mxu0 0
        %5056 = vmatpush2.bf16.msra.mxu0 0
        %5057 = vmatprep.mubr.bf16.mxu0 0
        %5058 = vmatmul.mubr.bf16.gmra.mxu0 %v734
        %v5059 = vpop.f32.mrf.mxu0
        %v5060 = vadd.f32 0.0, %v5059
        %v5061 = vpop.f32.mrf.mxu0
        %v5062 = vpop.f32.mrf.mxu0
        %v5063 = vadd.f32 0.0, %v5062
        %v5064 = vpop.f32.mrf.mxu0
        %5065 = vdwg.mxu0
        %v5066 = vpack.c.bf16 %v4776, %v4773
        %v5067 = vpack.c.bf16 %v4817, %v4814
        %v5068 = vpack.c.bf16 %v4858, %v4855
        %v5069 = vpack.c.bf16 %v4899, %v4896
        %v5070 = vpack.c.bf16 %v4940, %v4937
        %v5071 = vpack.c.bf16 %v4981, %v4978
        %v5072 = vpack.c.bf16 %v5022, %v5019
        %v5073 = vpack.c.bf16 %v5063, %v5060
        %v5074 = vld [vmem:[%s7] sm:$0xf]
        %v5075 = vld [vmem:[%s7 + $0x4] sm:$0xf]
        %v5076 = vld [vmem:[%s7 + $0x8] sm:$0xf]
        %v5077 = vld [vmem:[%s7 + $0xc] sm:$0xf]
        %v5078 = vld [vmem:[%s7 + $0x10] sm:$0xf]
        %v5079 = vld [vmem:[%s7 + $0x14] sm:$0xf]
        %v5080 = vld [vmem:[%s7 + $0x18] sm:$0xf]
        %v5081 = vld [vmem:[%s7 + $0x1c] sm:$0xf]
        %v5082 = vld [vmem:[%s8] sm:$0x1]
        %v5084 = vlaneseq
        %v5085 = vshrl.u32 %v5084, 7
        %v5086 = vsub.s32 0, %v5085
        %v5087 = vrot.slane %v5082, %v5086
        %v5097 = vunpack.c.l.b16 %v5074
        %v5098 = vunpack.c.l.b16 %v5075
        %v5099 = vunpack.c.l.b16 %v5076
        %v5100 = vunpack.c.l.b16 %v5077
        %v5101 = vunpack.c.l.b16 %v5078
        %v5102 = vunpack.c.l.b16 %v5079
        %v5103 = vunpack.c.l.b16 %v5080
        %v5104 = vunpack.c.l.b16 %v5081
        %v5105 = vpack.c.b16 %v5098, %v5097
        %v5106 = vpack.c.b16 %v5100, %v5099
        %v5107 = vpack.c.b16 %v5102, %v5101
        %v5108 = vpack.c.b16 %v5104, %v5103
        %v5114 = vsel %vm711, %v5066, 0
        %v5117 = vsel %vm711, %v5067, 0
        %v5120 = vsel %vm711, %v5068, 0
        %v5123 = vsel %vm711, %v5069, 0
        %v5126 = vsel %vm711, %v5070, 0
        %v5129 = vsel %vm711, %v5071, 0
        %v5132 = vsel %vm711, %v5072, 0
        %v5135 = vsel %vm711, %v5073, 0
        %5137 = vmatprep.subr.bf16.mxu0 0
        %5138 = vmatpush1.bf16.msra.mxu0 0
        %5139 = vmatprep.subr.bf16.mxu0 0
        %5140 = vmatpush1.bf16.msra.mxu0 0
        %5141 = vmatprep.subr.bf16.mxu0 0
        %5142 = vmatpush1.bf16.msra.mxu0 0
        %5143 = vmatprep.subr.bf16.mxu0 0
        %5144 = vmatpush1.bf16.msra.mxu0 0
        %5145 = vmatprep.subr.bf16.mxu0 0
        %5146 = vmatpush1.bf16.msra.mxu0 %v5108
        %5147 = vmatprep.subr.bf16.mxu0 0
        %5148 = vmatpush1.bf16.msra.mxu0 %v5107
        %5149 = vmatprep.subr.bf16.mxu0 0
        %5150 = vmatpush1.bf16.msra.mxu0 %v5106
        %5151 = vmatprep.subr.bf16.mxu0 0
        %5152 = vmatpush1.bf16.msra.mxu0 %v5105
        %5153 = vmatprep.subr.bf16.mxu0 0
        %5154 = vmatpush2.bf16.msra.mxu0 0
        %5155 = vmatprep.subr.bf16.mxu0 0
        %5156 = vmatpush2.bf16.msra.mxu0 0
        %5157 = vmatprep.subr.bf16.mxu0 0
        %5158 = vmatpush2.bf16.msra.mxu0 0
        %5159 = vmatprep.subr.bf16.mxu0 0
        %5160 = vmatpush2.bf16.msra.mxu0 0
        %5161 = vmatprep.subr.bf16.mxu0 0
        %5162 = vmatpush2.bf16.msra.mxu0 0
        %5163 = vmatprep.subr.bf16.mxu0 0
        %5164 = vmatpush2.bf16.msra.mxu0 0
        %5165 = vmatprep.subr.bf16.mxu0 0
        %5166 = vmatpush2.bf16.msra.mxu0 0
        %5167 = vmatprep.subr.bf16.mxu0 0
        %5168 = vmatpush2.bf16.msra.mxu0 0
        %5169 = vmatprep.mubr.bf16.mxu0 0
        %5170 = vmatmul.mubr.bf16.gmra.mxu0 %v5114
        %v5171 = vpop.f32.mrf.mxu0
        %v5172 = vadd.f32 %v5087, %v5171
        %v5173 = vpop.f32.mrf.mxu0
        %v5174 = vpop.f32.mrf.mxu0
        %v5175 = vadd.f32 %v5087, %v5174
        %v5176 = vpop.f32.mrf.mxu0
        %5177 = vmatprep.mubr.bf16.mxu0 0
        %5178 = vmatmul.mubr.bf16.gmra.mxu0 %v5117
        %v5179 = vpop.f32.mrf.mxu0
        %v5180 = vadd.f32 %v5087, %v5179
        %v5181 = vpop.f32.mrf.mxu0
        %v5182 = vpop.f32.mrf.mxu0
        %v5183 = vadd.f32 %v5087, %v5182
        %v5184 = vpop.f32.mrf.mxu0
        %5185 = vmatprep.mubr.bf16.mxu0 0
        %5186 = vmatmul.mubr.bf16.gmra.mxu0 %v5120
        %v5187 = vpop.f32.mrf.mxu0
        %v5188 = vadd.f32 %v5087, %v5187
        %v5189 = vpop.f32.mrf.mxu0
        %v5190 = vpop.f32.mrf.mxu0
        %v5191 = vadd.f32 %v5087, %v5190
        %v5192 = vpop.f32.mrf.mxu0
        %5193 = vmatprep.mubr.bf16.mxu0 0
        %5194 = vmatmul.mubr.bf16.gmra.mxu0 %v5123
        %v5195 = vpop.f32.mrf.mxu0
        %v5196 = vadd.f32 %v5087, %v5195
        %v5197 = vpop.f32.mrf.mxu0
        %v5198 = vpop.f32.mrf.mxu0
        %v5199 = vadd.f32 %v5087, %v5198
        %v5200 = vpop.f32.mrf.mxu0
        %5201 = vmatprep.mubr.bf16.mxu0 0
        %5202 = vmatmul.mubr.bf16.gmra.mxu0 %v5126
        %v5203 = vpop.f32.mrf.mxu0
        %v5204 = vadd.f32 %v5087, %v5203
        %v5205 = vpop.f32.mrf.mxu0
        %v5206 = vpop.f32.mrf.mxu0
        %v5207 = vadd.f32 %v5087, %v5206
        %v5208 = vpop.f32.mrf.mxu0
        %5209 = vmatprep.mubr.bf16.mxu0 0
        %5210 = vmatmul.mubr.bf16.gmra.mxu0 %v5129
        %v5211 = vpop.f32.mrf.mxu0
        %v5212 = vadd.f32 %v5087, %v5211
        %v5213 = vpop.f32.mrf.mxu0
        %v5214 = vpop.f32.mrf.mxu0
        %v5215 = vadd.f32 %v5087, %v5214
        %v5216 = vpop.f32.mrf.mxu0
        %5217 = vmatprep.mubr.bf16.mxu0 0
        %5218 = vmatmul.mubr.bf16.gmra.mxu0 %v5132
        %v5219 = vpop.f32.mrf.mxu0
        %v5220 = vadd.f32 %v5087, %v5219
        %v5221 = vpop.f32.mrf.mxu0
        %v5222 = vpop.f32.mrf.mxu0
        %v5223 = vadd.f32 %v5087, %v5222
        %v5224 = vpop.f32.mrf.mxu0
        %5225 = vmatprep.mubr.bf16.mxu0 0
        %5226 = vmatmul.mubr.bf16.gmra.mxu0 %v5135
        %v5227 = vpop.f32.mrf.mxu0
        %v5228 = vadd.f32 %v5087, %v5227
        %v5229 = vpop.f32.mrf.mxu0
        %v5230 = vpop.f32.mrf.mxu0
        %v5231 = vadd.f32 %v5087, %v5230
        %v5232 = vpop.f32.mrf.mxu0
        %5233 = vdwg.mxu0
        %v5234 = vmax.f32 %v5172, 0.0
        %v5235 = vmax.f32 %v5175, 0.0
        %v5236 = vmax.f32 %v5180, 0.0
        %v5237 = vmax.f32 %v5183, 0.0
        %v5238 = vmax.f32 %v5188, 0.0
        %v5239 = vmax.f32 %v5191, 0.0
        %v5240 = vmax.f32 %v5196, 0.0
        %v5241 = vmax.f32 %v5199, 0.0
        %v5242 = vmax.f32 %v5204, 0.0
        %v5243 = vmax.f32 %v5207, 0.0
        %v5244 = vmax.f32 %v5212, 0.0
        %v5245 = vmax.f32 %v5215, 0.0
        %v5246 = vmax.f32 %v5220, 0.0
        %v5247 = vmax.f32 %v5223, 0.0
        %v5248 = vmax.f32 %v5228, 0.0
        %v5249 = vmax.f32 %v5231, 0.0
        %v5250 = vpack.c.bf16 %v5235, %v5234
        %v5251 = vpack.c.bf16 %v5237, %v5236
        %v5252 = vpack.c.bf16 %v5239, %v5238
        %v5253 = vpack.c.bf16 %v5241, %v5240
        %v5254 = vpack.c.bf16 %v5243, %v5242
        %v5255 = vpack.c.bf16 %v5245, %v5244
        %v5256 = vpack.c.bf16 %v5247, %v5246
        %v5257 = vpack.c.bf16 %v5249, %v5248
        %v5258 = vld [vmem:[%s9] sm:$0xf]
        %v5259 = vld [vmem:[%s9 + $0x4] sm:$0xf]
        %v5260 = vld [vmem:[%s9 + $0x8] sm:$0xf]
        %v5261 = vld [vmem:[%s9 + $0xc] sm:$0xf]
        %v5262 = vld [vmem:[%s9 + $0x10] sm:$0xf]
        %v5263 = vld [vmem:[%s9 + $0x14] sm:$0xf]
        %v5264 = vld [vmem:[%s9 + $0x18] sm:$0xf]
        %v5265 = vld [vmem:[%s9 + $0x1c] sm:$0xf]
        %v5266 = vld [vmem:[%s9 + $0x20] sm:$0xf]
        %v5267 = vld [vmem:[%s9 + $0x24] sm:$0xf]
        %v5268 = vld [vmem:[%s9 + $0x28] sm:$0xf]
        %v5269 = vld [vmem:[%s9 + $0x2c] sm:$0xf]
        %v5270 = vld [vmem:[%s9 + $0x30] sm:$0xf]
        %v5271 = vld [vmem:[%s9 + $0x34] sm:$0xf]
        %v5272 = vld [vmem:[%s9 + $0x38] sm:$0xf]
        %v5273 = vld [vmem:[%s9 + $0x3c] sm:$0xf]
        %v5274 = vld [vmem:[%s10] sm:$0x1]
        %v5276 = vlaneseq
        %v5277 = vshrl.u32 %v5276, 7
        %v5278 = vsub.s32 0, %v5277
        %v5279 = vrot.slane %v5274, %v5278
        %v5297 = vunpack.c.l.b16 %v5258
        %v5298 = vunpack.c.l.b16 %v5259
        %v5299 = vunpack.c.l.b16 %v5260
        %v5300 = vunpack.c.l.b16 %v5261
        %v5301 = vunpack.c.l.b16 %v5262
        %v5302 = vunpack.c.l.b16 %v5263
        %v5303 = vunpack.c.l.b16 %v5264
        %v5304 = vunpack.c.l.b16 %v5265
        %v5305 = vunpack.c.l.b16 %v5266
        %v5306 = vunpack.c.l.b16 %v5267
        %v5307 = vunpack.c.l.b16 %v5268
        %v5308 = vunpack.c.l.b16 %v5269
        %v5309 = vunpack.c.l.b16 %v5270
        %v5310 = vunpack.c.l.b16 %v5271
        %v5311 = vunpack.c.l.b16 %v5272
        %v5312 = vunpack.c.l.b16 %v5273
        %v5313 = vpack.c.b16 %v5298, %v5297
        %v5314 = vpack.c.b16 %v5300, %v5299
        %v5315 = vpack.c.b16 %v5302, %v5301
        %v5316 = vpack.c.b16 %v5304, %v5303
        %v5317 = vpack.c.b16 %v5306, %v5305
        %v5318 = vpack.c.b16 %v5308, %v5307
        %v5319 = vpack.c.b16 %v5310, %v5309
        %v5320 = vpack.c.b16 %v5312, %v5311
        %5329 = vmatprep.subr.bf16.mxu0 0
        %5330 = vmatpush1.bf16.msra.mxu0 %v5320
        %5331 = vmatprep.subr.bf16.mxu0 0
        %5332 = vmatpush1.bf16.msra.mxu0 %v5319
        %5333 = vmatprep.subr.bf16.mxu0 0
        %5334 = vmatpush1.bf16.msra.mxu0 %v5318
        %5335 = vmatprep.subr.bf16.mxu0 0
        %5336 = vmatpush1.bf16.msra.mxu0 %v5317
        %5337 = vmatprep.subr.bf16.mxu0 0
        %5338 = vmatpush1.bf16.msra.mxu0 %v5316
        %5339 = vmatprep.subr.bf16.mxu0 0
        %5340 = vmatpush1.bf16.msra.mxu0 %v5315
        %5341 = vmatprep.subr.bf16.mxu0 0
        %5342 = vmatpush1.bf16.msra.mxu0 %v5314
        %5343 = vmatprep.subr.bf16.mxu0 0
        %5344 = vmatpush1.bf16.msra.mxu0 %v5313
        %5345 = vmatprep.subr.bf16.mxu0 0
        %5346 = vmatpush2.bf16.msra.mxu0 0
        %5347 = vmatprep.subr.bf16.mxu0 0
        %5348 = vmatpush2.bf16.msra.mxu0 0
        %5349 = vmatprep.subr.bf16.mxu0 0
        %5350 = vmatpush2.bf16.msra.mxu0 0
        %5351 = vmatprep.subr.bf16.mxu0 0
        %5352 = vmatpush2.bf16.msra.mxu0 0
        %5353 = vmatprep.subr.bf16.mxu0 0
        %5354 = vmatpush2.bf16.msra.mxu0 0
        %5355 = vmatprep.subr.bf16.mxu0 0
        %5356 = vmatpush2.bf16.msra.mxu0 0
        %5357 = vmatprep.subr.bf16.mxu0 0
        %5358 = vmatpush2.bf16.msra.mxu0 0
        %5359 = vmatprep.subr.bf16.mxu0 0
        %5360 = vmatpush2.bf16.msra.mxu0 0
        %5361 = vmatprep.mubr.bf16.mxu0 0
        %5362 = vmatmul.mubr.bf16.gmra.mxu0 %v5250
        %v5363 = vpop.f32.mrf.mxu0
        %v5364 = vadd.f32 %v5279, %v5363
        %v5365 = vpop.f32.mrf.mxu0
        %v5366 = vpop.f32.mrf.mxu0
        %v5367 = vadd.f32 %v5279, %v5366
        %v5368 = vpop.f32.mrf.mxu0
        %5369 = vmatprep.mubr.bf16.mxu0 0
        %5370 = vmatmul.mubr.bf16.gmra.mxu0 %v5251
        %v5371 = vpop.f32.mrf.mxu0
        %v5372 = vadd.f32 %v5279, %v5371
        %v5373 = vpop.f32.mrf.mxu0
        %v5374 = vpop.f32.mrf.mxu0
        %v5375 = vadd.f32 %v5279, %v5374
        %v5376 = vpop.f32.mrf.mxu0
        %5377 = vmatprep.mubr.bf16.mxu0 0
        %5378 = vmatmul.mubr.bf16.gmra.mxu0 %v5252
        %v5379 = vpop.f32.mrf.mxu0
        %v5380 = vadd.f32 %v5279, %v5379
        %v5381 = vpop.f32.mrf.mxu0
        %v5382 = vpop.f32.mrf.mxu0
        %v5383 = vadd.f32 %v5279, %v5382
        %v5384 = vpop.f32.mrf.mxu0
        %5385 = vmatprep.mubr.bf16.mxu0 0
        %5386 = vmatmul.mubr.bf16.gmra.mxu0 %v5253
        %v5387 = vpop.f32.mrf.mxu0
        %v5388 = vadd.f32 %v5279, %v5387
        %v5389 = vpop.f32.mrf.mxu0
        %v5390 = vpop.f32.mrf.mxu0
        %v5391 = vadd.f32 %v5279, %v5390
        %v5392 = vpop.f32.mrf.mxu0
        %5393 = vmatprep.mubr.bf16.mxu0 0
        %5394 = vmatmul.mubr.bf16.gmra.mxu0 %v5254
        %v5395 = vpop.f32.mrf.mxu0
        %v5396 = vadd.f32 %v5279, %v5395
        %v5397 = vpop.f32.mrf.mxu0
        %v5398 = vpop.f32.mrf.mxu0
        %v5399 = vadd.f32 %v5279, %v5398
        %v5400 = vpop.f32.mrf.mxu0
        %5401 = vmatprep.mubr.bf16.mxu0 0
        %5402 = vmatmul.mubr.bf16.gmra.mxu0 %v5255
        %v5403 = vpop.f32.mrf.mxu0
        %v5404 = vadd.f32 %v5279, %v5403
        %v5405 = vpop.f32.mrf.mxu0
        %v5406 = vpop.f32.mrf.mxu0
        %v5407 = vadd.f32 %v5279, %v5406
        %v5408 = vpop.f32.mrf.mxu0
        %5409 = vmatprep.mubr.bf16.mxu0 0
        %5410 = vmatmul.mubr.bf16.gmra.mxu0 %v5256
        %v5411 = vpop.f32.mrf.mxu0
        %v5412 = vadd.f32 %v5279, %v5411
        %v5413 = vpop.f32.mrf.mxu0
        %v5414 = vpop.f32.mrf.mxu0
        %v5415 = vadd.f32 %v5279, %v5414
        %v5416 = vpop.f32.mrf.mxu0
        %5417 = vmatprep.mubr.bf16.mxu0 0
        %5418 = vmatmul.mubr.bf16.gmra.mxu0 %v5257
        %v5419 = vpop.f32.mrf.mxu0
        %v5420 = vadd.f32 %v5279, %v5419
        %v5421 = vpop.f32.mrf.mxu0
        %v5422 = vpop.f32.mrf.mxu0
        %v5423 = vadd.f32 %v5279, %v5422
        %v5424 = vpop.f32.mrf.mxu0
        %5425 = vdwg.mxu0
        %v5426 = vmax.f32 %v5364, 0.0
        %v5427 = vmax.f32 %v5367, 0.0
        %v5428 = vmax.f32 %v5372, 0.0
        %v5429 = vmax.f32 %v5375, 0.0
        %v5430 = vmax.f32 %v5380, 0.0
        %v5431 = vmax.f32 %v5383, 0.0
        %v5432 = vmax.f32 %v5388, 0.0
        %v5433 = vmax.f32 %v5391, 0.0
        %v5434 = vmax.f32 %v5396, 0.0
        %v5435 = vmax.f32 %v5399, 0.0
        %v5436 = vmax.f32 %v5404, 0.0
        %v5437 = vmax.f32 %v5407, 0.0
        %v5438 = vmax.f32 %v5412, 0.0
        %v5439 = vmax.f32 %v5415, 0.0
        %v5440 = vmax.f32 %v5420, 0.0
        %v5441 = vmax.f32 %v5423, 0.0
        %v5442 = vsel %vm856, %v5426, -inf
        %v5443 = vsel %vm857, %v5427, -inf
        %v5444 = vsel %vm856, %v5428, -inf
        %v5445 = vsel %vm857, %v5429, -inf
        %v5446 = vsel %vm856, %v5430, -inf
        %v5447 = vsel %vm857, %v5431, -inf
        %v5448 = vsel %vm856, %v5432, -inf
        %v5449 = vsel %vm857, %v5433, -inf
        %v5450 = vsel %vm856, %v5434, -inf
        %v5451 = vsel %vm857, %v5435, -inf
        %v5452 = vsel %vm856, %v5436, -inf
        %v5453 = vsel %vm857, %v5437, -inf
        %v5454 = vsel %vm856, %v5438, -inf
        %v5455 = vsel %vm857, %v5439, -inf
        %v5456 = vsel %vm856, %v5440, -inf
        %v5457 = vsel %vm857, %v5441, -inf
        %v5458 = vmax.f32 %v5442, %v5443
        %v5459 = vrot.slane %v5458, 4
        %v5460 = vmax.f32 %v5458, %v5459
        %v5461 = vrot.slane %v5460, 2
        %v5462 = vmax.f32 %v5460, %v5461
        %v5463 = vrot.slane %v5462, 1
        %v5464 = vmax.f32 %v5462, %v5463
        %v5465 = vmax.f32 %v5444, %v5445
        %v5466 = vrot.slane %v5465, 4
        %v5467 = vmax.f32 %v5465, %v5466
        %v5468 = vrot.slane %v5467, 2
        %v5469 = vmax.f32 %v5467, %v5468
        %v5470 = vrot.slane %v5469, 1
        %v5471 = vmax.f32 %v5469, %v5470
        %v5472 = vmax.f32 %v5446, %v5447
        %v5473 = vrot.slane %v5472, 4
        %v5474 = vmax.f32 %v5472, %v5473
        %v5475 = vrot.slane %v5474, 2
        %v5476 = vmax.f32 %v5474, %v5475
        %v5477 = vrot.slane %v5476, 1
        %v5478 = vmax.f32 %v5476, %v5477
        %v5479 = vmax.f32 %v5448, %v5449
        %v5480 = vrot.slane %v5479, 4
        %v5481 = vmax.f32 %v5479, %v5480
        %v5482 = vrot.slane %v5481, 2
        %v5483 = vmax.f32 %v5481, %v5482
        %v5484 = vrot.slane %v5483, 1
        %v5485 = vmax.f32 %v5483, %v5484
        %v5486 = vmax.f32 %v5450, %v5451
        %v5487 = vrot.slane %v5486, 4
        %v5488 = vmax.f32 %v5486, %v5487
        %v5489 = vrot.slane %v5488, 2
        %v5490 = vmax.f32 %v5488, %v5489
        %v5491 = vrot.slane %v5490, 1
        %v5492 = vmax.f32 %v5490, %v5491
        %v5493 = vmax.f32 %v5452, %v5453
        %v5494 = vrot.slane %v5493, 4
        %v5495 = vmax.f32 %v5493, %v5494
        %v5496 = vrot.slane %v5495, 2
        %v5497 = vmax.f32 %v5495, %v5496
        %v5498 = vrot.slane %v5497, 1
        %v5499 = vmax.f32 %v5497, %v5498
        %v5500 = vmax.f32 %v5454, %v5455
        %v5501 = vrot.slane %v5500, 4
        %v5502 = vmax.f32 %v5500, %v5501
        %v5503 = vrot.slane %v5502, 2
        %v5504 = vmax.f32 %v5502, %v5503
        %v5505 = vrot.slane %v5504, 1
        %v5506 = vmax.f32 %v5504, %v5505
        %v5507 = vmax.f32 %v5456, %v5457
        %v5508 = vrot.slane %v5507, 4
        %v5509 = vmax.f32 %v5507, %v5508
        %v5510 = vrot.slane %v5509, 2
        %v5511 = vmax.f32 %v5509, %v5510
        %v5512 = vrot.slane %v5511, 1
        %v5513 = vmax.f32 %v5511, %v5512
        %v5522 = vsel %vm1378, %v5471, %v5464
        %v5523 = vsel %vm1380, %v5478, %v5522
        %v5524 = vsel %vm1382, %v5485, %v5523
        %v5525 = vsel %vm1384, %v5492, %v5524
        %v5526 = vsel %vm1386, %v5499, %v5525
        %v5527 = vsel %vm1388, %v5506, %v5526
        %v5528 = vsel %vm1390, %v5513, %v5527
        %5530 = vst [vmem:[%s441] sm:$0xff] %v5528
        %s5531 = sand.u32 %s276, 1
        %s5532 = scalar_lea.sflag [#allocation4], %s5531
        %s5533 = sand.u32 %s276, 1
        %s5534 = smul.addr %s5533, 8
        %s5535 = scalar_lea.vmem [#allocation7], %s5534
        %s5536 = sand.u32 %s302, 1
        %s5537 = scalar_lea.sflag [#allocation9], %s5536
        %s5538 = sand.u32 %s302, 1
        %s5539 = smul.addr %s5538, 512
        %s5540 = scalar_lea.vmem [#allocation8], %s5539
        // Predicated region
        $region73: #{tpu_custom_call.1} parent=63 // pred_check
          %p5541 = pneg %p286
        $region74: #{tpu_custom_call.1} parent=63 // pred_check_branch
          %5543 = sbr.rel (%p5541) target = $region76
        $region75: #{tpu_custom_call.1} parent=63 // pred_region
          %s5545 = ssub.s32 128, 128
          %5546 = vsyncadd %s5532, %s5545
          %s5547 = smul.addr %s32, 128
          %s5548 = scalar_lea.hbm %s11, %s5547
          %s5550 = sshll.u32 %s5535, 4
          %s5551 = int_to_ptr.vmem [resolvable:$true] %s5550
          %5553 = dma.vmem_to_hbm [thread:$0]  %s5551, 128, %s5548, %s5532
        $region76: #{tpu_custom_call.1} parent=63 // pred_fallthru
          _
        // Predicated region
        $region77: #{tpu_custom_call.1} parent=63 // pred_check
          %p5554 = pneg %p312
        $region78: #{tpu_custom_call.1} parent=63 // pred_check_branch
          %5556 = sbr.rel (%p5554) target = $region80
        $region79: #{tpu_custom_call.1} parent=63 // pred_region
          %s5557 = smul.u32 8, %s32
          %s5559 = ssub.s32 8192, 8192
          %5560 = vsyncadd %s5537, %s5559
          %s5561 = smul.addr %s5557, 8
          %s5562 = smul.addr %s5561, 128
          %s5563 = scalar_lea.hbm %s12, %s5562
          %s5564 = sshll.u32 %s5540, 4
          %s5565 = int_to_ptr.vmem [resolvable:$true] %s5564
          %5570 = dma.vmem_to_hbm [thread:$0]  %s5565, 8192, %s5563, %s5537, 128, 128, 8
        $region80: #{tpu_custom_call.1} parent=63 // pred_fallthru
          _
      $region64: #{tpu_custom_call.1} parent=5 // pred_fallthru
        _
      %p5571 = scmp.le.s32.totalorder 2, %s27
      // Predicated region
      $region81: #{tpu_custom_call.1} parent=5 // pred_check
        %p5572 = pneg %p5571
      $region82: #{tpu_custom_call.1} parent=5 // pred_check_branch
        %5574 = sbr.rel (%p5572) target = $region84
      $region83: #{tpu_custom_call.1} parent=5 // pred_region
        %s5575 = ssub.s32 %s27, 2
        // Predicated region
        $region85: #{tpu_custom_call.1} parent=83 // pred_check
          %p5576 = pneg %p292
        $region86: #{tpu_custom_call.1} parent=83 // pred_check_branch
          %5578 = sbr.rel (%p5576) target = $region88
        $region87: #{tpu_custom_call.1} parent=83 // pred_region
          %s5579 = sand.u32 %s277, 1
          %s5580 = scalar_lea.sflag [#allocation4], %s5579
          %s5581 = sand.u32 %s277, 1
          %s5582 = smul.addr %s5581, 8
          %s5583 = scalar_lea.vmem [#allocation7], %s5582
          %5584 = dma.done %s5580, 128
        $region88: #{tpu_custom_call.1} parent=83 // pred_fallthru
          _
        // Predicated region
        $region89: #{tpu_custom_call.1} parent=83 // pred_check
          %p5585 = pneg %p318
        $region90: #{tpu_custom_call.1} parent=83 // pred_check_branch
          %5587 = sbr.rel (%p5585) target = $region92
        $region91: #{tpu_custom_call.1} parent=83 // pred_region
          %s5588 = sand.u32 %s303, 1
          %s5589 = scalar_lea.sflag [#allocation9], %s5588
          %s5590 = sand.u32 %s303, 1
          %s5591 = smul.addr %s5590, 512
          %s5592 = scalar_lea.vmem [#allocation8], %s5591
          %5593 = dma.done %s5589, 8192
        $region92: #{tpu_custom_call.1} parent=83 // pred_fallthru
          _
      $region84: #{tpu_custom_call.1} parent=5 // pred_fallthru
        _
    $region6: #{tpu_custom_call.1} parent=1 // loop_footer
      %s31 = sadd.s32 1, %s27
    $region7: #{tpu_custom_call.1} parent=1 // loop_footer_branch
      %26 = sbr.rel target = $region3
    $region8: #{tpu_custom_call.1} parent=1 // loop_exit
      _
    %5594 = vsyncpa [#allocation3], 1
    %s5595 = scalar_lea.sflag [#allocation3], 1
    %5596 = vsyncpa %s5595, 1
    %5597 = vsyncpa [#allocation6], 1
    %5598 = vsyncpa [#allocation4], 1
    %s5599 = scalar_lea.sflag [#allocation4], 1
    %5600 = vsyncpa %s5599, 1
    %5601 = vsyncpa [#allocation9], 1
    %s5602 = scalar_lea.sflag [#allocation9], 1
    %5603 = vsyncpa %s5602, 1

</llo_original>
